<compile_context>
chip_gen: v7x
topology: tpu7x:2x2x1
jax: 0.10.0
libtpu: 0.0.40
codegen_flags: <defaults>
</compile_context>

<pallas_src>
import functools

import jax
import jax.numpy as jnp
from jax import lax
from jax.experimental import pallas as pl
from jax.experimental.pallas import tpu as pltpu


def _mlp_kernel(x_ref,
                w1_ref, b1_ref,
                w2_ref, b2_ref,
                w3_ref, b3_ref,
                w4_ref, b4_ref,
                o_ref):
    """Fused 4-layer MLP, batch along lanes: (Linear -> ReLU) x 3 -> Linear.

    x_ref is a (block_b, in_size) tile in its native layout; the first dot
    contracts the feature axis of both operands so every intermediate is
    (features, block_b) -> lane-dense.
    """
    hp = jax.lax.Precision.HIGHEST

    # Layer 1: (64, in) x (block_b, in) contracting on the feature axis
    # -> (64, block_b). No in-kernel (or wrapper) transpose of x needed.
    h = lax.dot_general(w1_ref[...], x_ref[...],
                        dimension_numbers=(((1,), (1,)), ((), ())),
                        precision=hp,
                        preferred_element_type=jnp.float32)          # (64, bb)
    h = jnp.maximum(h + b1_ref[...], 0.0)

    h = jnp.dot(w2_ref[...], h, precision=hp,
                preferred_element_type=jnp.float32)                  # (32, bb)
    h = jnp.maximum(h + b2_ref[...], 0.0)

    h = jnp.dot(w3_ref[...], h, precision=hp,
                preferred_element_type=jnp.float32)                  # (16, bb)
    h = jnp.maximum(h + b3_ref[...], 0.0)

    # Final 16 -> 1 layer on the VPU/XLU: broadcast-multiply + sublane reduce.
    # w4 arrives as a (16, 1) column; result is lane-dense (1, bb).
    out = jnp.sum(w4_ref[...] * h, axis=0, keepdims=True) + b4_ref[...]
    o_ref[...] = out.astype(o_ref.dtype)


@functools.partial(jax.jit, static_argnames=("block_b",))
def bird_count_mlp(x, params, *, block_b=512):
    """Runs the fused MLP kernel, tiling the batch along the lane axis.

    x: (B, input_size). params: list of (W, b) with W in PyTorch layout
    (out_features, in_features) and b of shape (out_features, 1).
    Returns (B, 1), matching the PyTorch module.
    """
    (w1, b1), (w2, b2), (w3, b3), (w4, b4) = params
    B, in_size = x.shape
    block_b = min(block_b, B)          # full-array block is always legal

    w4c = w4.T                         # (16, 1) column for the VPU reduction

    grid = (pl.cdiv(B, block_b),)

    # Weights / biases are tiny: replicate the full tensors to every grid step
    # (constant index_map => fetched once and kept resident in VMEM).
    def rep(arr):
        return pl.BlockSpec(arr.shape, lambda i, _nd=arr.ndim: (0,) * _nd)

    flops = 2 * B * (in_size * 64 + 64 * 32 + 32 * 16 + 16)
    param_bytes = sum(int(w.size + b.size) * 4 for (w, b) in params)
    bytes_accessed = (int(x.size) * x.dtype.itemsize          # streamed input
                      + B * x.dtype.itemsize                  # output
                      + param_bytes)                          # resident params

    out_t = pl.pallas_call(
        _mlp_kernel,
        out_shape=jax.ShapeDtypeStruct((1, B), x.dtype),
        grid=grid,
        in_specs=[
            # Native-layout x tile: one contiguous (block_b, in_size) DMA/step.
            pl.BlockSpec((block_b, in_size), lambda i: (i, 0)),
            rep(w1), rep(b1),
            rep(w2), rep(b2),
            rep(w3), rep(b3),
            rep(w4c), rep(b4),
        ],
        out_specs=pl.BlockSpec((1, block_b), lambda i: (0, i)),  # lane-dense out
        compiler_params=pltpu.CompilerParams(
            dimension_semantics=("parallel",)),
        cost_estimate=pl.CostEstimate(
            flops=flops, transcendentals=0, bytes_accessed=bytes_accessed),
    )(x, w1, b1, w2, b2, w3, b3, w4c, b4)

    return out_t.reshape(B, 1)


def init_params(key, input_size):
    """Deterministic init matching nn.Linear: W (out, in), b (out, 1)."""
    sizes = [(input_size, 64), (64, 32), (32, 16), (16, 1)]
    params = []
    for fan_in, fan_out in sizes:
        key, kw, kb = jax.random.split(key, 3)
        bound = 1.0 / jnp.sqrt(jnp.float32(fan_in))
        w = jax.random.uniform(kw, (fan_out, fan_in), jnp.float32, -bound, bound)
        b = jax.random.uniform(kb, (fan_out, 1), jnp.float32, -bound, bound)
        params.append((w, b))
    return params


def reference_mlp(x, params):
    h = x
    for i, (w, b) in enumerate(params):
        h = h @ w.T + b.T
        if i < len(params) - 1:
            h = jnp.maximum(h, 0.0)
    return h


if __name__ == "__main__":
    key = jax.random.PRNGKey(0)
    k_x, k_p = jax.random.split(key)

    batch = 1024       # 2 grid steps of 512 -> both v7x TensorCores busy;
                       # on v5e/v6e the 2 steps cost one extra ~0.35 us only.
    input_size = 16    # tabular features for bird counting

    x = jax.random.normal(k_x, (batch, input_size), jnp.float32)
    params = init_params(k_p, input_size)

    out = bird_count_mlp(x, params, block_b=512)
    out = jax.block_until_ready(out)

    ref = reference_mlp(x, params)
    assert out.shape == (batch, 1), out.shape
    assert jnp.allclose(out, ref, atol=1e-4, rtol=1e-4), (out, ref)

    print("KERNEL_OK")
</pallas_src>

<mosaic_0001>
module attributes {stable_mosaic.version = 11 : i64} {
  func.func @_mlp_kernel(%arg0: i32, %arg1: memref<512x16xf32, #tpu.memory_space<vmem>>, %arg2: memref<64x16xf32, #tpu.memory_space<vmem>>, %arg3: memref<64x1xf32, #tpu.memory_space<vmem>>, %arg4: memref<32x64xf32, #tpu.memory_space<vmem>>, %arg5: memref<32x1xf32, #tpu.memory_space<vmem>>, %arg6: memref<16x32xf32, #tpu.memory_space<vmem>>, %arg7: memref<16x1xf32, #tpu.memory_space<vmem>>, %arg8: memref<16x1xf32, #tpu.memory_space<vmem>>, %arg9: memref<1x1xf32, #tpu.memory_space<vmem>>, %arg10: memref<1x512xf32, #tpu.memory_space<vmem>>) attributes {dimension_semantics = [#tpu.dimension_semantics<parallel>], iteration_bounds = array<i64: 2>, scalar_prefetch = 0 : i64, scratch_operands = 0 : i64, tpu.core_type = #tpu.core_type<tc>, window_params = [{transform_indices = @transform_0, window_bounds = array<i64: 512, 16>}, {pipeline_mode = #tpu.pipeline_mode<synchronous>, transform_indices = @transform_1, window_bounds = array<i64: 64, 16>}, {pipeline_mode = #tpu.pipeline_mode<synchronous>, transform_indices = @transform_2, window_bounds = array<i64: 64, 1>}, {pipeline_mode = #tpu.pipeline_mode<synchronous>, transform_indices = @transform_3, window_bounds = array<i64: 32, 64>}, {pipeline_mode = #tpu.pipeline_mode<synchronous>, transform_indices = @transform_4, window_bounds = array<i64: 32, 1>}, {pipeline_mode = #tpu.pipeline_mode<synchronous>, transform_indices = @transform_5, window_bounds = array<i64: 16, 32>}, {pipeline_mode = #tpu.pipeline_mode<synchronous>, transform_indices = @transform_6, window_bounds = array<i64: 16, 1>}, {pipeline_mode = #tpu.pipeline_mode<synchronous>, transform_indices = @transform_7, window_bounds = array<i64: 16, 1>}, {pipeline_mode = #tpu.pipeline_mode<synchronous>, transform_indices = @transform_8, window_bounds = array<i64: 1, 1>}, {transform_indices = @transform_9, window_bounds = array<i64: 1, 512>}]} {
    %c0 = arith.constant 0 : index
    %c0_0 = arith.constant 0 : index
    %0 = vector.load %arg2[%c0, %c0_0] : memref<64x16xf32, #tpu.memory_space<vmem>>, vector<64x16xf32>
    %c0_1 = arith.constant 0 : index
    %c0_2 = arith.constant 0 : index
    %1 = vector.load %arg1[%c0_1, %c0_2] : memref<512x16xf32, #tpu.memory_space<vmem>>, vector<512x16xf32>
    %cst = arith.constant dense<0.000000e+00> : vector<64x512xf32>
    %2 = tpu.matmul %0, %1, %cst {dimension_numbers = #tpu.dot_dimension_numbers<[1], [1], [0], [0], [0, 0, 1, 0], [], []>, precision = #tpu.contract_precision<fp32>} : vector<64x16xf32>, vector<512x16xf32>, vector<64x512xf32> -> vector<64x512xf32>
    %c0_3 = arith.constant 0 : index
    %c0_4 = arith.constant 0 : index
    %3 = vector.load %arg3[%c0_3, %c0_4] : memref<64x1xf32, #tpu.memory_space<vmem>>, vector<64x1xf32>
    %4 = vector.broadcast %3 : vector<64x1xf32> to vector<64x512xf32>
    %5 = arith.addf %2, %4 : vector<64x512xf32>
    %cst_5 = arith.constant 0.000000e+00 : f32
    %6 = vector.broadcast %cst_5 : f32 to vector<64x512xf32>
    %7 = arith.maximumf %5, %6 : vector<64x512xf32>
    %c0_6 = arith.constant 0 : index
    %c0_7 = arith.constant 0 : index
    %8 = vector.load %arg4[%c0_6, %c0_7] : memref<32x64xf32, #tpu.memory_space<vmem>>, vector<32x64xf32>
    %cst_8 = arith.constant dense<0.000000e+00> : vector<32x512xf32>
    %9 = tpu.matmul %8, %7, %cst_8 {dimension_numbers = #tpu.dot_dimension_numbers<[1], [0], [0], [1], [0, 0, 1, 1], [], []>, precision = #tpu.contract_precision<fp32>} : vector<32x64xf32>, vector<64x512xf32>, vector<32x512xf32> -> vector<32x512xf32>
    %c0_9 = arith.constant 0 : index
    %c0_10 = arith.constant 0 : index
    %10 = vector.load %arg5[%c0_9, %c0_10] : memref<32x1xf32, #tpu.memory_space<vmem>>, vector<32x1xf32>
    %11 = vector.broadcast %10 : vector<32x1xf32> to vector<32x512xf32>
    %12 = arith.addf %9, %11 : vector<32x512xf32>
    %cst_11 = arith.constant 0.000000e+00 : f32
    %13 = vector.broadcast %cst_11 : f32 to vector<32x512xf32>
    %14 = arith.maximumf %12, %13 : vector<32x512xf32>
    %c0_12 = arith.constant 0 : index
    %c0_13 = arith.constant 0 : index
    %15 = vector.load %arg6[%c0_12, %c0_13] : memref<16x32xf32, #tpu.memory_space<vmem>>, vector<16x32xf32>
    %cst_14 = arith.constant dense<0.000000e+00> : vector<16x512xf32>
    %16 = tpu.matmul %15, %14, %cst_14 {dimension_numbers = #tpu.dot_dimension_numbers<[1], [0], [0], [1], [0, 0, 1, 1], [], []>, precision = #tpu.contract_precision<fp32>} : vector<16x32xf32>, vector<32x512xf32>, vector<16x512xf32> -> vector<16x512xf32>
    %c0_15 = arith.constant 0 : index
    %c0_16 = arith.constant 0 : index
    %17 = vector.load %arg7[%c0_15, %c0_16] : memref<16x1xf32, #tpu.memory_space<vmem>>, vector<16x1xf32>
    %18 = vector.broadcast %17 : vector<16x1xf32> to vector<16x512xf32>
    %19 = arith.addf %16, %18 : vector<16x512xf32>
    %cst_17 = arith.constant 0.000000e+00 : f32
    %20 = vector.broadcast %cst_17 : f32 to vector<16x512xf32>
    %21 = arith.maximumf %19, %20 : vector<16x512xf32>
    %c0_18 = arith.constant 0 : index
    %c0_19 = arith.constant 0 : index
    %22 = vector.load %arg8[%c0_18, %c0_19] : memref<16x1xf32, #tpu.memory_space<vmem>>, vector<16x1xf32>
    %23 = vector.broadcast %22 : vector<16x1xf32> to vector<16x512xf32>
    %24 = arith.mulf %23, %21 : vector<16x512xf32>
    %cst_20 = arith.constant dense<0.000000e+00> : vector<512xf32>
    %25 = vector.multi_reduction <add>, %24, %cst_20 [0] : vector<16x512xf32> to vector<512xf32>
    %26 = vector.shape_cast %25 : vector<512xf32> to vector<1x512xf32>
    %c0_21 = arith.constant 0 : index
    %c0_22 = arith.constant 0 : index
    %27 = vector.load %arg9[%c0_21, %c0_22] : memref<1x1xf32, #tpu.memory_space<vmem>>, vector<1x1xf32>
    %28 = vector.broadcast %27 : vector<1x1xf32> to vector<1x512xf32>
    %29 = arith.addf %26, %28 : vector<1x512xf32>
    %c0_23 = arith.constant 0 : index
    %c0_24 = arith.constant 0 : index
    %30 = vector.load %arg10[%c0_23, %c0_24] : memref<1x512xf32, #tpu.memory_space<vmem>>, vector<1x512xf32>
    tpu.vector_store %arg10[%c0_23, %c0_24], %29 {strides = array<i32>} : memref<1x512xf32, #tpu.memory_space<vmem>>, vector<1x512xf32>,
    return
  }
  func.func @transform_0(%arg0: i32) -> (i32, i32) {
    %c0_i32 = arith.constant 0 : i32
    %c0_i32_0 = arith.constant 0 : i32
    return %arg0, %c0_i32 : i32, i32
  }
  func.func @transform_1(%arg0: i32) -> (i32, i32) {
    %c0_i32 = arith.constant 0 : i32
    %c0_i32_0 = arith.constant 0 : i32
    %c0_i32_1 = arith.constant 0 : i32
    return %c0_i32, %c0_i32_0 : i32, i32
  }
  func.func @transform_2(%arg0: i32) -> (i32, i32) {
    %c0_i32 = arith.constant 0 : i32
    %c0_i32_0 = arith.constant 0 : i32
    %c0_i32_1 = arith.constant 0 : i32
    return %c0_i32, %c0_i32_0 : i32, i32
  }
  func.func @transform_3(%arg0: i32) -> (i32, i32) {
    %c0_i32 = arith.constant 0 : i32
    %c0_i32_0 = arith.constant 0 : i32
    %c0_i32_1 = arith.constant 0 : i32
    return %c0_i32, %c0_i32_0 : i32, i32
  }
  func.func @transform_4(%arg0: i32) -> (i32, i32) {
    %c0_i32 = arith.constant 0 : i32
    %c0_i32_0 = arith.constant 0 : i32
    %c0_i32_1 = arith.constant 0 : i32
    return %c0_i32, %c0_i32_0 : i32, i32
  }
  func.func @transform_5(%arg0: i32) -> (i32, i32) {
    %c0_i32 = arith.constant 0 : i32
    %c0_i32_0 = arith.constant 0 : i32
    %c0_i32_1 = arith.constant 0 : i32
    return %c0_i32, %c0_i32_0 : i32, i32
  }
  func.func @transform_6(%arg0: i32) -> (i32, i32) {
    %c0_i32 = arith.constant 0 : i32
    %c0_i32_0 = arith.constant 0 : i32
    %c0_i32_1 = arith.constant 0 : i32
    return %c0_i32, %c0_i32_0 : i32, i32
  }
  func.func @transform_7(%arg0: i32) -> (i32, i32) {
    %c0_i32 = arith.constant 0 : i32
    %c0_i32_0 = arith.constant 0 : i32
    %c0_i32_1 = arith.constant 0 : i32
    return %c0_i32, %c0_i32_0 : i32, i32
  }
  func.func @transform_8(%arg0: i32) -> (i32, i32) {
    %c0_i32 = arith.constant 0 : i32
    %c0_i32_0 = arith.constant 0 : i32
    %c0_i32_1 = arith.constant 0 : i32
    return %c0_i32, %c0_i32_0 : i32, i32
  }
  func.func @transform_9(%arg0: i32) -> (i32, i32) {
    %c0_i32 = arith.constant 0 : i32
    %c0_i32_0 = arith.constant 0 : i32
    return %c0_i32, %arg0 : i32, i32
  }
}

</mosaic_0001>

<llo_original>
// kernel: bird_count_mlp.1
$region0: #{bird_count_mlp.1}
  #allocation0 [shape = 'u32[]', space=smem, size = 0x4, offset = 0x4, fixed_abs, tag = 'smem constant byte address 0x4 - core index']
  #allocation1 [shape = 'u32[144,128]{1,0:T(1,128)}', space=vmem, size = 0x12000, scoped, tag = 'internal scratch']
  #allocation2 [shape = 'f32[1,1]{1,0:T(1,128)S(1)}', space=vmem, size = 0x200, scoped, tag = 'scoped memory for bird_count_mlp.1']
  %s0 = inlined_call_operand.vmem [shape: f32[1024,16], index: 0, kind: input, shape index: {}]
  %s1 = inlined_call_operand.vmem [shape: f32[64,16], index: 1, kind: input, shape index: {}]
  %s2 = inlined_call_operand.vmem [shape: f32[64,1], index: 2, kind: input, shape index: {}]
  %s3 = inlined_call_operand.vmem [shape: f32[32,64], index: 3, kind: input, shape index: {}]
  %s4 = inlined_call_operand.vmem [shape: f32[32,1], index: 4, kind: input, shape index: {}]
  %s5 = inlined_call_operand.vmem [shape: f32[16,32], index: 5, kind: input, shape index: {}]
  %s6 = inlined_call_operand.vmem [shape: f32[16,1], index: 6, kind: input, shape index: {}]
  %s7 = inlined_call_operand.vmem [shape: f32[16,1], index: 7, kind: input, shape index: {}]
  %s8 = inlined_call_operand.<no memory space> [shape: f32[1,1], index: 8, kind: input, shape index: {}]
  %s9 = inlined_call_operand.hbm [shape: f32[1,1024], index: 9, kind: output, shape index: {}]
  %s10 = sld [smem:[#allocation0]]
  $region69: #{bird_count_mlp.1} parent=0
    _
  %s12 = ssub.s32 1, %s10
  %s13 = scalar_select 0, %s12, %s10
  %v14 = vstv %s8
  %15 = vst [vmem:[#allocation2] sm:$0x1] %v14
  $region1: #{bird_count_mlp.1} parent=0
    #allocation3 [shape = 'u8[4096]{0}', space=vmem, size = 0x1000, scoped, tag = 'output window, operand 0']
    #allocation4 [shape = 's32[2]{0}', space=sflag, size = 0x8, scoped, tag = 'scoped memory for bird_count_mlp.1']
    %16 = vsyncpa [#allocation4], 0
    %s17 = scalar_lea.sflag [#allocation4], 1
    %18 = vsyncpa %s17, 0
    loop: start=0, step=1, limit=4
    $region2: #{bird_count_mlp.1} parent=1 // loop_pre_header
      _
    $region3: #{bird_count_mlp.1} parent=1 // loop_header
      %s20 = sphi 0, %s24
      %p21 = scmp.ge.s32.totalorder %s20, 4
      %s30 = sphi 0, %s32
      %s33 = sphi 0, %s30
      %s34 = sphi 0, %s33
      %s50 = sphi 0, %s34
      %s54 = sphi 0, %s54
      %s56 = sphi 0, %s54
      %s57 = sphi 0, %s56
      %s71 = sphi 0, %s57
      %s75 = sphi 0, %s75
      %s77 = sphi 0, %s75
      %s78 = sphi 0, %s77
      %s92 = sphi 0, %s78
      %s96 = sphi 0, %s96
      %s98 = sphi 0, %s96
      %s99 = sphi 0, %s98
      %s113 = sphi 0, %s99
      %s117 = sphi 0, %s117
      %s119 = sphi 0, %s117
      %s120 = sphi 0, %s119
      %s134 = sphi 0, %s120
      %s138 = sphi 0, %s138
      %s140 = sphi 0, %s138
      %s141 = sphi 0, %s140
      %s155 = sphi 0, %s141
      %s159 = sphi 0, %s159
      %s161 = sphi 0, %s159
      %s162 = sphi 0, %s161
      %s176 = sphi 0, %s162
      %s180 = sphi 0, %s180
      %s182 = sphi 0, %s180
      %s183 = sphi 0, %s182
      %s197 = sphi 0, %s183
      %s201 = sphi 0, %s201
      %s203 = sphi 0, %s201
      %s204 = sphi 0, %s203
      %s218 = sphi 0, %s204
      %s224 = sphi 0, %s226
      %s227 = sphi 0, %s224
      %s228 = sphi 0, %s227
      %s244 = sphi 0, %s228
    $region4: #{bird_count_mlp.1} parent=1 // loop_header_branch
      %23 = sbr.rel (%p21) target = $region8
    $region5: #{bird_count_mlp.1} parent=1 // loop_body
      %s25 = ssub.s32 %s20, 1
      %s26 = ssub.s32 %s20, 2
      %s27 = sadd.s32 %s20, 1
      %s28 = ssub.s32 %s20, %s27
      %p29 = scmp.eq.s32.totalorder %s28, 0
      %s31 = sadd.s32 %s30, 1
      %s32 = scalar_select %p29, %s30, %s31
      %p35 = pneg %p29
      %p36 = scmp.eq.s32.totalorder %s20, 1
      %p37 = por %p35, %p36
      %p38 = scmp.ne.s32.totalorder %s30, %s33
      %p39 = scmp.eq.s32.totalorder %s20, 0
      %p40 = por %p38, %p39
      %p41 = scmp.ne.s32.totalorder %s30, %s33
      %p42 = scmp.eq.s32.totalorder %s25, 1
      %p43 = por %p41, %p42
      %p44 = scmp.ne.s32.totalorder %s33, %s34
      %p45 = scmp.eq.s32.totalorder %s25, 0
      %p46 = por %p44, %p45
      %p47 = scmp.ne.s32.totalorder %s33, %s34
      %p48 = scmp.eq.s32.totalorder %s26, 1
      %p49 = por %p47, %p48
      %p51 = scmp.ne.s32.totalorder %s34, %s50
      %p52 = scmp.eq.s32.totalorder %s26, 0
      %p53 = por %p51, %p52
      %s55 = sadd.s32 %s54, 1
      %p58 = scmp.eq.s32.totalorder %s20, 1
      %p59 = scmp.ne.s32.totalorder %s54, %s56
      %p60 = scmp.eq.s32.totalorder %s20, 0
      %p61 = por %p59, %p60
      %p62 = scmp.ne.s32.totalorder %s54, %s56
      %p63 = scmp.eq.s32.totalorder %s25, 1
      %p64 = por %p62, %p63
      %p65 = scmp.ne.s32.totalorder %s56, %s57
      %p66 = scmp.eq.s32.totalorder %s25, 0
      %p67 = por %p65, %p66
      %p68 = scmp.ne.s32.totalorder %s56, %s57
      %p69 = scmp.eq.s32.totalorder %s26, 1
      %p70 = por %p68, %p69
      %p72 = scmp.ne.s32.totalorder %s57, %s71
      %p73 = scmp.eq.s32.totalorder %s26, 0
      %p74 = por %p72, %p73
      %s76 = sadd.s32 %s75, 1
      %p79 = scmp.eq.s32.totalorder %s20, 1
      %p80 = scmp.ne.s32.totalorder %s75, %s77
      %p81 = scmp.eq.s32.totalorder %s20, 0
      %p82 = por %p80, %p81
      %p83 = scmp.ne.s32.totalorder %s75, %s77
      %p84 = scmp.eq.s32.totalorder %s25, 1
      %p85 = por %p83, %p84
      %p86 = scmp.ne.s32.totalorder %s77, %s78
      %p87 = scmp.eq.s32.totalorder %s25, 0
      %p88 = por %p86, %p87
      %p89 = scmp.ne.s32.totalorder %s77, %s78
      %p90 = scmp.eq.s32.totalorder %s26, 1
      %p91 = por %p89, %p90
      %p93 = scmp.ne.s32.totalorder %s78, %s92
      %p94 = scmp.eq.s32.totalorder %s26, 0
      %p95 = por %p93, %p94
      %s97 = sadd.s32 %s96, 1
      %p100 = scmp.eq.s32.totalorder %s20, 1
      %p101 = scmp.ne.s32.totalorder %s96, %s98
      %p102 = scmp.eq.s32.totalorder %s20, 0
      %p103 = por %p101, %p102
      %p104 = scmp.ne.s32.totalorder %s96, %s98
      %p105 = scmp.eq.s32.totalorder %s25, 1
      %p106 = por %p104, %p105
      %p107 = scmp.ne.s32.totalorder %s98, %s99
      %p108 = scmp.eq.s32.totalorder %s25, 0
      %p109 = por %p107, %p108
      %p110 = scmp.ne.s32.totalorder %s98, %s99
      %p111 = scmp.eq.s32.totalorder %s26, 1
      %p112 = por %p110, %p111
      %p114 = scmp.ne.s32.totalorder %s99, %s113
      %p115 = scmp.eq.s32.totalorder %s26, 0
      %p116 = por %p114, %p115
      %s118 = sadd.s32 %s117, 1
      %p121 = scmp.eq.s32.totalorder %s20, 1
      %p122 = scmp.ne.s32.totalorder %s117, %s119
      %p123 = scmp.eq.s32.totalorder %s20, 0
      %p124 = por %p122, %p123
      %p125 = scmp.ne.s32.totalorder %s117, %s119
      %p126 = scmp.eq.s32.totalorder %s25, 1
      %p127 = por %p125, %p126
      %p128 = scmp.ne.s32.totalorder %s119, %s120
      %p129 = scmp.eq.s32.totalorder %s25, 0
      %p130 = por %p128, %p129
      %p131 = scmp.ne.s32.totalorder %s119, %s120
      %p132 = scmp.eq.s32.totalorder %s26, 1
      %p133 = por %p131, %p132
      %p135 = scmp.ne.s32.totalorder %s120, %s134
      %p136 = scmp.eq.s32.totalorder %s26, 0
      %p137 = por %p135, %p136
      %s139 = sadd.s32 %s138, 1
      %p142 = scmp.eq.s32.totalorder %s20, 1
      %p143 = scmp.ne.s32.totalorder %s138, %s140
      %p144 = scmp.eq.s32.totalorder %s20, 0
      %p145 = por %p143, %p144
      %p146 = scmp.ne.s32.totalorder %s138, %s140
      %p147 = scmp.eq.s32.totalorder %s25, 1
      %p148 = por %p146, %p147
      %p149 = scmp.ne.s32.totalorder %s140, %s141
      %p150 = scmp.eq.s32.totalorder %s25, 0
      %p151 = por %p149, %p150
      %p152 = scmp.ne.s32.totalorder %s140, %s141
      %p153 = scmp.eq.s32.totalorder %s26, 1
      %p154 = por %p152, %p153
      %p156 = scmp.ne.s32.totalorder %s141, %s155
      %p157 = scmp.eq.s32.totalorder %s26, 0
      %p158 = por %p156, %p157
      %s160 = sadd.s32 %s159, 1
      %p163 = scmp.eq.s32.totalorder %s20, 1
      %p164 = scmp.ne.s32.totalorder %s159, %s161
      %p165 = scmp.eq.s32.totalorder %s20, 0
      %p166 = por %p164, %p165
      %p167 = scmp.ne.s32.totalorder %s159, %s161
      %p168 = scmp.eq.s32.totalorder %s25, 1
      %p169 = por %p167, %p168
      %p170 = scmp.ne.s32.totalorder %s161, %s162
      %p171 = scmp.eq.s32.totalorder %s25, 0
      %p172 = por %p170, %p171
      %p173 = scmp.ne.s32.totalorder %s161, %s162
      %p174 = scmp.eq.s32.totalorder %s26, 1
      %p175 = por %p173, %p174
      %p177 = scmp.ne.s32.totalorder %s162, %s176
      %p178 = scmp.eq.s32.totalorder %s26, 0
      %p179 = por %p177, %p178
      %s181 = sadd.s32 %s180, 1
      %p184 = scmp.eq.s32.totalorder %s20, 1
      %p185 = scmp.ne.s32.totalorder %s180, %s182
      %p186 = scmp.eq.s32.totalorder %s20, 0
      %p187 = por %p185, %p186
      %p188 = scmp.ne.s32.totalorder %s180, %s182
      %p189 = scmp.eq.s32.totalorder %s25, 1
      %p190 = por %p188, %p189
      %p191 = scmp.ne.s32.totalorder %s182, %s183
      %p192 = scmp.eq.s32.totalorder %s25, 0
      %p193 = por %p191, %p192
      %p194 = scmp.ne.s32.totalorder %s182, %s183
      %p195 = scmp.eq.s32.totalorder %s26, 1
      %p196 = por %p194, %p195
      %p198 = scmp.ne.s32.totalorder %s183, %s197
      %p199 = scmp.eq.s32.totalorder %s26, 0
      %p200 = por %p198, %p199
      %s202 = sadd.s32 %s201, 1
      %p205 = scmp.eq.s32.totalorder %s20, 1
      %p206 = scmp.ne.s32.totalorder %s201, %s203
      %p207 = scmp.eq.s32.totalorder %s20, 0
      %p208 = por %p206, %p207
      %p209 = scmp.ne.s32.totalorder %s201, %s203
      %p210 = scmp.eq.s32.totalorder %s25, 1
      %p211 = por %p209, %p210
      %p212 = scmp.ne.s32.totalorder %s203, %s204
      %p213 = scmp.eq.s32.totalorder %s25, 0
      %p214 = por %p212, %p213
      %p215 = scmp.ne.s32.totalorder %s203, %s204
      %p216 = scmp.eq.s32.totalorder %s26, 1
      %p217 = por %p215, %p216
      %p219 = scmp.ne.s32.totalorder %s204, %s218
      %p220 = scmp.eq.s32.totalorder %s26, 0
      %p221 = por %p219, %p220
      %s222 = ssub.s32 %s20, %s27
      %p223 = scmp.eq.s32.totalorder %s222, 0
      %s225 = sadd.s32 %s224, 1
      %s226 = scalar_select %p223, %s224, %s225
      %p229 = pneg %p223
      %p230 = scmp.eq.s32.totalorder %s20, 1
      %p231 = por %p229, %p230
      %p232 = scmp.ne.s32.totalorder %s224, %s227
      %p233 = scmp.eq.s32.totalorder %s20, 0
      %p234 = por %p232, %p233
      %p235 = scmp.ne.s32.totalorder %s224, %s227
      %p236 = scmp.eq.s32.totalorder %s25, 1
      %p237 = por %p235, %p236
      %p238 = scmp.ne.s32.totalorder %s227, %s228
      %p239 = scmp.eq.s32.totalorder %s25, 0
      %p240 = por %p238, %p239
      %p241 = scmp.ne.s32.totalorder %s227, %s228
      %p242 = scmp.eq.s32.totalorder %s26, 1
      %p243 = por %p241, %p242
      %p245 = scmp.ne.s32.totalorder %s228, %s244
      %p246 = scmp.eq.s32.totalorder %s26, 0
      %p247 = por %p245, %p246
      %p248 = scmp.le.s32.totalorder 1, %s20
      %p249 = scmp.lt.s32.totalorder %s20, 3
      %p250 = pnand %p248, %p249
      %p251 = pneg %p250
      // Predicated region
      $region9: #{bird_count_mlp.1} parent=5 // pred_check
        _
      $region10: #{bird_count_mlp.1} parent=5 // pred_check_branch
        %253 = sbr.rel (%p250) target = $region12
      $region11: #{bird_count_mlp.1} parent=5 // pred_region
        %s254 = ssub.s32 %s20, 1
        // Predicated region
        $region13: #{bird_count_mlp.1} parent=11 // pred_check
          %p255 = pneg %p67
        $region14: #{bird_count_mlp.1} parent=11 // pred_check_branch
          %257 = sbr.rel (%p255) target = $region16
        $region15: #{bird_count_mlp.1} parent=11 // pred_region
          _
        $region16: #{bird_count_mlp.1} parent=11 // pred_fallthru
          _
        // Predicated region
        $region17: #{bird_count_mlp.1} parent=11 // pred_check
          %p258 = pneg %p88
        $region18: #{bird_count_mlp.1} parent=11 // pred_check_branch
          %260 = sbr.rel (%p258) target = $region20
        $region19: #{bird_count_mlp.1} parent=11 // pred_region
          _
        $region20: #{bird_count_mlp.1} parent=11 // pred_fallthru
          _
        // Predicated region
        $region21: #{bird_count_mlp.1} parent=11 // pred_check
          %p261 = pneg %p109
        $region22: #{bird_count_mlp.1} parent=11 // pred_check_branch
          %263 = sbr.rel (%p261) target = $region24
        $region23: #{bird_count_mlp.1} parent=11 // pred_region
          _
        $region24: #{bird_count_mlp.1} parent=11 // pred_fallthru
          _
        // Predicated region
        $region25: #{bird_count_mlp.1} parent=11 // pred_check
          %p264 = pneg %p130
        $region26: #{bird_count_mlp.1} parent=11 // pred_check_branch
          %266 = sbr.rel (%p264) target = $region28
        $region27: #{bird_count_mlp.1} parent=11 // pred_region
          _
        $region28: #{bird_count_mlp.1} parent=11 // pred_fallthru
          _
        // Predicated region
        $region29: #{bird_count_mlp.1} parent=11 // pred_check
          %p267 = pneg %p151
        $region30: #{bird_count_mlp.1} parent=11 // pred_check_branch
          %269 = sbr.rel (%p267) target = $region32
        $region31: #{bird_count_mlp.1} parent=11 // pred_region
          _
        $region32: #{bird_count_mlp.1} parent=11 // pred_fallthru
          _
        // Predicated region
        $region33: #{bird_count_mlp.1} parent=11 // pred_check
          %p270 = pneg %p172
        $region34: #{bird_count_mlp.1} parent=11 // pred_check_branch
          %272 = sbr.rel (%p270) target = $region36
        $region35: #{bird_count_mlp.1} parent=11 // pred_region
          _
        $region36: #{bird_count_mlp.1} parent=11 // pred_fallthru
          _
        // Predicated region
        $region37: #{bird_count_mlp.1} parent=11 // pred_check
          %p273 = pneg %p193
        $region38: #{bird_count_mlp.1} parent=11 // pred_check_branch
          %275 = sbr.rel (%p273) target = $region40
        $region39: #{bird_count_mlp.1} parent=11 // pred_region
          _
        $region40: #{bird_count_mlp.1} parent=11 // pred_fallthru
          _
        // Predicated region
        $region41: #{bird_count_mlp.1} parent=11 // pred_check
          %p276 = pneg %p214
        $region42: #{bird_count_mlp.1} parent=11 // pred_check_branch
          %278 = sbr.rel (%p276) target = $region44
        $region43: #{bird_count_mlp.1} parent=11 // pred_region
          _
        $region44: #{bird_count_mlp.1} parent=11 // pred_fallthru
          _
      $region12: #{bird_count_mlp.1} parent=5 // pred_fallthru
        _
      %p279 = scmp.lt.s32.totalorder %s20, 2
      // Predicated region
      $region45: #{bird_count_mlp.1} parent=5 // pred_check
        %p280 = pneg %p279
      $region46: #{bird_count_mlp.1} parent=5 // pred_check_branch
        %282 = sbr.rel (%p280) target = $region48
      $region47: #{bird_count_mlp.1} parent=5 // pred_region
        // Predicated region
        $region49: #{bird_count_mlp.1} parent=47 // pred_check
          %p283 = pneg %p40
        $region50: #{bird_count_mlp.1} parent=47 // pred_check_branch
          %285 = sbr.rel (%p283) target = $region52
        $region51: #{bird_count_mlp.1} parent=47 // pred_region
          %s286 = smul.u32 64, %s20
          %p287 = scmp.lt.s32.totalorder %s286, 127
          %s288 = scalar_select %p287, %s286, 127
          %s289 = smul.addr %s288, 8
          %s290 = scalar_lea.vmem %s0, %s289
          %s291 = smul.u32 64, %s20
        $region52: #{bird_count_mlp.1} parent=47 // pred_fallthru
          _
      $region48: #{bird_count_mlp.1} parent=5 // pred_fallthru
        _
      %p292 = scmp.le.s32.totalorder 1, %s20
      %p293 = scmp.lt.s32.totalorder %s20, 3
      %p294 = pnand %p292, %p293
      %p295 = pneg %p294
      // Predicated region
      $region53: #{bird_count_mlp.1} parent=5 // pred_check
        _
      $region54: #{bird_count_mlp.1} parent=5 // pred_check_branch
        %297 = sbr.rel (%p294) target = $region56
      $region55: #{bird_count_mlp.1} parent=5 // pred_region
        %s298 = ssub.s32 %s20, 1
        %s299 = smul.u32 64, %s25
        %p300 = scmp.lt.s32.totalorder %s299, 127
        %s301 = scalar_select %p300, %s299, 127
        %s302 = smul.addr %s301, 8
        %s303 = scalar_lea.vmem %s0, %s302
        %p304 = pneg %p46
        %p305 = pneg %p43
        %p306 = pneg %p67
        %p307 = pneg %p64
        %p308 = pneg %p88
        %p309 = pneg %p85
        %p310 = pneg %p109
        %p311 = pneg %p106
        %p312 = pneg %p130
        %p313 = pneg %p127
        %p314 = pneg %p151
        %p315 = pneg %p148
        %p316 = pneg %p172
        %p317 = pneg %p169
        %p318 = pneg %p193
        %p319 = pneg %p190
        %p320 = pneg %p214
        %p321 = pneg %p211
        %p322 = pneg %p240
        %p323 = pneg %p237
        %s324 = sand.u32 %s227, 1
        %s325 = scalar_lea.sflag [#allocation4], %s324
        %s326 = sand.u32 %s227, 1
        %s327 = smul.addr %s326, 4
        %s328 = scalar_lea.vmem [#allocation3], %s327
        %s329 = smul.u32 64, %s25
        %p330 = scmp.lt.s32.totalorder %s329, 127
        %s331 = scalar_select %p330, %s329, 127
        %s332 = smul.addr %s331, 8
        %s333 = scalar_lea.vmem %s0, %s332
        %s334 = smul.u32 64, %s25
        %s335 = smul.u32 4, %s25
        %v336 = vld [vmem:[%s1] sm:$0xff]
        %v337 = vld [vmem:[%s1 + $0x8] sm:$0xff]
        %v338 = vld [vmem:[%s1 + $0x10] sm:$0xff]
        %v339 = vld [vmem:[%s1 + $0x18] sm:$0xff]
        %v340 = vld [vmem:[%s1 + $0x20] sm:$0xff]
        %v341 = vld [vmem:[%s1 + $0x28] sm:$0xff]
        %v342 = vld [vmem:[%s1 + $0x30] sm:$0xff]
        %v343 = vld [vmem:[%s1 + $0x38] sm:$0xff]
        %v344 = vld [vmem:[%s333] sm:$0xff]
        %v345 = vld [vmem:[%s333 + $0x8] sm:$0xff]
        %v346 = vld [vmem:[%s333 + $0x10] sm:$0xff]
        %v347 = vld [vmem:[%s333 + $0x18] sm:$0xff]
        %v348 = vld [vmem:[%s333 + $0x20] sm:$0xff]
        %v349 = vld [vmem:[%s333 + $0x28] sm:$0xff]
        %v350 = vld [vmem:[%s333 + $0x30] sm:$0xff]
        %v351 = vld [vmem:[%s333 + $0x38] sm:$0xff]
        %v352 = vld [vmem:[%s333 + $0x40] sm:$0xff]
        %v353 = vld [vmem:[%s333 + $0x48] sm:$0xff]
        %v354 = vld [vmem:[%s333 + $0x50] sm:$0xff]
        %v355 = vld [vmem:[%s333 + $0x58] sm:$0xff]
        %v356 = vld [vmem:[%s333 + $0x60] sm:$0xff]
        %v357 = vld [vmem:[%s333 + $0x68] sm:$0xff]
        %v358 = vld [vmem:[%s333 + $0x70] sm:$0xff]
        %v359 = vld [vmem:[%s333 + $0x78] sm:$0xff]
        %v360 = vld [vmem:[%s333 + $0x80] sm:$0xff]
        %v361 = vld [vmem:[%s333 + $0x88] sm:$0xff]
        %v362 = vld [vmem:[%s333 + $0x90] sm:$0xff]
        %v363 = vld [vmem:[%s333 + $0x98] sm:$0xff]
        %v364 = vld [vmem:[%s333 + $0xa0] sm:$0xff]
        %v365 = vld [vmem:[%s333 + $0xa8] sm:$0xff]
        %v366 = vld [vmem:[%s333 + $0xb0] sm:$0xff]
        %v367 = vld [vmem:[%s333 + $0xb8] sm:$0xff]
        %v368 = vld [vmem:[%s333 + $0xc0] sm:$0xff]
        %v369 = vld [vmem:[%s333 + $0xc8] sm:$0xff]
        %v370 = vld [vmem:[%s333 + $0xd0] sm:$0xff]
        %v371 = vld [vmem:[%s333 + $0xd8] sm:$0xff]
        %v372 = vld [vmem:[%s333 + $0xe0] sm:$0xff]
        %v373 = vld [vmem:[%s333 + $0xe8] sm:$0xff]
        %v374 = vld [vmem:[%s333 + $0xf0] sm:$0xff]
        %v375 = vld [vmem:[%s333 + $0xf8] sm:$0xff]
        %v376 = vld [vmem:[%s333 + $0x100] sm:$0xff]
        %v377 = vld [vmem:[%s333 + $0x108] sm:$0xff]
        %v378 = vld [vmem:[%s333 + $0x110] sm:$0xff]
        %v379 = vld [vmem:[%s333 + $0x118] sm:$0xff]
        %v380 = vld [vmem:[%s333 + $0x120] sm:$0xff]
        %v381 = vld [vmem:[%s333 + $0x128] sm:$0xff]
        %v382 = vld [vmem:[%s333 + $0x130] sm:$0xff]
        %v383 = vld [vmem:[%s333 + $0x138] sm:$0xff]
        %v384 = vld [vmem:[%s333 + $0x140] sm:$0xff]
        %v385 = vld [vmem:[%s333 + $0x148] sm:$0xff]
        %v386 = vld [vmem:[%s333 + $0x150] sm:$0xff]
        %v387 = vld [vmem:[%s333 + $0x158] sm:$0xff]
        %v388 = vld [vmem:[%s333 + $0x160] sm:$0xff]
        %v389 = vld [vmem:[%s333 + $0x168] sm:$0xff]
        %v390 = vld [vmem:[%s333 + $0x170] sm:$0xff]
        %v391 = vld [vmem:[%s333 + $0x178] sm:$0xff]
        %v392 = vld [vmem:[%s333 + $0x180] sm:$0xff]
        %v393 = vld [vmem:[%s333 + $0x188] sm:$0xff]
        %v394 = vld [vmem:[%s333 + $0x190] sm:$0xff]
        %v395 = vld [vmem:[%s333 + $0x198] sm:$0xff]
        %v396 = vld [vmem:[%s333 + $0x1a0] sm:$0xff]
        %v397 = vld [vmem:[%s333 + $0x1a8] sm:$0xff]
        %v398 = vld [vmem:[%s333 + $0x1b0] sm:$0xff]
        %v399 = vld [vmem:[%s333 + $0x1b8] sm:$0xff]
        %v400 = vld [vmem:[%s333 + $0x1c0] sm:$0xff]
        %v401 = vld [vmem:[%s333 + $0x1c8] sm:$0xff]
        %v402 = vld [vmem:[%s333 + $0x1d0] sm:$0xff]
        %v403 = vld [vmem:[%s333 + $0x1d8] sm:$0xff]
        %v404 = vld [vmem:[%s333 + $0x1e0] sm:$0xff]
        %v405 = vld [vmem:[%s333 + $0x1e8] sm:$0xff]
        %v406 = vld [vmem:[%s333 + $0x1f0] sm:$0xff]
        %v407 = vld [vmem:[%s333 + $0x1f8] sm:$0xff]
        %v408 = vld [vmem:[%s2] sm:$0xff]
        %v409 = vld [vmem:[%s2 + $0x8] sm:$0xff]
        %v410 = vld [vmem:[%s2 + $0x10] sm:$0xff]
        %v411 = vld [vmem:[%s2 + $0x18] sm:$0xff]
        %v412 = vld [vmem:[%s2 + $0x20] sm:$0xff]
        %v413 = vld [vmem:[%s2 + $0x28] sm:$0xff]
        %v414 = vld [vmem:[%s2 + $0x30] sm:$0xff]
        %v415 = vld [vmem:[%s2 + $0x38] sm:$0xff]
        %417 = vset.pattern.permute.xlu0 0
        %418 = vperm.xlu0 %417, %v408
        %v419 = vpop.permute.xlu0 %418
        %422 = vset.pattern.permute.xlu0 0
        %423 = vperm.xlu0 %422, %v409
        %v424 = vpop.permute.xlu0 %423
        %427 = vset.pattern.permute.xlu0 0
        %428 = vperm.xlu0 %427, %v410
        %v429 = vpop.permute.xlu0 %428
        %432 = vset.pattern.permute.xlu0 0
        %433 = vperm.xlu0 %432, %v411
        %v434 = vpop.permute.xlu0 %433
        %437 = vset.pattern.permute.xlu0 0
        %438 = vperm.xlu0 %437, %v412
        %v439 = vpop.permute.xlu0 %438
        %442 = vset.pattern.permute.xlu0 0
        %443 = vperm.xlu0 %442, %v413
        %v444 = vpop.permute.xlu0 %443
        %447 = vset.pattern.permute.xlu0 0
        %448 = vperm.xlu0 %447, %v414
        %v449 = vpop.permute.xlu0 %448
        %452 = vset.pattern.permute.xlu0 0
        %453 = vperm.xlu0 %452, %v415
        %v454 = vpop.permute.xlu0 %453
        %vm456 = vcmask 130048
        %v458 = vsel %vm456, %v336, 0
        %v461 = vsel %vm456, %v337, 0
        %v464 = vsel %vm456, %v338, 0
        %v467 = vsel %vm456, %v339, 0
        %v470 = vsel %vm456, %v340, 0
        %v473 = vsel %vm456, %v341, 0
        %v476 = vsel %vm456, %v342, 0
        %v479 = vsel %vm456, %v343, 0
        %v482 = vsel %vm456, %v344, 0
        %v485 = vsel %vm456, %v345, 0
        %v488 = vsel %vm456, %v346, 0
        %v491 = vsel %vm456, %v347, 0
        %v494 = vsel %vm456, %v348, 0
        %v497 = vsel %vm456, %v349, 0
        %v500 = vsel %vm456, %v350, 0
        %v503 = vsel %vm456, %v351, 0
        %v506 = vsel %vm456, %v352, 0
        %v509 = vsel %vm456, %v353, 0
        %v512 = vsel %vm456, %v354, 0
        %v515 = vsel %vm456, %v355, 0
        %v518 = vsel %vm456, %v356, 0
        %v521 = vsel %vm456, %v357, 0
        %v524 = vsel %vm456, %v358, 0
        %v527 = vsel %vm456, %v359, 0
        %v530 = vsel %vm456, %v360, 0
        %v533 = vsel %vm456, %v361, 0
        %v536 = vsel %vm456, %v362, 0
        %v539 = vsel %vm456, %v363, 0
        %v542 = vsel %vm456, %v364, 0
        %v545 = vsel %vm456, %v365, 0
        %v548 = vsel %vm456, %v366, 0
        %v551 = vsel %vm456, %v367, 0
        %v554 = vsel %vm456, %v368, 0
        %v557 = vsel %vm456, %v369, 0
        %v560 = vsel %vm456, %v370, 0
        %v563 = vsel %vm456, %v371, 0
        %v566 = vsel %vm456, %v372, 0
        %v569 = vsel %vm456, %v373, 0
        %v572 = vsel %vm456, %v374, 0
        %v575 = vsel %vm456, %v375, 0
        %v578 = vsel %vm456, %v376, 0
        %v581 = vsel %vm456, %v377, 0
        %v584 = vsel %vm456, %v378, 0
        %v587 = vsel %vm456, %v379, 0
        %v590 = vsel %vm456, %v380, 0
        %v593 = vsel %vm456, %v381, 0
        %v596 = vsel %vm456, %v382, 0
        %v599 = vsel %vm456, %v383, 0
        %v602 = vsel %vm456, %v384, 0
        %v605 = vsel %vm456, %v385, 0
        %v608 = vsel %vm456, %v386, 0
        %v611 = vsel %vm456, %v387, 0
        %v614 = vsel %vm456, %v388, 0
        %v617 = vsel %vm456, %v389, 0
        %v620 = vsel %vm456, %v390, 0
        %v623 = vsel %vm456, %v391, 0
        %v626 = vsel %vm456, %v392, 0
        %v629 = vsel %vm456, %v393, 0
        %v632 = vsel %vm456, %v394, 0
        %v635 = vsel %vm456, %v395, 0
        %v638 = vsel %vm456, %v396, 0
        %v641 = vsel %vm456, %v397, 0
        %v644 = vsel %vm456, %v398, 0
        %v647 = vsel %vm456, %v399, 0
        %v650 = vsel %vm456, %v400, 0
        %v653 = vsel %vm456, %v401, 0
        %v656 = vsel %vm456, %v402, 0
        %v659 = vsel %vm456, %v403, 0
        %v662 = vsel %vm456, %v404, 0
        %v665 = vsel %vm456, %v405, 0
        %v668 = vsel %vm456, %v406, 0
        %v671 = vsel %vm456, %v407, 0
        %673 = vmatprep.subr.mxu0 0.0
        %v674 = vand.u32 %v482, 4294901760
        %675 = vmatpush1.xpose.msra.mxu0 %v674
        %676 = vmatprep.subr.mxu0 0.0
        %v677 = vand.u32 %v485, 4294901760
        %678 = vmatpush1.xpose.msra.mxu0 %v677
        %679 = vmatprep.subr.mxu0 0.0
        %v680 = vand.u32 %v488, 4294901760
        %681 = vmatpush1.xpose.msra.mxu0 %v680
        %682 = vmatprep.subr.mxu0 0.0
        %v683 = vand.u32 %v491, 4294901760
        %684 = vmatpush1.xpose.msra.mxu0 %v683
        %685 = vmatprep.subr.mxu0 0.0
        %v686 = vand.u32 %v494, 4294901760
        %687 = vmatpush1.xpose.msra.mxu0 %v686
        %688 = vmatprep.subr.mxu0 0.0
        %v689 = vand.u32 %v497, 4294901760
        %690 = vmatpush1.xpose.msra.mxu0 %v689
        %691 = vmatprep.subr.mxu0 0.0
        %v692 = vand.u32 %v500, 4294901760
        %693 = vmatpush1.xpose.msra.mxu0 %v692
        %694 = vmatprep.subr.mxu0 0.0
        %v695 = vand.u32 %v503, 4294901760
        %696 = vmatpush1.xpose.msra.mxu0 %v695
        %697 = vmatprep.subr.mxu0 0.0
        %v698 = vand.u32 %v506, 4294901760
        %699 = vmatpush1.xpose.msra.mxu0 %v698
        %700 = vmatprep.subr.mxu0 0.0
        %v701 = vand.u32 %v509, 4294901760
        %702 = vmatpush1.xpose.msra.mxu0 %v701
        %703 = vmatprep.subr.mxu0 0.0
        %v704 = vand.u32 %v512, 4294901760
        %705 = vmatpush1.xpose.msra.mxu0 %v704
        %706 = vmatprep.subr.mxu0 0.0
        %v707 = vand.u32 %v515, 4294901760
        %708 = vmatpush1.xpose.msra.mxu0 %v707
        %709 = vmatprep.subr.mxu0 0.0
        %v710 = vand.u32 %v518, 4294901760
        %711 = vmatpush1.xpose.msra.mxu0 %v710
        %712 = vmatprep.subr.mxu0 0.0
        %v713 = vand.u32 %v521, 4294901760
        %714 = vmatpush1.xpose.msra.mxu0 %v713
        %715 = vmatprep.subr.mxu0 0.0
        %v716 = vand.u32 %v524, 4294901760
        %717 = vmatpush1.xpose.msra.mxu0 %v716
        %718 = vmatprep.subr.mxu0 0.0
        %v719 = vand.u32 %v527, 4294901760
        %720 = vmatpush1.xpose.msra.mxu0 %v719
        %721 = vmatprep.subr.mxu0 0.0
        %v722 = vand.u32 %v530, 4294901760
        %723 = vmatpush1.xpose.msra.mxu0 %v722
        %724 = vmatprep.subr.mxu0 0.0
        %v725 = vand.u32 %v533, 4294901760
        %726 = vmatpush1.xpose.msra.mxu0 %v725
        %727 = vmatprep.subr.mxu0 0.0
        %v728 = vand.u32 %v536, 4294901760
        %729 = vmatpush1.xpose.msra.mxu0 %v728
        %730 = vmatprep.subr.mxu0 0.0
        %v731 = vand.u32 %v539, 4294901760
        %732 = vmatpush1.xpose.msra.mxu0 %v731
        %733 = vmatprep.subr.mxu0 0.0
        %v734 = vand.u32 %v542, 4294901760
        %735 = vmatpush1.xpose.msra.mxu0 %v734
        %736 = vmatprep.subr.mxu0 0.0
        %v737 = vand.u32 %v545, 4294901760
        %738 = vmatpush1.xpose.msra.mxu0 %v737
        %739 = vmatprep.subr.mxu0 0.0
        %v740 = vand.u32 %v548, 4294901760
        %741 = vmatpush1.xpose.msra.mxu0 %v740
        %742 = vmatprep.subr.mxu0 0.0
        %v743 = vand.u32 %v551, 4294901760
        %744 = vmatpush1.xpose.msra.mxu0 %v743
        %745 = vmatprep.subr.mxu0 0.0
        %v746 = vand.u32 %v554, 4294901760
        %747 = vmatpush1.xpose.msra.mxu0 %v746
        %748 = vmatprep.subr.mxu0 0.0
        %v749 = vand.u32 %v557, 4294901760
        %750 = vmatpush1.xpose.msra.mxu0 %v749
        %751 = vmatprep.subr.mxu0 0.0
        %v752 = vand.u32 %v560, 4294901760
        %753 = vmatpush1.xpose.msra.mxu0 %v752
        %754 = vmatprep.subr.mxu0 0.0
        %v755 = vand.u32 %v563, 4294901760
        %756 = vmatpush1.xpose.msra.mxu0 %v755
        %757 = vmatprep.subr.mxu0 0.0
        %v758 = vand.u32 %v566, 4294901760
        %759 = vmatpush1.xpose.msra.mxu0 %v758
        %760 = vmatprep.subr.mxu0 0.0
        %v761 = vand.u32 %v569, 4294901760
        %762 = vmatpush1.xpose.msra.mxu0 %v761
        %763 = vmatprep.subr.mxu0 0.0
        %v764 = vand.u32 %v572, 4294901760
        %765 = vmatpush1.xpose.msra.mxu0 %v764
        %766 = vmatprep.subr.mxu0 0.0
        %v767 = vand.u32 %v575, 4294901760
        %768 = vmatpush1.xpose.msra.mxu0 %v767
        %769 = vmatprep.mubr.f32.mxu0 0.0
        %v770 = vand.u32 %v458, 4294901760
        %v771 = vsub.f32 %v458, %v770
        %v772 = vand.u32 %v771, 4294901760
        %v773 = vsub.f32 %v771, %v772
        %v774 = vand.u32 %v773, 4294901760
        %775 = vmatmul.mubr.f32.gmra.mrb[0].mxu0 %v774
        %v776 = vpop.f32.mrb[0].mxu0
        %v777 = vadd.f32 %v419, %v776
        %v778 = vpop.f32.mrb[0].mxu0
        %v779 = vadd.f32 %v419, %v778
        %780 = vmatprep.mubr.f32.mxu0 0.0
        %v781 = vand.u32 %v461, 4294901760
        %v782 = vsub.f32 %v461, %v781
        %v783 = vand.u32 %v782, 4294901760
        %v784 = vsub.f32 %v782, %v783
        %v785 = vand.u32 %v784, 4294901760
        %786 = vmatmul.mubr.f32.gmra.mrb[0].mxu0 %v785
        %v787 = vpop.f32.mrb[0].mxu0
        %v788 = vadd.f32 %v424, %v787
        %v789 = vpop.f32.mrb[0].mxu0
        %v790 = vadd.f32 %v424, %v789
        %791 = vmatprep.mubr.f32.mxu0 0.0
        %v792 = vand.u32 %v464, 4294901760
        %v793 = vsub.f32 %v464, %v792
        %v794 = vand.u32 %v793, 4294901760
        %v795 = vsub.f32 %v793, %v794
        %v796 = vand.u32 %v795, 4294901760
        %797 = vmatmul.mubr.f32.gmra.mrb[0].mxu0 %v796
        %v798 = vpop.f32.mrb[0].mxu0
        %v799 = vadd.f32 %v429, %v798
        %v800 = vpop.f32.mrb[0].mxu0
        %v801 = vadd.f32 %v429, %v800
        %802 = vmatprep.mubr.f32.mxu0 0.0
        %v803 = vand.u32 %v467, 4294901760
        %v804 = vsub.f32 %v467, %v803
        %v805 = vand.u32 %v804, 4294901760
        %v806 = vsub.f32 %v804, %v805
        %v807 = vand.u32 %v806, 4294901760
        %808 = vmatmul.mubr.f32.gmra.mrb[0].mxu0 %v807
        %v809 = vpop.f32.mrb[0].mxu0
        %v810 = vadd.f32 %v434, %v809
        %v811 = vpop.f32.mrb[0].mxu0
        %v812 = vadd.f32 %v434, %v811
        %813 = vmatprep.mubr.f32.mxu0 0.0
        %v814 = vand.u32 %v470, 4294901760
        %v815 = vsub.f32 %v470, %v814
        %v816 = vand.u32 %v815, 4294901760
        %v817 = vsub.f32 %v815, %v816
        %v818 = vand.u32 %v817, 4294901760
        %819 = vmatmul.mubr.f32.gmra.mrb[0].mxu0 %v818
        %v820 = vpop.f32.mrb[0].mxu0
        %v821 = vadd.f32 %v439, %v820
        %v822 = vpop.f32.mrb[0].mxu0
        %v823 = vadd.f32 %v439, %v822
        %824 = vmatprep.mubr.f32.mxu0 0.0
        %v825 = vand.u32 %v473, 4294901760
        %v826 = vsub.f32 %v473, %v825
        %v827 = vand.u32 %v826, 4294901760
        %v828 = vsub.f32 %v826, %v827
        %v829 = vand.u32 %v828, 4294901760
        %830 = vmatmul.mubr.f32.gmra.mrb[0].mxu0 %v829
        %v831 = vpop.f32.mrb[0].mxu0
        %v832 = vadd.f32 %v444, %v831
        %v833 = vpop.f32.mrb[0].mxu0
        %v834 = vadd.f32 %v444, %v833
        %835 = vmatprep.mubr.f32.mxu0 0.0
        %v836 = vand.u32 %v476, 4294901760
        %v837 = vsub.f32 %v476, %v836
        %v838 = vand.u32 %v837, 4294901760
        %v839 = vsub.f32 %v837, %v838
        %v840 = vand.u32 %v839, 4294901760
        %841 = vmatmul.mubr.f32.gmra.mrb[0].mxu0 %v840
        %v842 = vpop.f32.mrb[0].mxu0
        %v843 = vadd.f32 %v449, %v842
        %v844 = vpop.f32.mrb[0].mxu0
        %v845 = vadd.f32 %v449, %v844
        %846 = vmatprep.mubr.f32.mxu0 0.0
        %v847 = vand.u32 %v479, 4294901760
        %v848 = vsub.f32 %v479, %v847
        %v849 = vand.u32 %v848, 4294901760
        %v850 = vsub.f32 %v848, %v849
        %v851 = vand.u32 %v850, 4294901760
        %852 = vmatmul.mubr.f32.gmra.mrb[0].mxu0 %v851
        %v853 = vpop.f32.mrb[0].mxu0
        %v854 = vadd.f32 %v454, %v853
        %v855 = vpop.f32.mrb[0].mxu0
        %v856 = vadd.f32 %v454, %v855
        %857 = vdwg.mxu0
        %858 = vmatprep.subr.mxu0 0.0
        %v859 = vand.u32 %v482, 4294901760
        %v860 = vsub.f32 %v482, %v859
        %v861 = vand.u32 %v860, 4294901760
        %v862 = vsub.f32 %v860, %v861
        %v863 = vand.u32 %v862, 4294901760
        %864 = vmatpush1.xpose.msra.mxu0 %v863
        %865 = vmatprep.subr.mxu0 0.0
        %v866 = vand.u32 %v485, 4294901760
        %v867 = vsub.f32 %v485, %v866
        %v868 = vand.u32 %v867, 4294901760
        %v869 = vsub.f32 %v867, %v868
        %v870 = vand.u32 %v869, 4294901760
        %871 = vmatpush1.xpose.msra.mxu0 %v870
        %872 = vmatprep.subr.mxu0 0.0
        %v873 = vand.u32 %v488, 4294901760
        %v874 = vsub.f32 %v488, %v873
        %v875 = vand.u32 %v874, 4294901760
        %v876 = vsub.f32 %v874, %v875
        %v877 = vand.u32 %v876, 4294901760
        %878 = vmatpush1.xpose.msra.mxu0 %v877
        %879 = vmatprep.subr.mxu0 0.0
        %v880 = vand.u32 %v491, 4294901760
        %v881 = vsub.f32 %v491, %v880
        %v882 = vand.u32 %v881, 4294901760
        %v883 = vsub.f32 %v881, %v882
        %v884 = vand.u32 %v883, 4294901760
        %885 = vmatpush1.xpose.msra.mxu0 %v884
        %886 = vmatprep.subr.mxu0 0.0
        %v887 = vand.u32 %v494, 4294901760
        %v888 = vsub.f32 %v494, %v887
        %v889 = vand.u32 %v888, 4294901760
        %v890 = vsub.f32 %v888, %v889
        %v891 = vand.u32 %v890, 4294901760
        %892 = vmatpush1.xpose.msra.mxu0 %v891
        %893 = vmatprep.subr.mxu0 0.0
        %v894 = vand.u32 %v497, 4294901760
        %v895 = vsub.f32 %v497, %v894
        %v896 = vand.u32 %v895, 4294901760
        %v897 = vsub.f32 %v895, %v896
        %v898 = vand.u32 %v897, 4294901760
        %899 = vmatpush1.xpose.msra.mxu0 %v898
        %900 = vmatprep.subr.mxu0 0.0
        %v901 = vand.u32 %v500, 4294901760
        %v902 = vsub.f32 %v500, %v901
        %v903 = vand.u32 %v902, 4294901760
        %v904 = vsub.f32 %v902, %v903
        %v905 = vand.u32 %v904, 4294901760
        %906 = vmatpush1.xpose.msra.mxu0 %v905
        %907 = vmatprep.subr.mxu0 0.0
        %v908 = vand.u32 %v503, 4294901760
        %v909 = vsub.f32 %v503, %v908
        %v910 = vand.u32 %v909, 4294901760
        %v911 = vsub.f32 %v909, %v910
        %v912 = vand.u32 %v911, 4294901760
        %913 = vmatpush1.xpose.msra.mxu0 %v912
        %914 = vmatprep.subr.mxu0 0.0
        %v915 = vand.u32 %v506, 4294901760
        %v916 = vsub.f32 %v506, %v915
        %v917 = vand.u32 %v916, 4294901760
        %v918 = vsub.f32 %v916, %v917
        %v919 = vand.u32 %v918, 4294901760
        %920 = vmatpush1.xpose.msra.mxu0 %v919
        %921 = vmatprep.subr.mxu0 0.0
        %v922 = vand.u32 %v509, 4294901760
        %v923 = vsub.f32 %v509, %v922
        %v924 = vand.u32 %v923, 4294901760
        %v925 = vsub.f32 %v923, %v924
        %v926 = vand.u32 %v925, 4294901760
        %927 = vmatpush1.xpose.msra.mxu0 %v926
        %928 = vmatprep.subr.mxu0 0.0
        %v929 = vand.u32 %v512, 4294901760
        %v930 = vsub.f32 %v512, %v929
        %v931 = vand.u32 %v930, 4294901760
        %v932 = vsub.f32 %v930, %v931
        %v933 = vand.u32 %v932, 4294901760
        %934 = vmatpush1.xpose.msra.mxu0 %v933
        %935 = vmatprep.subr.mxu0 0.0
        %v936 = vand.u32 %v515, 4294901760
        %v937 = vsub.f32 %v515, %v936
        %v938 = vand.u32 %v937, 4294901760
        %v939 = vsub.f32 %v937, %v938
        %v940 = vand.u32 %v939, 4294901760
        %941 = vmatpush1.xpose.msra.mxu0 %v940
        %942 = vmatprep.subr.mxu0 0.0
        %v943 = vand.u32 %v518, 4294901760
        %v944 = vsub.f32 %v518, %v943
        %v945 = vand.u32 %v944, 4294901760
        %v946 = vsub.f32 %v944, %v945
        %v947 = vand.u32 %v946, 4294901760
        %948 = vmatpush1.xpose.msra.mxu0 %v947
        %949 = vmatprep.subr.mxu0 0.0
        %v950 = vand.u32 %v521, 4294901760
        %v951 = vsub.f32 %v521, %v950
        %v952 = vand.u32 %v951, 4294901760
        %v953 = vsub.f32 %v951, %v952
        %v954 = vand.u32 %v953, 4294901760
        %955 = vmatpush1.xpose.msra.mxu0 %v954
        %956 = vmatprep.subr.mxu0 0.0
        %v957 = vand.u32 %v524, 4294901760
        %v958 = vsub.f32 %v524, %v957
        %v959 = vand.u32 %v958, 4294901760
        %v960 = vsub.f32 %v958, %v959
        %v961 = vand.u32 %v960, 4294901760
        %962 = vmatpush1.xpose.msra.mxu0 %v961
        %963 = vmatprep.subr.mxu0 0.0
        %v964 = vand.u32 %v527, 4294901760
        %v965 = vsub.f32 %v527, %v964
        %v966 = vand.u32 %v965, 4294901760
        %v967 = vsub.f32 %v965, %v966
        %v968 = vand.u32 %v967, 4294901760
        %969 = vmatpush1.xpose.msra.mxu0 %v968
        %970 = vmatprep.subr.mxu0 0.0
        %v971 = vand.u32 %v530, 4294901760
        %v972 = vsub.f32 %v530, %v971
        %v973 = vand.u32 %v972, 4294901760
        %v974 = vsub.f32 %v972, %v973
        %v975 = vand.u32 %v974, 4294901760
        %976 = vmatpush1.xpose.msra.mxu0 %v975
        %977 = vmatprep.subr.mxu0 0.0
        %v978 = vand.u32 %v533, 4294901760
        %v979 = vsub.f32 %v533, %v978
        %v980 = vand.u32 %v979, 4294901760
        %v981 = vsub.f32 %v979, %v980
        %v982 = vand.u32 %v981, 4294901760
        %983 = vmatpush1.xpose.msra.mxu0 %v982
        %984 = vmatprep.subr.mxu0 0.0
        %v985 = vand.u32 %v536, 4294901760
        %v986 = vsub.f32 %v536, %v985
        %v987 = vand.u32 %v986, 4294901760
        %v988 = vsub.f32 %v986, %v987
        %v989 = vand.u32 %v988, 4294901760
        %990 = vmatpush1.xpose.msra.mxu0 %v989
        %991 = vmatprep.subr.mxu0 0.0
        %v992 = vand.u32 %v539, 4294901760
        %v993 = vsub.f32 %v539, %v992
        %v994 = vand.u32 %v993, 4294901760
        %v995 = vsub.f32 %v993, %v994
        %v996 = vand.u32 %v995, 4294901760
        %997 = vmatpush1.xpose.msra.mxu0 %v996
        %998 = vmatprep.subr.mxu0 0.0
        %v999 = vand.u32 %v542, 4294901760
        %v1000 = vsub.f32 %v542, %v999
        %v1001 = vand.u32 %v1000, 4294901760
        %v1002 = vsub.f32 %v1000, %v1001
        %v1003 = vand.u32 %v1002, 4294901760
        %1004 = vmatpush1.xpose.msra.mxu0 %v1003
        %1005 = vmatprep.subr.mxu0 0.0
        %v1006 = vand.u32 %v545, 4294901760
        %v1007 = vsub.f32 %v545, %v1006
        %v1008 = vand.u32 %v1007, 4294901760
        %v1009 = vsub.f32 %v1007, %v1008
        %v1010 = vand.u32 %v1009, 4294901760
        %1011 = vmatpush1.xpose.msra.mxu0 %v1010
        %1012 = vmatprep.subr.mxu0 0.0
        %v1013 = vand.u32 %v548, 4294901760
        %v1014 = vsub.f32 %v548, %v1013
        %v1015 = vand.u32 %v1014, 4294901760
        %v1016 = vsub.f32 %v1014, %v1015
        %v1017 = vand.u32 %v1016, 4294901760
        %1018 = vmatpush1.xpose.msra.mxu0 %v1017
        %1019 = vmatprep.subr.mxu0 0.0
        %v1020 = vand.u32 %v551, 4294901760
        %v1021 = vsub.f32 %v551, %v1020
        %v1022 = vand.u32 %v1021, 4294901760
        %v1023 = vsub.f32 %v1021, %v1022
        %v1024 = vand.u32 %v1023, 4294901760
        %1025 = vmatpush1.xpose.msra.mxu0 %v1024
        %1026 = vmatprep.subr.mxu0 0.0
        %v1027 = vand.u32 %v554, 4294901760
        %v1028 = vsub.f32 %v554, %v1027
        %v1029 = vand.u32 %v1028, 4294901760
        %v1030 = vsub.f32 %v1028, %v1029
        %v1031 = vand.u32 %v1030, 4294901760
        %1032 = vmatpush1.xpose.msra.mxu0 %v1031
        %1033 = vmatprep.subr.mxu0 0.0
        %v1034 = vand.u32 %v557, 4294901760
        %v1035 = vsub.f32 %v557, %v1034
        %v1036 = vand.u32 %v1035, 4294901760
        %v1037 = vsub.f32 %v1035, %v1036
        %v1038 = vand.u32 %v1037, 4294901760
        %1039 = vmatpush1.xpose.msra.mxu0 %v1038
        %1040 = vmatprep.subr.mxu0 0.0
        %v1041 = vand.u32 %v560, 4294901760
        %v1042 = vsub.f32 %v560, %v1041
        %v1043 = vand.u32 %v1042, 4294901760
        %v1044 = vsub.f32 %v1042, %v1043
        %v1045 = vand.u32 %v1044, 4294901760
        %1046 = vmatpush1.xpose.msra.mxu0 %v1045
        %1047 = vmatprep.subr.mxu0 0.0
        %v1048 = vand.u32 %v563, 4294901760
        %v1049 = vsub.f32 %v563, %v1048
        %v1050 = vand.u32 %v1049, 4294901760
        %v1051 = vsub.f32 %v1049, %v1050
        %v1052 = vand.u32 %v1051, 4294901760
        %1053 = vmatpush1.xpose.msra.mxu0 %v1052
        %1054 = vmatprep.subr.mxu0 0.0
        %v1055 = vand.u32 %v566, 4294901760
        %v1056 = vsub.f32 %v566, %v1055
        %v1057 = vand.u32 %v1056, 4294901760
        %v1058 = vsub.f32 %v1056, %v1057
        %v1059 = vand.u32 %v1058, 4294901760
        %1060 = vmatpush1.xpose.msra.mxu0 %v1059
        %1061 = vmatprep.subr.mxu0 0.0
        %v1062 = vand.u32 %v569, 4294901760
        %v1063 = vsub.f32 %v569, %v1062
        %v1064 = vand.u32 %v1063, 4294901760
        %v1065 = vsub.f32 %v1063, %v1064
        %v1066 = vand.u32 %v1065, 4294901760
        %1067 = vmatpush1.xpose.msra.mxu0 %v1066
        %1068 = vmatprep.subr.mxu0 0.0
        %v1069 = vand.u32 %v572, 4294901760
        %v1070 = vsub.f32 %v572, %v1069
        %v1071 = vand.u32 %v1070, 4294901760
        %v1072 = vsub.f32 %v1070, %v1071
        %v1073 = vand.u32 %v1072, 4294901760
        %1074 = vmatpush1.xpose.msra.mxu0 %v1073
        %1075 = vmatprep.subr.mxu0 0.0
        %v1076 = vand.u32 %v575, 4294901760
        %v1077 = vsub.f32 %v575, %v1076
        %v1078 = vand.u32 %v1077, 4294901760
        %v1079 = vsub.f32 %v1077, %v1078
        %v1080 = vand.u32 %v1079, 4294901760
        %1081 = vmatpush1.xpose.msra.mxu0 %v1080
        %1082 = vmatprep.mubr.f32.mxu0 0.0
        %v1083 = vand.u32 %v458, 4294901760
        %1084 = vmatmul.mubr.f32.gmra.mrb[0].mxu0 %v1083
        %v1085 = vpop.f32.mrb[0].mxu0
        %v1086 = vadd.f32 %v777, %v1085
        %v1087 = vpop.f32.mrb[0].mxu0
        %v1088 = vadd.f32 %v779, %v1087
        %1089 = vmatprep.mubr.f32.mxu0 0.0
        %v1090 = vand.u32 %v461, 4294901760
        %1091 = vmatmul.mubr.f32.gmra.mrb[0].mxu0 %v1090
        %v1092 = vpop.f32.mrb[0].mxu0
        %v1093 = vadd.f32 %v788, %v1092
        %v1094 = vpop.f32.mrb[0].mxu0
        %v1095 = vadd.f32 %v790, %v1094
        %1096 = vmatprep.mubr.f32.mxu0 0.0
        %v1097 = vand.u32 %v464, 4294901760
        %1098 = vmatmul.mubr.f32.gmra.mrb[0].mxu0 %v1097
        %v1099 = vpop.f32.mrb[0].mxu0
        %v1100 = vadd.f32 %v799, %v1099
        %v1101 = vpop.f32.mrb[0].mxu0
        %v1102 = vadd.f32 %v801, %v1101
        %1103 = vmatprep.mubr.f32.mxu0 0.0
        %v1104 = vand.u32 %v467, 4294901760
        %1105 = vmatmul.mubr.f32.gmra.mrb[0].mxu0 %v1104
        %v1106 = vpop.f32.mrb[0].mxu0
        %v1107 = vadd.f32 %v810, %v1106
        %v1108 = vpop.f32.mrb[0].mxu0
        %v1109 = vadd.f32 %v812, %v1108
        %1110 = vmatprep.mubr.f32.mxu0 0.0
        %v1111 = vand.u32 %v470, 4294901760
        %1112 = vmatmul.mubr.f32.gmra.mrb[0].mxu0 %v1111
        %v1113 = vpop.f32.mrb[0].mxu0
        %v1114 = vadd.f32 %v821, %v1113
        %v1115 = vpop.f32.mrb[0].mxu0
        %v1116 = vadd.f32 %v823, %v1115
        %1117 = vmatprep.mubr.f32.mxu0 0.0
        %v1118 = vand.u32 %v473, 4294901760
        %1119 = vmatmul.mubr.f32.gmra.mrb[0].mxu0 %v1118
        %v1120 = vpop.f32.mrb[0].mxu0
        %v1121 = vadd.f32 %v832, %v1120
        %v1122 = vpop.f32.mrb[0].mxu0
        %v1123 = vadd.f32 %v834, %v1122
        %1124 = vmatprep.mubr.f32.mxu0 0.0
        %v1125 = vand.u32 %v476, 4294901760
        %1126 = vmatmul.mubr.f32.gmra.mrb[0].mxu0 %v1125
        %v1127 = vpop.f32.mrb[0].mxu0
        %v1128 = vadd.f32 %v843, %v1127
        %v1129 = vpop.f32.mrb[0].mxu0
        %v1130 = vadd.f32 %v845, %v1129
        %1131 = vmatprep.mubr.f32.mxu0 0.0
        %v1132 = vand.u32 %v479, 4294901760
        %1133 = vmatmul.mubr.f32.gmra.mrb[0].mxu0 %v1132
        %v1134 = vpop.f32.mrb[0].mxu0
        %v1135 = vadd.f32 %v854, %v1134
        %v1136 = vpop.f32.mrb[0].mxu0
        %v1137 = vadd.f32 %v856, %v1136
        %1138 = vdwg.mxu0
        %1139 = vmatprep.subr.mxu0 0.0
        %v1140 = vand.u32 %v482, 4294901760
        %v1141 = vsub.f32 %v482, %v1140
        %1142 = vmatpush1.xpose.msra.mxu0 %v1141
        %1143 = vmatprep.subr.mxu0 0.0
        %v1144 = vand.u32 %v485, 4294901760
        %v1145 = vsub.f32 %v485, %v1144
        %1146 = vmatpush1.xpose.msra.mxu0 %v1145
        %1147 = vmatprep.subr.mxu0 0.0
        %v1148 = vand.u32 %v488, 4294901760
        %v1149 = vsub.f32 %v488, %v1148
        %1150 = vmatpush1.xpose.msra.mxu0 %v1149
        %1151 = vmatprep.subr.mxu0 0.0
        %v1152 = vand.u32 %v491, 4294901760
        %v1153 = vsub.f32 %v491, %v1152
        %1154 = vmatpush1.xpose.msra.mxu0 %v1153
        %1155 = vmatprep.subr.mxu0 0.0
        %v1156 = vand.u32 %v494, 4294901760
        %v1157 = vsub.f32 %v494, %v1156
        %1158 = vmatpush1.xpose.msra.mxu0 %v1157
        %1159 = vmatprep.subr.mxu0 0.0
        %v1160 = vand.u32 %v497, 4294901760
        %v1161 = vsub.f32 %v497, %v1160
        %1162 = vmatpush1.xpose.msra.mxu0 %v1161
        %1163 = vmatprep.subr.mxu0 0.0
        %v1164 = vand.u32 %v500, 4294901760
        %v1165 = vsub.f32 %v500, %v1164
        %1166 = vmatpush1.xpose.msra.mxu0 %v1165
        %1167 = vmatprep.subr.mxu0 0.0
        %v1168 = vand.u32 %v503, 4294901760
        %v1169 = vsub.f32 %v503, %v1168
        %1170 = vmatpush1.xpose.msra.mxu0 %v1169
        %1171 = vmatprep.subr.mxu0 0.0
        %v1172 = vand.u32 %v506, 4294901760
        %v1173 = vsub.f32 %v506, %v1172
        %1174 = vmatpush1.xpose.msra.mxu0 %v1173
        %1175 = vmatprep.subr.mxu0 0.0
        %v1176 = vand.u32 %v509, 4294901760
        %v1177 = vsub.f32 %v509, %v1176
        %1178 = vmatpush1.xpose.msra.mxu0 %v1177
        %1179 = vmatprep.subr.mxu0 0.0
        %v1180 = vand.u32 %v512, 4294901760
        %v1181 = vsub.f32 %v512, %v1180
        %1182 = vmatpush1.xpose.msra.mxu0 %v1181
        %1183 = vmatprep.subr.mxu0 0.0
        %v1184 = vand.u32 %v515, 4294901760
        %v1185 = vsub.f32 %v515, %v1184
        %1186 = vmatpush1.xpose.msra.mxu0 %v1185
        %1187 = vmatprep.subr.mxu0 0.0
        %v1188 = vand.u32 %v518, 4294901760
        %v1189 = vsub.f32 %v518, %v1188
        %1190 = vmatpush1.xpose.msra.mxu0 %v1189
        %1191 = vmatprep.subr.mxu0 0.0
        %v1192 = vand.u32 %v521, 4294901760
        %v1193 = vsub.f32 %v521, %v1192
        %1194 = vmatpush1.xpose.msra.mxu0 %v1193
        %1195 = vmatprep.subr.mxu0 0.0
        %v1196 = vand.u32 %v524, 4294901760
        %v1197 = vsub.f32 %v524, %v1196
        %1198 = vmatpush1.xpose.msra.mxu0 %v1197
        %1199 = vmatprep.subr.mxu0 0.0
        %v1200 = vand.u32 %v527, 4294901760
        %v1201 = vsub.f32 %v527, %v1200
        %1202 = vmatpush1.xpose.msra.mxu0 %v1201
        %1203 = vmatprep.subr.mxu0 0.0
        %v1204 = vand.u32 %v530, 4294901760
        %v1205 = vsub.f32 %v530, %v1204
        %1206 = vmatpush1.xpose.msra.mxu0 %v1205
        %1207 = vmatprep.subr.mxu0 0.0
        %v1208 = vand.u32 %v533, 4294901760
        %v1209 = vsub.f32 %v533, %v1208
        %1210 = vmatpush1.xpose.msra.mxu0 %v1209
        %1211 = vmatprep.subr.mxu0 0.0
        %v1212 = vand.u32 %v536, 4294901760
        %v1213 = vsub.f32 %v536, %v1212
        %1214 = vmatpush1.xpose.msra.mxu0 %v1213
        %1215 = vmatprep.subr.mxu0 0.0
        %v1216 = vand.u32 %v539, 4294901760
        %v1217 = vsub.f32 %v539, %v1216
        %1218 = vmatpush1.xpose.msra.mxu0 %v1217
        %1219 = vmatprep.subr.mxu0 0.0
        %v1220 = vand.u32 %v542, 4294901760
        %v1221 = vsub.f32 %v542, %v1220
        %1222 = vmatpush1.xpose.msra.mxu0 %v1221
        %1223 = vmatprep.subr.mxu0 0.0
        %v1224 = vand.u32 %v545, 4294901760
        %v1225 = vsub.f32 %v545, %v1224
        %1226 = vmatpush1.xpose.msra.mxu0 %v1225
        %1227 = vmatprep.subr.mxu0 0.0
        %v1228 = vand.u32 %v548, 4294901760
        %v1229 = vsub.f32 %v548, %v1228
        %1230 = vmatpush1.xpose.msra.mxu0 %v1229
        %1231 = vmatprep.subr.mxu0 0.0
        %v1232 = vand.u32 %v551, 4294901760
        %v1233 = vsub.f32 %v551, %v1232
        %1234 = vmatpush1.xpose.msra.mxu0 %v1233
        %1235 = vmatprep.subr.mxu0 0.0
        %v1236 = vand.u32 %v554, 4294901760
        %v1237 = vsub.f32 %v554, %v1236
        %1238 = vmatpush1.xpose.msra.mxu0 %v1237
        %1239 = vmatprep.subr.mxu0 0.0
        %v1240 = vand.u32 %v557, 4294901760
        %v1241 = vsub.f32 %v557, %v1240
        %1242 = vmatpush1.xpose.msra.mxu0 %v1241
        %1243 = vmatprep.subr.mxu0 0.0
        %v1244 = vand.u32 %v560, 4294901760
        %v1245 = vsub.f32 %v560, %v1244
        %1246 = vmatpush1.xpose.msra.mxu0 %v1245
        %1247 = vmatprep.subr.mxu0 0.0
        %v1248 = vand.u32 %v563, 4294901760
        %v1249 = vsub.f32 %v563, %v1248
        %1250 = vmatpush1.xpose.msra.mxu0 %v1249
        %1251 = vmatprep.subr.mxu0 0.0
        %v1252 = vand.u32 %v566, 4294901760
        %v1253 = vsub.f32 %v566, %v1252
        %1254 = vmatpush1.xpose.msra.mxu0 %v1253
        %1255 = vmatprep.subr.mxu0 0.0
        %v1256 = vand.u32 %v569, 4294901760
        %v1257 = vsub.f32 %v569, %v1256
        %1258 = vmatpush1.xpose.msra.mxu0 %v1257
        %1259 = vmatprep.subr.mxu0 0.0
        %v1260 = vand.u32 %v572, 4294901760
        %v1261 = vsub.f32 %v572, %v1260
        %1262 = vmatpush1.xpose.msra.mxu0 %v1261
        %1263 = vmatprep.subr.mxu0 0.0
        %v1264 = vand.u32 %v575, 4294901760
        %v1265 = vsub.f32 %v575, %v1264
        %1266 = vmatpush1.xpose.msra.mxu0 %v1265
        %1267 = vmatprep.mubr.f32.mxu0 0.0
        %v1268 = vand.u32 %v458, 4294901760
        %v1269 = vsub.f32 %v458, %v1268
        %1270 = vmatmul.mubr.f32.gmra.mrb[0].mxu0 %v1269
        %v1271 = vpop.f32.mrb[0].mxu0
        %v1272 = vadd.f32 %v1086, %v1271
        %v1273 = vpop.f32.mrb[0].mxu0
        %v1274 = vadd.f32 %v1088, %v1273
        %1275 = vmatprep.mubr.f32.mxu0 0.0
        %v1276 = vand.u32 %v461, 4294901760
        %v1277 = vsub.f32 %v461, %v1276
        %1278 = vmatmul.mubr.f32.gmra.mrb[0].mxu0 %v1277
        %v1279 = vpop.f32.mrb[0].mxu0
        %v1280 = vadd.f32 %v1093, %v1279
        %v1281 = vpop.f32.mrb[0].mxu0
        %v1282 = vadd.f32 %v1095, %v1281
        %1283 = vmatprep.mubr.f32.mxu0 0.0
        %v1284 = vand.u32 %v464, 4294901760
        %v1285 = vsub.f32 %v464, %v1284
        %1286 = vmatmul.mubr.f32.gmra.mrb[0].mxu0 %v1285
        %v1287 = vpop.f32.mrb[0].mxu0
        %v1288 = vadd.f32 %v1100, %v1287
        %v1289 = vpop.f32.mrb[0].mxu0
        %v1290 = vadd.f32 %v1102, %v1289
        %1291 = vmatprep.mubr.f32.mxu0 0.0
        %v1292 = vand.u32 %v467, 4294901760
        %v1293 = vsub.f32 %v467, %v1292
        %1294 = vmatmul.mubr.f32.gmra.mrb[0].mxu0 %v1293
        %v1295 = vpop.f32.mrb[0].mxu0
        %v1296 = vadd.f32 %v1107, %v1295
        %v1297 = vpop.f32.mrb[0].mxu0
        %v1298 = vadd.f32 %v1109, %v1297
        %1299 = vmatprep.mubr.f32.mxu0 0.0
        %v1300 = vand.u32 %v470, 4294901760
        %v1301 = vsub.f32 %v470, %v1300
        %1302 = vmatmul.mubr.f32.gmra.mrb[0].mxu0 %v1301
        %v1303 = vpop.f32.mrb[0].mxu0
        %v1304 = vadd.f32 %v1114, %v1303
        %v1305 = vpop.f32.mrb[0].mxu0
        %v1306 = vadd.f32 %v1116, %v1305
        %1307 = vmatprep.mubr.f32.mxu0 0.0
        %v1308 = vand.u32 %v473, 4294901760
        %v1309 = vsub.f32 %v473, %v1308
        %1310 = vmatmul.mubr.f32.gmra.mrb[0].mxu0 %v1309
        %v1311 = vpop.f32.mrb[0].mxu0
        %v1312 = vadd.f32 %v1121, %v1311
        %v1313 = vpop.f32.mrb[0].mxu0
        %v1314 = vadd.f32 %v1123, %v1313
        %1315 = vmatprep.mubr.f32.mxu0 0.0
        %v1316 = vand.u32 %v476, 4294901760
        %v1317 = vsub.f32 %v476, %v1316
        %1318 = vmatmul.mubr.f32.gmra.mrb[0].mxu0 %v1317
        %v1319 = vpop.f32.mrb[0].mxu0
        %v1320 = vadd.f32 %v1128, %v1319
        %v1321 = vpop.f32.mrb[0].mxu0
        %v1322 = vadd.f32 %v1130, %v1321
        %1323 = vmatprep.mubr.f32.mxu0 0.0
        %v1324 = vand.u32 %v479, 4294901760
        %v1325 = vsub.f32 %v479, %v1324
        %1326 = vmatmul.mubr.f32.gmra.mrb[0].mxu0 %v1325
        %v1327 = vpop.f32.mrb[0].mxu0
        %v1328 = vadd.f32 %v1135, %v1327
        %v1329 = vpop.f32.mrb[0].mxu0
        %v1330 = vadd.f32 %v1137, %v1329
        %1331 = vdwg.mxu0
        %1332 = vmatprep.subr.mxu0 0.0
        %v1333 = vand.u32 %v482, 4294901760
        %1334 = vmatpush1.xpose.msra.mxu0 %v1333
        %1335 = vmatprep.subr.mxu0 0.0
        %v1336 = vand.u32 %v485, 4294901760
        %1337 = vmatpush1.xpose.msra.mxu0 %v1336
        %1338 = vmatprep.subr.mxu0 0.0
        %v1339 = vand.u32 %v488, 4294901760
        %1340 = vmatpush1.xpose.msra.mxu0 %v1339
        %1341 = vmatprep.subr.mxu0 0.0
        %v1342 = vand.u32 %v491, 4294901760
        %1343 = vmatpush1.xpose.msra.mxu0 %v1342
        %1344 = vmatprep.subr.mxu0 0.0
        %v1345 = vand.u32 %v494, 4294901760
        %1346 = vmatpush1.xpose.msra.mxu0 %v1345
        %1347 = vmatprep.subr.mxu0 0.0
        %v1348 = vand.u32 %v497, 4294901760
        %1349 = vmatpush1.xpose.msra.mxu0 %v1348
        %1350 = vmatprep.subr.mxu0 0.0
        %v1351 = vand.u32 %v500, 4294901760
        %1352 = vmatpush1.xpose.msra.mxu0 %v1351
        %1353 = vmatprep.subr.mxu0 0.0
        %v1354 = vand.u32 %v503, 4294901760
        %1355 = vmatpush1.xpose.msra.mxu0 %v1354
        %1356 = vmatprep.subr.mxu0 0.0
        %v1357 = vand.u32 %v506, 4294901760
        %1358 = vmatpush1.xpose.msra.mxu0 %v1357
        %1359 = vmatprep.subr.mxu0 0.0
        %v1360 = vand.u32 %v509, 4294901760
        %1361 = vmatpush1.xpose.msra.mxu0 %v1360
        %1362 = vmatprep.subr.mxu0 0.0
        %v1363 = vand.u32 %v512, 4294901760
        %1364 = vmatpush1.xpose.msra.mxu0 %v1363
        %1365 = vmatprep.subr.mxu0 0.0
        %v1366 = vand.u32 %v515, 4294901760
        %1367 = vmatpush1.xpose.msra.mxu0 %v1366
        %1368 = vmatprep.subr.mxu0 0.0
        %v1369 = vand.u32 %v518, 4294901760
        %1370 = vmatpush1.xpose.msra.mxu0 %v1369
        %1371 = vmatprep.subr.mxu0 0.0
        %v1372 = vand.u32 %v521, 4294901760
        %1373 = vmatpush1.xpose.msra.mxu0 %v1372
        %1374 = vmatprep.subr.mxu0 0.0
        %v1375 = vand.u32 %v524, 4294901760
        %1376 = vmatpush1.xpose.msra.mxu0 %v1375
        %1377 = vmatprep.subr.mxu0 0.0
        %v1378 = vand.u32 %v527, 4294901760
        %1379 = vmatpush1.xpose.msra.mxu0 %v1378
        %1380 = vmatprep.subr.mxu0 0.0
        %v1381 = vand.u32 %v530, 4294901760
        %1382 = vmatpush1.xpose.msra.mxu0 %v1381
        %1383 = vmatprep.subr.mxu0 0.0
        %v1384 = vand.u32 %v533, 4294901760
        %1385 = vmatpush1.xpose.msra.mxu0 %v1384
        %1386 = vmatprep.subr.mxu0 0.0
        %v1387 = vand.u32 %v536, 4294901760
        %1388 = vmatpush1.xpose.msra.mxu0 %v1387
        %1389 = vmatprep.subr.mxu0 0.0
        %v1390 = vand.u32 %v539, 4294901760
        %1391 = vmatpush1.xpose.msra.mxu0 %v1390
        %1392 = vmatprep.subr.mxu0 0.0
        %v1393 = vand.u32 %v542, 4294901760
        %1394 = vmatpush1.xpose.msra.mxu0 %v1393
        %1395 = vmatprep.subr.mxu0 0.0
        %v1396 = vand.u32 %v545, 4294901760
        %1397 = vmatpush1.xpose.msra.mxu0 %v1396
        %1398 = vmatprep.subr.mxu0 0.0
        %v1399 = vand.u32 %v548, 4294901760
        %1400 = vmatpush1.xpose.msra.mxu0 %v1399
        %1401 = vmatprep.subr.mxu0 0.0
        %v1402 = vand.u32 %v551, 4294901760
        %1403 = vmatpush1.xpose.msra.mxu0 %v1402
        %1404 = vmatprep.subr.mxu0 0.0
        %v1405 = vand.u32 %v554, 4294901760
        %1406 = vmatpush1.xpose.msra.mxu0 %v1405
        %1407 = vmatprep.subr.mxu0 0.0
        %v1408 = vand.u32 %v557, 4294901760
        %1409 = vmatpush1.xpose.msra.mxu0 %v1408
        %1410 = vmatprep.subr.mxu0 0.0
        %v1411 = vand.u32 %v560, 4294901760
        %1412 = vmatpush1.xpose.msra.mxu0 %v1411
        %1413 = vmatprep.subr.mxu0 0.0
        %v1414 = vand.u32 %v563, 4294901760
        %1415 = vmatpush1.xpose.msra.mxu0 %v1414
        %1416 = vmatprep.subr.mxu0 0.0
        %v1417 = vand.u32 %v566, 4294901760
        %1418 = vmatpush1.xpose.msra.mxu0 %v1417
        %1419 = vmatprep.subr.mxu0 0.0
        %v1420 = vand.u32 %v569, 4294901760
        %1421 = vmatpush1.xpose.msra.mxu0 %v1420
        %1422 = vmatprep.subr.mxu0 0.0
        %v1423 = vand.u32 %v572, 4294901760
        %1424 = vmatpush1.xpose.msra.mxu0 %v1423
        %1425 = vmatprep.subr.mxu0 0.0
        %v1426 = vand.u32 %v575, 4294901760
        %1427 = vmatpush1.xpose.msra.mxu0 %v1426
        %1428 = vmatprep.mubr.f32.mxu0 0.0
        %v1429 = vand.u32 %v458, 4294901760
        %v1430 = vsub.f32 %v458, %v1429
        %v1431 = vand.u32 %v1430, 4294901760
        %1432 = vmatmul.mubr.f32.gmra.mrb[0].mxu0 %v1431
        %v1433 = vpop.f32.mrb[0].mxu0
        %v1434 = vadd.f32 %v1272, %v1433
        %v1435 = vpop.f32.mrb[0].mxu0
        %v1436 = vadd.f32 %v1274, %v1435
        %1437 = vmatprep.mubr.f32.mxu0 0.0
        %v1438 = vand.u32 %v461, 4294901760
        %v1439 = vsub.f32 %v461, %v1438
        %v1440 = vand.u32 %v1439, 4294901760
        %1441 = vmatmul.mubr.f32.gmra.mrb[0].mxu0 %v1440
        %v1442 = vpop.f32.mrb[0].mxu0
        %v1443 = vadd.f32 %v1280, %v1442
        %v1444 = vpop.f32.mrb[0].mxu0
        %v1445 = vadd.f32 %v1282, %v1444
        %1446 = vmatprep.mubr.f32.mxu0 0.0
        %v1447 = vand.u32 %v464, 4294901760
        %v1448 = vsub.f32 %v464, %v1447
        %v1449 = vand.u32 %v1448, 4294901760
        %1450 = vmatmul.mubr.f32.gmra.mrb[0].mxu0 %v1449
        %v1451 = vpop.f32.mrb[0].mxu0
        %v1452 = vadd.f32 %v1288, %v1451
        %v1453 = vpop.f32.mrb[0].mxu0
        %v1454 = vadd.f32 %v1290, %v1453
        %1455 = vmatprep.mubr.f32.mxu0 0.0
        %v1456 = vand.u32 %v467, 4294901760
        %v1457 = vsub.f32 %v467, %v1456
        %v1458 = vand.u32 %v1457, 4294901760
        %1459 = vmatmul.mubr.f32.gmra.mrb[0].mxu0 %v1458
        %v1460 = vpop.f32.mrb[0].mxu0
        %v1461 = vadd.f32 %v1296, %v1460
        %v1462 = vpop.f32.mrb[0].mxu0
        %v1463 = vadd.f32 %v1298, %v1462
        %1464 = vmatprep.mubr.f32.mxu0 0.0
        %v1465 = vand.u32 %v470, 4294901760
        %v1466 = vsub.f32 %v470, %v1465
        %v1467 = vand.u32 %v1466, 4294901760
        %1468 = vmatmul.mubr.f32.gmra.mrb[0].mxu0 %v1467
        %v1469 = vpop.f32.mrb[0].mxu0
        %v1470 = vadd.f32 %v1304, %v1469
        %v1471 = vpop.f32.mrb[0].mxu0
        %v1472 = vadd.f32 %v1306, %v1471
        %1473 = vmatprep.mubr.f32.mxu0 0.0
        %v1474 = vand.u32 %v473, 4294901760
        %v1475 = vsub.f32 %v473, %v1474
        %v1476 = vand.u32 %v1475, 4294901760
        %1477 = vmatmul.mubr.f32.gmra.mrb[0].mxu0 %v1476
        %v1478 = vpop.f32.mrb[0].mxu0
        %v1479 = vadd.f32 %v1312, %v1478
        %v1480 = vpop.f32.mrb[0].mxu0
        %v1481 = vadd.f32 %v1314, %v1480
        %1482 = vmatprep.mubr.f32.mxu0 0.0
        %v1483 = vand.u32 %v476, 4294901760
        %v1484 = vsub.f32 %v476, %v1483
        %v1485 = vand.u32 %v1484, 4294901760
        %1486 = vmatmul.mubr.f32.gmra.mrb[0].mxu0 %v1485
        %v1487 = vpop.f32.mrb[0].mxu0
        %v1488 = vadd.f32 %v1320, %v1487
        %v1489 = vpop.f32.mrb[0].mxu0
        %v1490 = vadd.f32 %v1322, %v1489
        %1491 = vmatprep.mubr.f32.mxu0 0.0
        %v1492 = vand.u32 %v479, 4294901760
        %v1493 = vsub.f32 %v479, %v1492
        %v1494 = vand.u32 %v1493, 4294901760
        %1495 = vmatmul.mubr.f32.gmra.mrb[0].mxu0 %v1494
        %v1496 = vpop.f32.mrb[0].mxu0
        %v1497 = vadd.f32 %v1328, %v1496
        %v1498 = vpop.f32.mrb[0].mxu0
        %v1499 = vadd.f32 %v1330, %v1498
        %1500 = vdwg.mxu0
        %1501 = vmatprep.subr.mxu0 0.0
        %v1502 = vand.u32 %v482, 4294901760
        %v1503 = vsub.f32 %v482, %v1502
        %v1504 = vand.u32 %v1503, 4294901760
        %1505 = vmatpush1.xpose.msra.mxu0 %v1504
        %1506 = vmatprep.subr.mxu0 0.0
        %v1507 = vand.u32 %v485, 4294901760
        %v1508 = vsub.f32 %v485, %v1507
        %v1509 = vand.u32 %v1508, 4294901760
        %1510 = vmatpush1.xpose.msra.mxu0 %v1509
        %1511 = vmatprep.subr.mxu0 0.0
        %v1512 = vand.u32 %v488, 4294901760
        %v1513 = vsub.f32 %v488, %v1512
        %v1514 = vand.u32 %v1513, 4294901760
        %1515 = vmatpush1.xpose.msra.mxu0 %v1514
        %1516 = vmatprep.subr.mxu0 0.0
        %v1517 = vand.u32 %v491, 4294901760
        %v1518 = vsub.f32 %v491, %v1517
        %v1519 = vand.u32 %v1518, 4294901760
        %1520 = vmatpush1.xpose.msra.mxu0 %v1519
        %1521 = vmatprep.subr.mxu0 0.0
        %v1522 = vand.u32 %v494, 4294901760
        %v1523 = vsub.f32 %v494, %v1522
        %v1524 = vand.u32 %v1523, 4294901760
        %1525 = vmatpush1.xpose.msra.mxu0 %v1524
        %1526 = vmatprep.subr.mxu0 0.0
        %v1527 = vand.u32 %v497, 4294901760
        %v1528 = vsub.f32 %v497, %v1527
        %v1529 = vand.u32 %v1528, 4294901760
        %1530 = vmatpush1.xpose.msra.mxu0 %v1529
        %1531 = vmatprep.subr.mxu0 0.0
        %v1532 = vand.u32 %v500, 4294901760
        %v1533 = vsub.f32 %v500, %v1532
        %v1534 = vand.u32 %v1533, 4294901760
        %1535 = vmatpush1.xpose.msra.mxu0 %v1534
        %1536 = vmatprep.subr.mxu0 0.0
        %v1537 = vand.u32 %v503, 4294901760
        %v1538 = vsub.f32 %v503, %v1537
        %v1539 = vand.u32 %v1538, 4294901760
        %1540 = vmatpush1.xpose.msra.mxu0 %v1539
        %1541 = vmatprep.subr.mxu0 0.0
        %v1542 = vand.u32 %v506, 4294901760
        %v1543 = vsub.f32 %v506, %v1542
        %v1544 = vand.u32 %v1543, 4294901760
        %1545 = vmatpush1.xpose.msra.mxu0 %v1544
        %1546 = vmatprep.subr.mxu0 0.0
        %v1547 = vand.u32 %v509, 4294901760
        %v1548 = vsub.f32 %v509, %v1547
        %v1549 = vand.u32 %v1548, 4294901760
        %1550 = vmatpush1.xpose.msra.mxu0 %v1549
        %1551 = vmatprep.subr.mxu0 0.0
        %v1552 = vand.u32 %v512, 4294901760
        %v1553 = vsub.f32 %v512, %v1552
        %v1554 = vand.u32 %v1553, 4294901760
        %1555 = vmatpush1.xpose.msra.mxu0 %v1554
        %1556 = vmatprep.subr.mxu0 0.0
        %v1557 = vand.u32 %v515, 4294901760
        %v1558 = vsub.f32 %v515, %v1557
        %v1559 = vand.u32 %v1558, 4294901760
        %1560 = vmatpush1.xpose.msra.mxu0 %v1559
        %1561 = vmatprep.subr.mxu0 0.0
        %v1562 = vand.u32 %v518, 4294901760
        %v1563 = vsub.f32 %v518, %v1562
        %v1564 = vand.u32 %v1563, 4294901760
        %1565 = vmatpush1.xpose.msra.mxu0 %v1564
        %1566 = vmatprep.subr.mxu0 0.0
        %v1567 = vand.u32 %v521, 4294901760
        %v1568 = vsub.f32 %v521, %v1567
        %v1569 = vand.u32 %v1568, 4294901760
        %1570 = vmatpush1.xpose.msra.mxu0 %v1569
        %1571 = vmatprep.subr.mxu0 0.0
        %v1572 = vand.u32 %v524, 4294901760
        %v1573 = vsub.f32 %v524, %v1572
        %v1574 = vand.u32 %v1573, 4294901760
        %1575 = vmatpush1.xpose.msra.mxu0 %v1574
        %1576 = vmatprep.subr.mxu0 0.0
        %v1577 = vand.u32 %v527, 4294901760
        %v1578 = vsub.f32 %v527, %v1577
        %v1579 = vand.u32 %v1578, 4294901760
        %1580 = vmatpush1.xpose.msra.mxu0 %v1579
        %1581 = vmatprep.subr.mxu0 0.0
        %v1582 = vand.u32 %v530, 4294901760
        %v1583 = vsub.f32 %v530, %v1582
        %v1584 = vand.u32 %v1583, 4294901760
        %1585 = vmatpush1.xpose.msra.mxu0 %v1584
        %1586 = vmatprep.subr.mxu0 0.0
        %v1587 = vand.u32 %v533, 4294901760
        %v1588 = vsub.f32 %v533, %v1587
        %v1589 = vand.u32 %v1588, 4294901760
        %1590 = vmatpush1.xpose.msra.mxu0 %v1589
        %1591 = vmatprep.subr.mxu0 0.0
        %v1592 = vand.u32 %v536, 4294901760
        %v1593 = vsub.f32 %v536, %v1592
        %v1594 = vand.u32 %v1593, 4294901760
        %1595 = vmatpush1.xpose.msra.mxu0 %v1594
        %1596 = vmatprep.subr.mxu0 0.0
        %v1597 = vand.u32 %v539, 4294901760
        %v1598 = vsub.f32 %v539, %v1597
        %v1599 = vand.u32 %v1598, 4294901760
        %1600 = vmatpush1.xpose.msra.mxu0 %v1599
        %1601 = vmatprep.subr.mxu0 0.0
        %v1602 = vand.u32 %v542, 4294901760
        %v1603 = vsub.f32 %v542, %v1602
        %v1604 = vand.u32 %v1603, 4294901760
        %1605 = vmatpush1.xpose.msra.mxu0 %v1604
        %1606 = vmatprep.subr.mxu0 0.0
        %v1607 = vand.u32 %v545, 4294901760
        %v1608 = vsub.f32 %v545, %v1607
        %v1609 = vand.u32 %v1608, 4294901760
        %1610 = vmatpush1.xpose.msra.mxu0 %v1609
        %1611 = vmatprep.subr.mxu0 0.0
        %v1612 = vand.u32 %v548, 4294901760
        %v1613 = vsub.f32 %v548, %v1612
        %v1614 = vand.u32 %v1613, 4294901760
        %1615 = vmatpush1.xpose.msra.mxu0 %v1614
        %1616 = vmatprep.subr.mxu0 0.0
        %v1617 = vand.u32 %v551, 4294901760
        %v1618 = vsub.f32 %v551, %v1617
        %v1619 = vand.u32 %v1618, 4294901760
        %1620 = vmatpush1.xpose.msra.mxu0 %v1619
        %1621 = vmatprep.subr.mxu0 0.0
        %v1622 = vand.u32 %v554, 4294901760
        %v1623 = vsub.f32 %v554, %v1622
        %v1624 = vand.u32 %v1623, 4294901760
        %1625 = vmatpush1.xpose.msra.mxu0 %v1624
        %1626 = vmatprep.subr.mxu0 0.0
        %v1627 = vand.u32 %v557, 4294901760
        %v1628 = vsub.f32 %v557, %v1627
        %v1629 = vand.u32 %v1628, 4294901760
        %1630 = vmatpush1.xpose.msra.mxu0 %v1629
        %1631 = vmatprep.subr.mxu0 0.0
        %v1632 = vand.u32 %v560, 4294901760
        %v1633 = vsub.f32 %v560, %v1632
        %v1634 = vand.u32 %v1633, 4294901760
        %1635 = vmatpush1.xpose.msra.mxu0 %v1634
        %1636 = vmatprep.subr.mxu0 0.0
        %v1637 = vand.u32 %v563, 4294901760
        %v1638 = vsub.f32 %v563, %v1637
        %v1639 = vand.u32 %v1638, 4294901760
        %1640 = vmatpush1.xpose.msra.mxu0 %v1639
        %1641 = vmatprep.subr.mxu0 0.0
        %v1642 = vand.u32 %v566, 4294901760
        %v1643 = vsub.f32 %v566, %v1642
        %v1644 = vand.u32 %v1643, 4294901760
        %1645 = vmatpush1.xpose.msra.mxu0 %v1644
        %1646 = vmatprep.subr.mxu0 0.0
        %v1647 = vand.u32 %v569, 4294901760
        %v1648 = vsub.f32 %v569, %v1647
        %v1649 = vand.u32 %v1648, 4294901760
        %1650 = vmatpush1.xpose.msra.mxu0 %v1649
        %1651 = vmatprep.subr.mxu0 0.0
        %v1652 = vand.u32 %v572, 4294901760
        %v1653 = vsub.f32 %v572, %v1652
        %v1654 = vand.u32 %v1653, 4294901760
        %1655 = vmatpush1.xpose.msra.mxu0 %v1654
        %1656 = vmatprep.subr.mxu0 0.0
        %v1657 = vand.u32 %v575, 4294901760
        %v1658 = vsub.f32 %v575, %v1657
        %v1659 = vand.u32 %v1658, 4294901760
        %1660 = vmatpush1.xpose.msra.mxu0 %v1659
        %1661 = vmatprep.mubr.f32.mxu0 0.0
        %v1662 = vand.u32 %v458, 4294901760
        %1663 = vmatmul.mubr.f32.gmra.mrb[0].mxu0 %v1662
        %v1664 = vpop.f32.mrb[0].mxu0
        %v1665 = vadd.f32 %v1434, %v1664
        %v1666 = vpop.f32.mrb[0].mxu0
        %v1667 = vadd.f32 %v1436, %v1666
        %1668 = vmatprep.mubr.f32.mxu0 0.0
        %v1669 = vand.u32 %v461, 4294901760
        %1670 = vmatmul.mubr.f32.gmra.mrb[0].mxu0 %v1669
        %v1671 = vpop.f32.mrb[0].mxu0
        %v1672 = vadd.f32 %v1443, %v1671
        %v1673 = vpop.f32.mrb[0].mxu0
        %v1674 = vadd.f32 %v1445, %v1673
        %1675 = vmatprep.mubr.f32.mxu0 0.0
        %v1676 = vand.u32 %v464, 4294901760
        %1677 = vmatmul.mubr.f32.gmra.mrb[0].mxu0 %v1676
        %v1678 = vpop.f32.mrb[0].mxu0
        %v1679 = vadd.f32 %v1452, %v1678
        %v1680 = vpop.f32.mrb[0].mxu0
        %v1681 = vadd.f32 %v1454, %v1680
        %1682 = vmatprep.mubr.f32.mxu0 0.0
        %v1683 = vand.u32 %v467, 4294901760
        %1684 = vmatmul.mubr.f32.gmra.mrb[0].mxu0 %v1683
        %v1685 = vpop.f32.mrb[0].mxu0
        %v1686 = vadd.f32 %v1461, %v1685
        %v1687 = vpop.f32.mrb[0].mxu0
        %v1688 = vadd.f32 %v1463, %v1687
        %1689 = vmatprep.mubr.f32.mxu0 0.0
        %v1690 = vand.u32 %v470, 4294901760
        %1691 = vmatmul.mubr.f32.gmra.mrb[0].mxu0 %v1690
        %v1692 = vpop.f32.mrb[0].mxu0
        %v1693 = vadd.f32 %v1470, %v1692
        %v1694 = vpop.f32.mrb[0].mxu0
        %v1695 = vadd.f32 %v1472, %v1694
        %1696 = vmatprep.mubr.f32.mxu0 0.0
        %v1697 = vand.u32 %v473, 4294901760
        %1698 = vmatmul.mubr.f32.gmra.mrb[0].mxu0 %v1697
        %v1699 = vpop.f32.mrb[0].mxu0
        %v1700 = vadd.f32 %v1479, %v1699
        %v1701 = vpop.f32.mrb[0].mxu0
        %v1702 = vadd.f32 %v1481, %v1701
        %1703 = vmatprep.mubr.f32.mxu0 0.0
        %v1704 = vand.u32 %v476, 4294901760
        %1705 = vmatmul.mubr.f32.gmra.mrb[0].mxu0 %v1704
        %v1706 = vpop.f32.mrb[0].mxu0
        %v1707 = vadd.f32 %v1488, %v1706
        %v1708 = vpop.f32.mrb[0].mxu0
        %v1709 = vadd.f32 %v1490, %v1708
        %1710 = vmatprep.mubr.f32.mxu0 0.0
        %v1711 = vand.u32 %v479, 4294901760
        %1712 = vmatmul.mubr.f32.gmra.mrb[0].mxu0 %v1711
        %v1713 = vpop.f32.mrb[0].mxu0
        %v1714 = vadd.f32 %v1497, %v1713
        %v1715 = vpop.f32.mrb[0].mxu0
        %v1716 = vadd.f32 %v1499, %v1715
        %1717 = vdwg.mxu0
        %1718 = vmatprep.subr.mxu0 0.0
        %v1719 = vand.u32 %v482, 4294901760
        %1720 = vmatpush1.xpose.msra.mxu0 %v1719
        %1721 = vmatprep.subr.mxu0 0.0
        %v1722 = vand.u32 %v485, 4294901760
        %1723 = vmatpush1.xpose.msra.mxu0 %v1722
        %1724 = vmatprep.subr.mxu0 0.0
        %v1725 = vand.u32 %v488, 4294901760
        %1726 = vmatpush1.xpose.msra.mxu0 %v1725
        %1727 = vmatprep.subr.mxu0 0.0
        %v1728 = vand.u32 %v491, 4294901760
        %1729 = vmatpush1.xpose.msra.mxu0 %v1728
        %1730 = vmatprep.subr.mxu0 0.0
        %v1731 = vand.u32 %v494, 4294901760
        %1732 = vmatpush1.xpose.msra.mxu0 %v1731
        %1733 = vmatprep.subr.mxu0 0.0
        %v1734 = vand.u32 %v497, 4294901760
        %1735 = vmatpush1.xpose.msra.mxu0 %v1734
        %1736 = vmatprep.subr.mxu0 0.0
        %v1737 = vand.u32 %v500, 4294901760
        %1738 = vmatpush1.xpose.msra.mxu0 %v1737
        %1739 = vmatprep.subr.mxu0 0.0
        %v1740 = vand.u32 %v503, 4294901760
        %1741 = vmatpush1.xpose.msra.mxu0 %v1740
        %1742 = vmatprep.subr.mxu0 0.0
        %v1743 = vand.u32 %v506, 4294901760
        %1744 = vmatpush1.xpose.msra.mxu0 %v1743
        %1745 = vmatprep.subr.mxu0 0.0
        %v1746 = vand.u32 %v509, 4294901760
        %1747 = vmatpush1.xpose.msra.mxu0 %v1746
        %1748 = vmatprep.subr.mxu0 0.0
        %v1749 = vand.u32 %v512, 4294901760
        %1750 = vmatpush1.xpose.msra.mxu0 %v1749
        %1751 = vmatprep.subr.mxu0 0.0
        %v1752 = vand.u32 %v515, 4294901760
        %1753 = vmatpush1.xpose.msra.mxu0 %v1752
        %1754 = vmatprep.subr.mxu0 0.0
        %v1755 = vand.u32 %v518, 4294901760
        %1756 = vmatpush1.xpose.msra.mxu0 %v1755
        %1757 = vmatprep.subr.mxu0 0.0
        %v1758 = vand.u32 %v521, 4294901760
        %1759 = vmatpush1.xpose.msra.mxu0 %v1758
        %1760 = vmatprep.subr.mxu0 0.0
        %v1761 = vand.u32 %v524, 4294901760
        %1762 = vmatpush1.xpose.msra.mxu0 %v1761
        %1763 = vmatprep.subr.mxu0 0.0
        %v1764 = vand.u32 %v527, 4294901760
        %1765 = vmatpush1.xpose.msra.mxu0 %v1764
        %1766 = vmatprep.subr.mxu0 0.0
        %v1767 = vand.u32 %v530, 4294901760
        %1768 = vmatpush1.xpose.msra.mxu0 %v1767
        %1769 = vmatprep.subr.mxu0 0.0
        %v1770 = vand.u32 %v533, 4294901760
        %1771 = vmatpush1.xpose.msra.mxu0 %v1770
        %1772 = vmatprep.subr.mxu0 0.0
        %v1773 = vand.u32 %v536, 4294901760
        %1774 = vmatpush1.xpose.msra.mxu0 %v1773
        %1775 = vmatprep.subr.mxu0 0.0
        %v1776 = vand.u32 %v539, 4294901760
        %1777 = vmatpush1.xpose.msra.mxu0 %v1776
        %1778 = vmatprep.subr.mxu0 0.0
        %v1779 = vand.u32 %v542, 4294901760
        %1780 = vmatpush1.xpose.msra.mxu0 %v1779
        %1781 = vmatprep.subr.mxu0 0.0
        %v1782 = vand.u32 %v545, 4294901760
        %1783 = vmatpush1.xpose.msra.mxu0 %v1782
        %1784 = vmatprep.subr.mxu0 0.0
        %v1785 = vand.u32 %v548, 4294901760
        %1786 = vmatpush1.xpose.msra.mxu0 %v1785
        %1787 = vmatprep.subr.mxu0 0.0
        %v1788 = vand.u32 %v551, 4294901760
        %1789 = vmatpush1.xpose.msra.mxu0 %v1788
        %1790 = vmatprep.subr.mxu0 0.0
        %v1791 = vand.u32 %v554, 4294901760
        %1792 = vmatpush1.xpose.msra.mxu0 %v1791
        %1793 = vmatprep.subr.mxu0 0.0
        %v1794 = vand.u32 %v557, 4294901760
        %1795 = vmatpush1.xpose.msra.mxu0 %v1794
        %1796 = vmatprep.subr.mxu0 0.0
        %v1797 = vand.u32 %v560, 4294901760
        %1798 = vmatpush1.xpose.msra.mxu0 %v1797
        %1799 = vmatprep.subr.mxu0 0.0
        %v1800 = vand.u32 %v563, 4294901760
        %1801 = vmatpush1.xpose.msra.mxu0 %v1800
        %1802 = vmatprep.subr.mxu0 0.0
        %v1803 = vand.u32 %v566, 4294901760
        %1804 = vmatpush1.xpose.msra.mxu0 %v1803
        %1805 = vmatprep.subr.mxu0 0.0
        %v1806 = vand.u32 %v569, 4294901760
        %1807 = vmatpush1.xpose.msra.mxu0 %v1806
        %1808 = vmatprep.subr.mxu0 0.0
        %v1809 = vand.u32 %v572, 4294901760
        %1810 = vmatpush1.xpose.msra.mxu0 %v1809
        %1811 = vmatprep.subr.mxu0 0.0
        %v1812 = vand.u32 %v575, 4294901760
        %1813 = vmatpush1.xpose.msra.mxu0 %v1812
        %1814 = vmatprep.mubr.f32.mxu0 0.0
        %v1815 = vand.u32 %v458, 4294901760
        %1816 = vmatmul.mubr.f32.gmra.mrb[0].mxu0 %v1815
        %v1817 = vpop.f32.mrb[0].mxu0
        %v1818 = vadd.f32 %v1665, %v1817
        %v1819 = vpop.f32.mrb[0].mxu0
        %v1820 = vadd.f32 %v1667, %v1819
        %1821 = vmatprep.mubr.f32.mxu0 0.0
        %v1822 = vand.u32 %v461, 4294901760
        %1823 = vmatmul.mubr.f32.gmra.mrb[0].mxu0 %v1822
        %v1824 = vpop.f32.mrb[0].mxu0
        %v1825 = vadd.f32 %v1672, %v1824
        %v1826 = vpop.f32.mrb[0].mxu0
        %v1827 = vadd.f32 %v1674, %v1826
        %1828 = vmatprep.mubr.f32.mxu0 0.0
        %v1829 = vand.u32 %v464, 4294901760
        %1830 = vmatmul.mubr.f32.gmra.mrb[0].mxu0 %v1829
        %v1831 = vpop.f32.mrb[0].mxu0
        %v1832 = vadd.f32 %v1679, %v1831
        %v1833 = vpop.f32.mrb[0].mxu0
        %v1834 = vadd.f32 %v1681, %v1833
        %1835 = vmatprep.mubr.f32.mxu0 0.0
        %v1836 = vand.u32 %v467, 4294901760
        %1837 = vmatmul.mubr.f32.gmra.mrb[0].mxu0 %v1836
        %v1838 = vpop.f32.mrb[0].mxu0
        %v1839 = vadd.f32 %v1686, %v1838
        %v1840 = vpop.f32.mrb[0].mxu0
        %v1841 = vadd.f32 %v1688, %v1840
        %1842 = vmatprep.mubr.f32.mxu0 0.0
        %v1843 = vand.u32 %v470, 4294901760
        %1844 = vmatmul.mubr.f32.gmra.mrb[0].mxu0 %v1843
        %v1845 = vpop.f32.mrb[0].mxu0
        %v1846 = vadd.f32 %v1693, %v1845
        %v1847 = vpop.f32.mrb[0].mxu0
        %v1848 = vadd.f32 %v1695, %v1847
        %1849 = vmatprep.mubr.f32.mxu0 0.0
        %v1850 = vand.u32 %v473, 4294901760
        %1851 = vmatmul.mubr.f32.gmra.mrb[0].mxu0 %v1850
        %v1852 = vpop.f32.mrb[0].mxu0
        %v1853 = vadd.f32 %v1700, %v1852
        %v1854 = vpop.f32.mrb[0].mxu0
        %v1855 = vadd.f32 %v1702, %v1854
        %1856 = vmatprep.mubr.f32.mxu0 0.0
        %v1857 = vand.u32 %v476, 4294901760
        %1858 = vmatmul.mubr.f32.gmra.mrb[0].mxu0 %v1857
        %v1859 = vpop.f32.mrb[0].mxu0
        %v1860 = vadd.f32 %v1707, %v1859
        %v1861 = vpop.f32.mrb[0].mxu0
        %v1862 = vadd.f32 %v1709, %v1861
        %1863 = vmatprep.mubr.f32.mxu0 0.0
        %v1864 = vand.u32 %v479, 4294901760
        %1865 = vmatmul.mubr.f32.gmra.mrb[0].mxu0 %v1864
        %v1866 = vpop.f32.mrb[0].mxu0
        %v1867 = vadd.f32 %v1714, %v1866
        %v1868 = vpop.f32.mrb[0].mxu0
        %v1869 = vadd.f32 %v1716, %v1868
        %1870 = vdwg.mxu0
        %1871 = vmatprep.subr.mxu0 0.0
        %v1872 = vand.u32 %v578, 4294901760
        %1873 = vmatpush1.xpose.msra.mxu0 %v1872
        %1874 = vmatprep.subr.mxu0 0.0
        %v1875 = vand.u32 %v581, 4294901760
        %1876 = vmatpush1.xpose.msra.mxu0 %v1875
        %1877 = vmatprep.subr.mxu0 0.0
        %v1878 = vand.u32 %v584, 4294901760
        %1879 = vmatpush1.xpose.msra.mxu0 %v1878
        %1880 = vmatprep.subr.mxu0 0.0
        %v1881 = vand.u32 %v587, 4294901760
        %1882 = vmatpush1.xpose.msra.mxu0 %v1881
        %1883 = vmatprep.subr.mxu0 0.0
        %v1884 = vand.u32 %v590, 4294901760
        %1885 = vmatpush1.xpose.msra.mxu0 %v1884
        %1886 = vmatprep.subr.mxu0 0.0
        %v1887 = vand.u32 %v593, 4294901760
        %1888 = vmatpush1.xpose.msra.mxu0 %v1887
        %1889 = vmatprep.subr.mxu0 0.0
        %v1890 = vand.u32 %v596, 4294901760
        %1891 = vmatpush1.xpose.msra.mxu0 %v1890
        %1892 = vmatprep.subr.mxu0 0.0
        %v1893 = vand.u32 %v599, 4294901760
        %1894 = vmatpush1.xpose.msra.mxu0 %v1893
        %1895 = vmatprep.subr.mxu0 0.0
        %v1896 = vand.u32 %v602, 4294901760
        %1897 = vmatpush1.xpose.msra.mxu0 %v1896
        %1898 = vmatprep.subr.mxu0 0.0
        %v1899 = vand.u32 %v605, 4294901760
        %1900 = vmatpush1.xpose.msra.mxu0 %v1899
        %1901 = vmatprep.subr.mxu0 0.0
        %v1902 = vand.u32 %v608, 4294901760
        %1903 = vmatpush1.xpose.msra.mxu0 %v1902
        %1904 = vmatprep.subr.mxu0 0.0
        %v1905 = vand.u32 %v611, 4294901760
        %1906 = vmatpush1.xpose.msra.mxu0 %v1905
        %1907 = vmatprep.subr.mxu0 0.0
        %v1908 = vand.u32 %v614, 4294901760
        %1909 = vmatpush1.xpose.msra.mxu0 %v1908
        %1910 = vmatprep.subr.mxu0 0.0
        %v1911 = vand.u32 %v617, 4294901760
        %1912 = vmatpush1.xpose.msra.mxu0 %v1911
        %1913 = vmatprep.subr.mxu0 0.0
        %v1914 = vand.u32 %v620, 4294901760
        %1915 = vmatpush1.xpose.msra.mxu0 %v1914
        %1916 = vmatprep.subr.mxu0 0.0
        %v1917 = vand.u32 %v623, 4294901760
        %1918 = vmatpush1.xpose.msra.mxu0 %v1917
        %1919 = vmatprep.subr.mxu0 0.0
        %v1920 = vand.u32 %v626, 4294901760
        %1921 = vmatpush1.xpose.msra.mxu0 %v1920
        %1922 = vmatprep.subr.mxu0 0.0
        %v1923 = vand.u32 %v629, 4294901760
        %1924 = vmatpush1.xpose.msra.mxu0 %v1923
        %1925 = vmatprep.subr.mxu0 0.0
        %v1926 = vand.u32 %v632, 4294901760
        %1927 = vmatpush1.xpose.msra.mxu0 %v1926
        %1928 = vmatprep.subr.mxu0 0.0
        %v1929 = vand.u32 %v635, 4294901760
        %1930 = vmatpush1.xpose.msra.mxu0 %v1929
        %1931 = vmatprep.subr.mxu0 0.0
        %v1932 = vand.u32 %v638, 4294901760
        %1933 = vmatpush1.xpose.msra.mxu0 %v1932
        %1934 = vmatprep.subr.mxu0 0.0
        %v1935 = vand.u32 %v641, 4294901760
        %1936 = vmatpush1.xpose.msra.mxu0 %v1935
        %1937 = vmatprep.subr.mxu0 0.0
        %v1938 = vand.u32 %v644, 4294901760
        %1939 = vmatpush1.xpose.msra.mxu0 %v1938
        %1940 = vmatprep.subr.mxu0 0.0
        %v1941 = vand.u32 %v647, 4294901760
        %1942 = vmatpush1.xpose.msra.mxu0 %v1941
        %1943 = vmatprep.subr.mxu0 0.0
        %v1944 = vand.u32 %v650, 4294901760
        %1945 = vmatpush1.xpose.msra.mxu0 %v1944
        %1946 = vmatprep.subr.mxu0 0.0
        %v1947 = vand.u32 %v653, 4294901760
        %1948 = vmatpush1.xpose.msra.mxu0 %v1947
        %1949 = vmatprep.subr.mxu0 0.0
        %v1950 = vand.u32 %v656, 4294901760
        %1951 = vmatpush1.xpose.msra.mxu0 %v1950
        %1952 = vmatprep.subr.mxu0 0.0
        %v1953 = vand.u32 %v659, 4294901760
        %1954 = vmatpush1.xpose.msra.mxu0 %v1953
        %1955 = vmatprep.subr.mxu0 0.0
        %v1956 = vand.u32 %v662, 4294901760
        %1957 = vmatpush1.xpose.msra.mxu0 %v1956
        %1958 = vmatprep.subr.mxu0 0.0
        %v1959 = vand.u32 %v665, 4294901760
        %1960 = vmatpush1.xpose.msra.mxu0 %v1959
        %1961 = vmatprep.subr.mxu0 0.0
        %v1962 = vand.u32 %v668, 4294901760
        %1963 = vmatpush1.xpose.msra.mxu0 %v1962
        %1964 = vmatprep.subr.mxu0 0.0
        %v1965 = vand.u32 %v671, 4294901760
        %1966 = vmatpush1.xpose.msra.mxu0 %v1965
        %1967 = vmatprep.mubr.f32.mxu0 0.0
        %v1968 = vand.u32 %v458, 4294901760
        %v1969 = vsub.f32 %v458, %v1968
        %v1970 = vand.u32 %v1969, 4294901760
        %v1971 = vsub.f32 %v1969, %v1970
        %v1972 = vand.u32 %v1971, 4294901760
        %1973 = vmatmul.mubr.f32.gmra.mrb[0].mxu0 %v1972
        %v1974 = vpop.f32.mrb[0].mxu0
        %v1975 = vadd.f32 %v419, %v1974
        %v1976 = vpop.f32.mrb[0].mxu0
        %v1977 = vadd.f32 %v419, %v1976
        %1978 = vmatprep.mubr.f32.mxu0 0.0
        %v1979 = vand.u32 %v461, 4294901760
        %v1980 = vsub.f32 %v461, %v1979
        %v1981 = vand.u32 %v1980, 4294901760
        %v1982 = vsub.f32 %v1980, %v1981
        %v1983 = vand.u32 %v1982, 4294901760
        %1984 = vmatmul.mubr.f32.gmra.mrb[0].mxu0 %v1983
        %v1985 = vpop.f32.mrb[0].mxu0
        %v1986 = vadd.f32 %v424, %v1985
        %v1987 = vpop.f32.mrb[0].mxu0
        %v1988 = vadd.f32 %v424, %v1987
        %1989 = vmatprep.mubr.f32.mxu0 0.0
        %v1990 = vand.u32 %v464, 4294901760
        %v1991 = vsub.f32 %v464, %v1990
        %v1992 = vand.u32 %v1991, 4294901760
        %v1993 = vsub.f32 %v1991, %v1992
        %v1994 = vand.u32 %v1993, 4294901760
        %1995 = vmatmul.mubr.f32.gmra.mrb[0].mxu0 %v1994
        %v1996 = vpop.f32.mrb[0].mxu0
        %v1997 = vadd.f32 %v429, %v1996
        %v1998 = vpop.f32.mrb[0].mxu0
        %v1999 = vadd.f32 %v429, %v1998
        %2000 = vmatprep.mubr.f32.mxu0 0.0
        %v2001 = vand.u32 %v467, 4294901760
        %v2002 = vsub.f32 %v467, %v2001
        %v2003 = vand.u32 %v2002, 4294901760
        %v2004 = vsub.f32 %v2002, %v2003
        %v2005 = vand.u32 %v2004, 4294901760
        %2006 = vmatmul.mubr.f32.gmra.mrb[0].mxu0 %v2005
        %v2007 = vpop.f32.mrb[0].mxu0
        %v2008 = vadd.f32 %v434, %v2007
        %v2009 = vpop.f32.mrb[0].mxu0
        %v2010 = vadd.f32 %v434, %v2009
        %2011 = vmatprep.mubr.f32.mxu0 0.0
        %v2012 = vand.u32 %v470, 4294901760
        %v2013 = vsub.f32 %v470, %v2012
        %v2014 = vand.u32 %v2013, 4294901760
        %v2015 = vsub.f32 %v2013, %v2014
        %v2016 = vand.u32 %v2015, 4294901760
        %2017 = vmatmul.mubr.f32.gmra.mrb[0].mxu0 %v2016
        %v2018 = vpop.f32.mrb[0].mxu0
        %v2019 = vadd.f32 %v439, %v2018
        %v2020 = vpop.f32.mrb[0].mxu0
        %v2021 = vadd.f32 %v439, %v2020
        %2022 = vmatprep.mubr.f32.mxu0 0.0
        %v2023 = vand.u32 %v473, 4294901760
        %v2024 = vsub.f32 %v473, %v2023
        %v2025 = vand.u32 %v2024, 4294901760
        %v2026 = vsub.f32 %v2024, %v2025
        %v2027 = vand.u32 %v2026, 4294901760
        %2028 = vmatmul.mubr.f32.gmra.mrb[0].mxu0 %v2027
        %v2029 = vpop.f32.mrb[0].mxu0
        %v2030 = vadd.f32 %v444, %v2029
        %v2031 = vpop.f32.mrb[0].mxu0
        %v2032 = vadd.f32 %v444, %v2031
        %2033 = vmatprep.mubr.f32.mxu0 0.0
        %v2034 = vand.u32 %v476, 4294901760
        %v2035 = vsub.f32 %v476, %v2034
        %v2036 = vand.u32 %v2035, 4294901760
        %v2037 = vsub.f32 %v2035, %v2036
        %v2038 = vand.u32 %v2037, 4294901760
        %2039 = vmatmul.mubr.f32.gmra.mrb[0].mxu0 %v2038
        %v2040 = vpop.f32.mrb[0].mxu0
        %v2041 = vadd.f32 %v449, %v2040
        %v2042 = vpop.f32.mrb[0].mxu0
        %v2043 = vadd.f32 %v449, %v2042
        %2044 = vmatprep.mubr.f32.mxu0 0.0
        %v2045 = vand.u32 %v479, 4294901760
        %v2046 = vsub.f32 %v479, %v2045
        %v2047 = vand.u32 %v2046, 4294901760
        %v2048 = vsub.f32 %v2046, %v2047
        %v2049 = vand.u32 %v2048, 4294901760
        %2050 = vmatmul.mubr.f32.gmra.mrb[0].mxu0 %v2049
        %v2051 = vpop.f32.mrb[0].mxu0
        %v2052 = vadd.f32 %v454, %v2051
        %v2053 = vpop.f32.mrb[0].mxu0
        %v2054 = vadd.f32 %v454, %v2053
        %2055 = vdwg.mxu0
        %2056 = vmatprep.subr.mxu0 0.0
        %v2057 = vand.u32 %v578, 4294901760
        %v2058 = vsub.f32 %v578, %v2057
        %v2059 = vand.u32 %v2058, 4294901760
        %v2060 = vsub.f32 %v2058, %v2059
        %v2061 = vand.u32 %v2060, 4294901760
        %2062 = vmatpush1.xpose.msra.mxu0 %v2061
        %2063 = vmatprep.subr.mxu0 0.0
        %v2064 = vand.u32 %v581, 4294901760
        %v2065 = vsub.f32 %v581, %v2064
        %v2066 = vand.u32 %v2065, 4294901760
        %v2067 = vsub.f32 %v2065, %v2066
        %v2068 = vand.u32 %v2067, 4294901760
        %2069 = vmatpush1.xpose.msra.mxu0 %v2068
        %2070 = vmatprep.subr.mxu0 0.0
        %v2071 = vand.u32 %v584, 4294901760
        %v2072 = vsub.f32 %v584, %v2071
        %v2073 = vand.u32 %v2072, 4294901760
        %v2074 = vsub.f32 %v2072, %v2073
        %v2075 = vand.u32 %v2074, 4294901760
        %2076 = vmatpush1.xpose.msra.mxu0 %v2075
        %2077 = vmatprep.subr.mxu0 0.0
        %v2078 = vand.u32 %v587, 4294901760
        %v2079 = vsub.f32 %v587, %v2078
        %v2080 = vand.u32 %v2079, 4294901760
        %v2081 = vsub.f32 %v2079, %v2080
        %v2082 = vand.u32 %v2081, 4294901760
        %2083 = vmatpush1.xpose.msra.mxu0 %v2082
        %2084 = vmatprep.subr.mxu0 0.0
        %v2085 = vand.u32 %v590, 4294901760
        %v2086 = vsub.f32 %v590, %v2085
        %v2087 = vand.u32 %v2086, 4294901760
        %v2088 = vsub.f32 %v2086, %v2087
        %v2089 = vand.u32 %v2088, 4294901760
        %2090 = vmatpush1.xpose.msra.mxu0 %v2089
        %2091 = vmatprep.subr.mxu0 0.0
        %v2092 = vand.u32 %v593, 4294901760
        %v2093 = vsub.f32 %v593, %v2092
        %v2094 = vand.u32 %v2093, 4294901760
        %v2095 = vsub.f32 %v2093, %v2094
        %v2096 = vand.u32 %v2095, 4294901760
        %2097 = vmatpush1.xpose.msra.mxu0 %v2096
        %2098 = vmatprep.subr.mxu0 0.0
        %v2099 = vand.u32 %v596, 4294901760
        %v2100 = vsub.f32 %v596, %v2099
        %v2101 = vand.u32 %v2100, 4294901760
        %v2102 = vsub.f32 %v2100, %v2101
        %v2103 = vand.u32 %v2102, 4294901760
        %2104 = vmatpush1.xpose.msra.mxu0 %v2103
        %2105 = vmatprep.subr.mxu0 0.0
        %v2106 = vand.u32 %v599, 4294901760
        %v2107 = vsub.f32 %v599, %v2106
        %v2108 = vand.u32 %v2107, 4294901760
        %v2109 = vsub.f32 %v2107, %v2108
        %v2110 = vand.u32 %v2109, 4294901760
        %2111 = vmatpush1.xpose.msra.mxu0 %v2110
        %2112 = vmatprep.subr.mxu0 0.0
        %v2113 = vand.u32 %v602, 4294901760
        %v2114 = vsub.f32 %v602, %v2113
        %v2115 = vand.u32 %v2114, 4294901760
        %v2116 = vsub.f32 %v2114, %v2115
        %v2117 = vand.u32 %v2116, 4294901760
        %2118 = vmatpush1.xpose.msra.mxu0 %v2117
        %2119 = vmatprep.subr.mxu0 0.0
        %v2120 = vand.u32 %v605, 4294901760
        %v2121 = vsub.f32 %v605, %v2120
        %v2122 = vand.u32 %v2121, 4294901760
        %v2123 = vsub.f32 %v2121, %v2122
        %v2124 = vand.u32 %v2123, 4294901760
        %2125 = vmatpush1.xpose.msra.mxu0 %v2124
        %2126 = vmatprep.subr.mxu0 0.0
        %v2127 = vand.u32 %v608, 4294901760
        %v2128 = vsub.f32 %v608, %v2127
        %v2129 = vand.u32 %v2128, 4294901760
        %v2130 = vsub.f32 %v2128, %v2129
        %v2131 = vand.u32 %v2130, 4294901760
        %2132 = vmatpush1.xpose.msra.mxu0 %v2131
        %2133 = vmatprep.subr.mxu0 0.0
        %v2134 = vand.u32 %v611, 4294901760
        %v2135 = vsub.f32 %v611, %v2134
        %v2136 = vand.u32 %v2135, 4294901760
        %v2137 = vsub.f32 %v2135, %v2136
        %v2138 = vand.u32 %v2137, 4294901760
        %2139 = vmatpush1.xpose.msra.mxu0 %v2138
        %2140 = vmatprep.subr.mxu0 0.0
        %v2141 = vand.u32 %v614, 4294901760
        %v2142 = vsub.f32 %v614, %v2141
        %v2143 = vand.u32 %v2142, 4294901760
        %v2144 = vsub.f32 %v2142, %v2143
        %v2145 = vand.u32 %v2144, 4294901760
        %2146 = vmatpush1.xpose.msra.mxu0 %v2145
        %2147 = vmatprep.subr.mxu0 0.0
        %v2148 = vand.u32 %v617, 4294901760
        %v2149 = vsub.f32 %v617, %v2148
        %v2150 = vand.u32 %v2149, 4294901760
        %v2151 = vsub.f32 %v2149, %v2150
        %v2152 = vand.u32 %v2151, 4294901760
        %2153 = vmatpush1.xpose.msra.mxu0 %v2152
        %2154 = vmatprep.subr.mxu0 0.0
        %v2155 = vand.u32 %v620, 4294901760
        %v2156 = vsub.f32 %v620, %v2155
        %v2157 = vand.u32 %v2156, 4294901760
        %v2158 = vsub.f32 %v2156, %v2157
        %v2159 = vand.u32 %v2158, 4294901760
        %2160 = vmatpush1.xpose.msra.mxu0 %v2159
        %2161 = vmatprep.subr.mxu0 0.0
        %v2162 = vand.u32 %v623, 4294901760
        %v2163 = vsub.f32 %v623, %v2162
        %v2164 = vand.u32 %v2163, 4294901760
        %v2165 = vsub.f32 %v2163, %v2164
        %v2166 = vand.u32 %v2165, 4294901760
        %2167 = vmatpush1.xpose.msra.mxu0 %v2166
        %2168 = vmatprep.subr.mxu0 0.0
        %v2169 = vand.u32 %v626, 4294901760
        %v2170 = vsub.f32 %v626, %v2169
        %v2171 = vand.u32 %v2170, 4294901760
        %v2172 = vsub.f32 %v2170, %v2171
        %v2173 = vand.u32 %v2172, 4294901760
        %2174 = vmatpush1.xpose.msra.mxu0 %v2173
        %2175 = vmatprep.subr.mxu0 0.0
        %v2176 = vand.u32 %v629, 4294901760
        %v2177 = vsub.f32 %v629, %v2176
        %v2178 = vand.u32 %v2177, 4294901760
        %v2179 = vsub.f32 %v2177, %v2178
        %v2180 = vand.u32 %v2179, 4294901760
        %2181 = vmatpush1.xpose.msra.mxu0 %v2180
        %2182 = vmatprep.subr.mxu0 0.0
        %v2183 = vand.u32 %v632, 4294901760
        %v2184 = vsub.f32 %v632, %v2183
        %v2185 = vand.u32 %v2184, 4294901760
        %v2186 = vsub.f32 %v2184, %v2185
        %v2187 = vand.u32 %v2186, 4294901760
        %2188 = vmatpush1.xpose.msra.mxu0 %v2187
        %2189 = vmatprep.subr.mxu0 0.0
        %v2190 = vand.u32 %v635, 4294901760
        %v2191 = vsub.f32 %v635, %v2190
        %v2192 = vand.u32 %v2191, 4294901760
        %v2193 = vsub.f32 %v2191, %v2192
        %v2194 = vand.u32 %v2193, 4294901760
        %2195 = vmatpush1.xpose.msra.mxu0 %v2194
        %2196 = vmatprep.subr.mxu0 0.0
        %v2197 = vand.u32 %v638, 4294901760
        %v2198 = vsub.f32 %v638, %v2197
        %v2199 = vand.u32 %v2198, 4294901760
        %v2200 = vsub.f32 %v2198, %v2199
        %v2201 = vand.u32 %v2200, 4294901760
        %2202 = vmatpush1.xpose.msra.mxu0 %v2201
        %2203 = vmatprep.subr.mxu0 0.0
        %v2204 = vand.u32 %v641, 4294901760
        %v2205 = vsub.f32 %v641, %v2204
        %v2206 = vand.u32 %v2205, 4294901760
        %v2207 = vsub.f32 %v2205, %v2206
        %v2208 = vand.u32 %v2207, 4294901760
        %2209 = vmatpush1.xpose.msra.mxu0 %v2208
        %2210 = vmatprep.subr.mxu0 0.0
        %v2211 = vand.u32 %v644, 4294901760
        %v2212 = vsub.f32 %v644, %v2211
        %v2213 = vand.u32 %v2212, 4294901760
        %v2214 = vsub.f32 %v2212, %v2213
        %v2215 = vand.u32 %v2214, 4294901760
        %2216 = vmatpush1.xpose.msra.mxu0 %v2215
        %2217 = vmatprep.subr.mxu0 0.0
        %v2218 = vand.u32 %v647, 4294901760
        %v2219 = vsub.f32 %v647, %v2218
        %v2220 = vand.u32 %v2219, 4294901760
        %v2221 = vsub.f32 %v2219, %v2220
        %v2222 = vand.u32 %v2221, 4294901760
        %2223 = vmatpush1.xpose.msra.mxu0 %v2222
        %2224 = vmatprep.subr.mxu0 0.0
        %v2225 = vand.u32 %v650, 4294901760
        %v2226 = vsub.f32 %v650, %v2225
        %v2227 = vand.u32 %v2226, 4294901760
        %v2228 = vsub.f32 %v2226, %v2227
        %v2229 = vand.u32 %v2228, 4294901760
        %2230 = vmatpush1.xpose.msra.mxu0 %v2229
        %2231 = vmatprep.subr.mxu0 0.0
        %v2232 = vand.u32 %v653, 4294901760
        %v2233 = vsub.f32 %v653, %v2232
        %v2234 = vand.u32 %v2233, 4294901760
        %v2235 = vsub.f32 %v2233, %v2234
        %v2236 = vand.u32 %v2235, 4294901760
        %2237 = vmatpush1.xpose.msra.mxu0 %v2236
        %2238 = vmatprep.subr.mxu0 0.0
        %v2239 = vand.u32 %v656, 4294901760
        %v2240 = vsub.f32 %v656, %v2239
        %v2241 = vand.u32 %v2240, 4294901760
        %v2242 = vsub.f32 %v2240, %v2241
        %v2243 = vand.u32 %v2242, 4294901760
        %2244 = vmatpush1.xpose.msra.mxu0 %v2243
        %2245 = vmatprep.subr.mxu0 0.0
        %v2246 = vand.u32 %v659, 4294901760
        %v2247 = vsub.f32 %v659, %v2246
        %v2248 = vand.u32 %v2247, 4294901760
        %v2249 = vsub.f32 %v2247, %v2248
        %v2250 = vand.u32 %v2249, 4294901760
        %2251 = vmatpush1.xpose.msra.mxu0 %v2250
        %2252 = vmatprep.subr.mxu0 0.0
        %v2253 = vand.u32 %v662, 4294901760
        %v2254 = vsub.f32 %v662, %v2253
        %v2255 = vand.u32 %v2254, 4294901760
        %v2256 = vsub.f32 %v2254, %v2255
        %v2257 = vand.u32 %v2256, 4294901760
        %2258 = vmatpush1.xpose.msra.mxu0 %v2257
        %2259 = vmatprep.subr.mxu0 0.0
        %v2260 = vand.u32 %v665, 4294901760
        %v2261 = vsub.f32 %v665, %v2260
        %v2262 = vand.u32 %v2261, 4294901760
        %v2263 = vsub.f32 %v2261, %v2262
        %v2264 = vand.u32 %v2263, 4294901760
        %2265 = vmatpush1.xpose.msra.mxu0 %v2264
        %2266 = vmatprep.subr.mxu0 0.0
        %v2267 = vand.u32 %v668, 4294901760
        %v2268 = vsub.f32 %v668, %v2267
        %v2269 = vand.u32 %v2268, 4294901760
        %v2270 = vsub.f32 %v2268, %v2269
        %v2271 = vand.u32 %v2270, 4294901760
        %2272 = vmatpush1.xpose.msra.mxu0 %v2271
        %2273 = vmatprep.subr.mxu0 0.0
        %v2274 = vand.u32 %v671, 4294901760
        %v2275 = vsub.f32 %v671, %v2274
        %v2276 = vand.u32 %v2275, 4294901760
        %v2277 = vsub.f32 %v2275, %v2276
        %v2278 = vand.u32 %v2277, 4294901760
        %2279 = vmatpush1.xpose.msra.mxu0 %v2278
        %2280 = vmatprep.mubr.f32.mxu0 0.0
        %v2281 = vand.u32 %v458, 4294901760
        %2282 = vmatmul.mubr.f32.gmra.mrb[0].mxu0 %v2281
        %v2283 = vpop.f32.mrb[0].mxu0
        %v2284 = vadd.f32 %v1975, %v2283
        %v2285 = vpop.f32.mrb[0].mxu0
        %v2286 = vadd.f32 %v1977, %v2285
        %2287 = vmatprep.mubr.f32.mxu0 0.0
        %v2288 = vand.u32 %v461, 4294901760
        %2289 = vmatmul.mubr.f32.gmra.mrb[0].mxu0 %v2288
        %v2290 = vpop.f32.mrb[0].mxu0
        %v2291 = vadd.f32 %v1986, %v2290
        %v2292 = vpop.f32.mrb[0].mxu0
        %v2293 = vadd.f32 %v1988, %v2292
        %2294 = vmatprep.mubr.f32.mxu0 0.0
        %v2295 = vand.u32 %v464, 4294901760
        %2296 = vmatmul.mubr.f32.gmra.mrb[0].mxu0 %v2295
        %v2297 = vpop.f32.mrb[0].mxu0
        %v2298 = vadd.f32 %v1997, %v2297
        %v2299 = vpop.f32.mrb[0].mxu0
        %v2300 = vadd.f32 %v1999, %v2299
        %2301 = vmatprep.mubr.f32.mxu0 0.0
        %v2302 = vand.u32 %v467, 4294901760
        %2303 = vmatmul.mubr.f32.gmra.mrb[0].mxu0 %v2302
        %v2304 = vpop.f32.mrb[0].mxu0
        %v2305 = vadd.f32 %v2008, %v2304
        %v2306 = vpop.f32.mrb[0].mxu0
        %v2307 = vadd.f32 %v2010, %v2306
        %2308 = vmatprep.mubr.f32.mxu0 0.0
        %v2309 = vand.u32 %v470, 4294901760
        %2310 = vmatmul.mubr.f32.gmra.mrb[0].mxu0 %v2309
        %v2311 = vpop.f32.mrb[0].mxu0
        %v2312 = vadd.f32 %v2019, %v2311
        %v2313 = vpop.f32.mrb[0].mxu0
        %v2314 = vadd.f32 %v2021, %v2313
        %2315 = vmatprep.mubr.f32.mxu0 0.0
        %v2316 = vand.u32 %v473, 4294901760
        %2317 = vmatmul.mubr.f32.gmra.mrb[0].mxu0 %v2316
        %v2318 = vpop.f32.mrb[0].mxu0
        %v2319 = vadd.f32 %v2030, %v2318
        %v2320 = vpop.f32.mrb[0].mxu0
        %v2321 = vadd.f32 %v2032, %v2320
        %2322 = vmatprep.mubr.f32.mxu0 0.0
        %v2323 = vand.u32 %v476, 4294901760
        %2324 = vmatmul.mubr.f32.gmra.mrb[0].mxu0 %v2323
        %v2325 = vpop.f32.mrb[0].mxu0
        %v2326 = vadd.f32 %v2041, %v2325
        %v2327 = vpop.f32.mrb[0].mxu0
        %v2328 = vadd.f32 %v2043, %v2327
        %2329 = vmatprep.mubr.f32.mxu0 0.0
        %v2330 = vand.u32 %v479, 4294901760
        %2331 = vmatmul.mubr.f32.gmra.mrb[0].mxu0 %v2330
        %v2332 = vpop.f32.mrb[0].mxu0
        %v2333 = vadd.f32 %v2052, %v2332
        %v2334 = vpop.f32.mrb[0].mxu0
        %v2335 = vadd.f32 %v2054, %v2334
        %2336 = vdwg.mxu0
        %2337 = vmatprep.subr.mxu0 0.0
        %v2338 = vand.u32 %v578, 4294901760
        %v2339 = vsub.f32 %v578, %v2338
        %2340 = vmatpush1.xpose.msra.mxu0 %v2339
        %2341 = vmatprep.subr.mxu0 0.0
        %v2342 = vand.u32 %v581, 4294901760
        %v2343 = vsub.f32 %v581, %v2342
        %2344 = vmatpush1.xpose.msra.mxu0 %v2343
        %2345 = vmatprep.subr.mxu0 0.0
        %v2346 = vand.u32 %v584, 4294901760
        %v2347 = vsub.f32 %v584, %v2346
        %2348 = vmatpush1.xpose.msra.mxu0 %v2347
        %2349 = vmatprep.subr.mxu0 0.0
        %v2350 = vand.u32 %v587, 4294901760
        %v2351 = vsub.f32 %v587, %v2350
        %2352 = vmatpush1.xpose.msra.mxu0 %v2351
        %2353 = vmatprep.subr.mxu0 0.0
        %v2354 = vand.u32 %v590, 4294901760
        %v2355 = vsub.f32 %v590, %v2354
        %2356 = vmatpush1.xpose.msra.mxu0 %v2355
        %2357 = vmatprep.subr.mxu0 0.0
        %v2358 = vand.u32 %v593, 4294901760
        %v2359 = vsub.f32 %v593, %v2358
        %2360 = vmatpush1.xpose.msra.mxu0 %v2359
        %2361 = vmatprep.subr.mxu0 0.0
        %v2362 = vand.u32 %v596, 4294901760
        %v2363 = vsub.f32 %v596, %v2362
        %2364 = vmatpush1.xpose.msra.mxu0 %v2363
        %2365 = vmatprep.subr.mxu0 0.0
        %v2366 = vand.u32 %v599, 4294901760
        %v2367 = vsub.f32 %v599, %v2366
        %2368 = vmatpush1.xpose.msra.mxu0 %v2367
        %2369 = vmatprep.subr.mxu0 0.0
        %v2370 = vand.u32 %v602, 4294901760
        %v2371 = vsub.f32 %v602, %v2370
        %2372 = vmatpush1.xpose.msra.mxu0 %v2371
        %2373 = vmatprep.subr.mxu0 0.0
        %v2374 = vand.u32 %v605, 4294901760
        %v2375 = vsub.f32 %v605, %v2374
        %2376 = vmatpush1.xpose.msra.mxu0 %v2375
        %2377 = vmatprep.subr.mxu0 0.0
        %v2378 = vand.u32 %v608, 4294901760
        %v2379 = vsub.f32 %v608, %v2378
        %2380 = vmatpush1.xpose.msra.mxu0 %v2379
        %2381 = vmatprep.subr.mxu0 0.0
        %v2382 = vand.u32 %v611, 4294901760
        %v2383 = vsub.f32 %v611, %v2382
        %2384 = vmatpush1.xpose.msra.mxu0 %v2383
        %2385 = vmatprep.subr.mxu0 0.0
        %v2386 = vand.u32 %v614, 4294901760
        %v2387 = vsub.f32 %v614, %v2386
        %2388 = vmatpush1.xpose.msra.mxu0 %v2387
        %2389 = vmatprep.subr.mxu0 0.0
        %v2390 = vand.u32 %v617, 4294901760
        %v2391 = vsub.f32 %v617, %v2390
        %2392 = vmatpush1.xpose.msra.mxu0 %v2391
        %2393 = vmatprep.subr.mxu0 0.0
        %v2394 = vand.u32 %v620, 4294901760
        %v2395 = vsub.f32 %v620, %v2394
        %2396 = vmatpush1.xpose.msra.mxu0 %v2395
        %2397 = vmatprep.subr.mxu0 0.0
        %v2398 = vand.u32 %v623, 4294901760
        %v2399 = vsub.f32 %v623, %v2398
        %2400 = vmatpush1.xpose.msra.mxu0 %v2399
        %2401 = vmatprep.subr.mxu0 0.0
        %v2402 = vand.u32 %v626, 4294901760
        %v2403 = vsub.f32 %v626, %v2402
        %2404 = vmatpush1.xpose.msra.mxu0 %v2403
        %2405 = vmatprep.subr.mxu0 0.0
        %v2406 = vand.u32 %v629, 4294901760
        %v2407 = vsub.f32 %v629, %v2406
        %2408 = vmatpush1.xpose.msra.mxu0 %v2407
        %2409 = vmatprep.subr.mxu0 0.0
        %v2410 = vand.u32 %v632, 4294901760
        %v2411 = vsub.f32 %v632, %v2410
        %2412 = vmatpush1.xpose.msra.mxu0 %v2411
        %2413 = vmatprep.subr.mxu0 0.0
        %v2414 = vand.u32 %v635, 4294901760
        %v2415 = vsub.f32 %v635, %v2414
        %2416 = vmatpush1.xpose.msra.mxu0 %v2415
        %2417 = vmatprep.subr.mxu0 0.0
        %v2418 = vand.u32 %v638, 4294901760
        %v2419 = vsub.f32 %v638, %v2418
        %2420 = vmatpush1.xpose.msra.mxu0 %v2419
        %2421 = vmatprep.subr.mxu0 0.0
        %v2422 = vand.u32 %v641, 4294901760
        %v2423 = vsub.f32 %v641, %v2422
        %2424 = vmatpush1.xpose.msra.mxu0 %v2423
        %2425 = vmatprep.subr.mxu0 0.0
        %v2426 = vand.u32 %v644, 4294901760
        %v2427 = vsub.f32 %v644, %v2426
        %2428 = vmatpush1.xpose.msra.mxu0 %v2427
        %2429 = vmatprep.subr.mxu0 0.0
        %v2430 = vand.u32 %v647, 4294901760
        %v2431 = vsub.f32 %v647, %v2430
        %2432 = vmatpush1.xpose.msra.mxu0 %v2431
        %2433 = vmatprep.subr.mxu0 0.0
        %v2434 = vand.u32 %v650, 4294901760
        %v2435 = vsub.f32 %v650, %v2434
        %2436 = vmatpush1.xpose.msra.mxu0 %v2435
        %2437 = vmatprep.subr.mxu0 0.0
        %v2438 = vand.u32 %v653, 4294901760
        %v2439 = vsub.f32 %v653, %v2438
        %2440 = vmatpush1.xpose.msra.mxu0 %v2439
        %2441 = vmatprep.subr.mxu0 0.0
        %v2442 = vand.u32 %v656, 4294901760
        %v2443 = vsub.f32 %v656, %v2442
        %2444 = vmatpush1.xpose.msra.mxu0 %v2443
        %2445 = vmatprep.subr.mxu0 0.0
        %v2446 = vand.u32 %v659, 4294901760
        %v2447 = vsub.f32 %v659, %v2446
        %2448 = vmatpush1.xpose.msra.mxu0 %v2447
        %2449 = vmatprep.subr.mxu0 0.0
        %v2450 = vand.u32 %v662, 4294901760
        %v2451 = vsub.f32 %v662, %v2450
        %2452 = vmatpush1.xpose.msra.mxu0 %v2451
        %2453 = vmatprep.subr.mxu0 0.0
        %v2454 = vand.u32 %v665, 4294901760
        %v2455 = vsub.f32 %v665, %v2454
        %2456 = vmatpush1.xpose.msra.mxu0 %v2455
        %2457 = vmatprep.subr.mxu0 0.0
        %v2458 = vand.u32 %v668, 4294901760
        %v2459 = vsub.f32 %v668, %v2458
        %2460 = vmatpush1.xpose.msra.mxu0 %v2459
        %2461 = vmatprep.subr.mxu0 0.0
        %v2462 = vand.u32 %v671, 4294901760
        %v2463 = vsub.f32 %v671, %v2462
        %2464 = vmatpush1.xpose.msra.mxu0 %v2463
        %2465 = vmatprep.mubr.f32.mxu0 0.0
        %v2466 = vand.u32 %v458, 4294901760
        %v2467 = vsub.f32 %v458, %v2466
        %2468 = vmatmul.mubr.f32.gmra.mrb[0].mxu0 %v2467
        %v2469 = vpop.f32.mrb[0].mxu0
        %v2470 = vadd.f32 %v2284, %v2469
        %v2471 = vpop.f32.mrb[0].mxu0
        %v2472 = vadd.f32 %v2286, %v2471
        %2473 = vmatprep.mubr.f32.mxu0 0.0
        %v2474 = vand.u32 %v461, 4294901760
        %v2475 = vsub.f32 %v461, %v2474
        %2476 = vmatmul.mubr.f32.gmra.mrb[0].mxu0 %v2475
        %v2477 = vpop.f32.mrb[0].mxu0
        %v2478 = vadd.f32 %v2291, %v2477
        %v2479 = vpop.f32.mrb[0].mxu0
        %v2480 = vadd.f32 %v2293, %v2479
        %2481 = vmatprep.mubr.f32.mxu0 0.0
        %v2482 = vand.u32 %v464, 4294901760
        %v2483 = vsub.f32 %v464, %v2482
        %2484 = vmatmul.mubr.f32.gmra.mrb[0].mxu0 %v2483
        %v2485 = vpop.f32.mrb[0].mxu0
        %v2486 = vadd.f32 %v2298, %v2485
        %v2487 = vpop.f32.mrb[0].mxu0
        %v2488 = vadd.f32 %v2300, %v2487
        %2489 = vmatprep.mubr.f32.mxu0 0.0
        %v2490 = vand.u32 %v467, 4294901760
        %v2491 = vsub.f32 %v467, %v2490
        %2492 = vmatmul.mubr.f32.gmra.mrb[0].mxu0 %v2491
        %v2493 = vpop.f32.mrb[0].mxu0
        %v2494 = vadd.f32 %v2305, %v2493
        %v2495 = vpop.f32.mrb[0].mxu0
        %v2496 = vadd.f32 %v2307, %v2495
        %2497 = vmatprep.mubr.f32.mxu0 0.0
        %v2498 = vand.u32 %v470, 4294901760
        %v2499 = vsub.f32 %v470, %v2498
        %2500 = vmatmul.mubr.f32.gmra.mrb[0].mxu0 %v2499
        %v2501 = vpop.f32.mrb[0].mxu0
        %v2502 = vadd.f32 %v2312, %v2501
        %v2503 = vpop.f32.mrb[0].mxu0
        %v2504 = vadd.f32 %v2314, %v2503
        %2505 = vmatprep.mubr.f32.mxu0 0.0
        %v2506 = vand.u32 %v473, 4294901760
        %v2507 = vsub.f32 %v473, %v2506
        %2508 = vmatmul.mubr.f32.gmra.mrb[0].mxu0 %v2507
        %v2509 = vpop.f32.mrb[0].mxu0
        %v2510 = vadd.f32 %v2319, %v2509
        %v2511 = vpop.f32.mrb[0].mxu0
        %v2512 = vadd.f32 %v2321, %v2511
        %2513 = vmatprep.mubr.f32.mxu0 0.0
        %v2514 = vand.u32 %v476, 4294901760
        %v2515 = vsub.f32 %v476, %v2514
        %2516 = vmatmul.mubr.f32.gmra.mrb[0].mxu0 %v2515
        %v2517 = vpop.f32.mrb[0].mxu0
        %v2518 = vadd.f32 %v2326, %v2517
        %v2519 = vpop.f32.mrb[0].mxu0
        %v2520 = vadd.f32 %v2328, %v2519
        %2521 = vmatprep.mubr.f32.mxu0 0.0
        %v2522 = vand.u32 %v479, 4294901760
        %v2523 = vsub.f32 %v479, %v2522
        %2524 = vmatmul.mubr.f32.gmra.mrb[0].mxu0 %v2523
        %v2525 = vpop.f32.mrb[0].mxu0
        %v2526 = vadd.f32 %v2333, %v2525
        %v2527 = vpop.f32.mrb[0].mxu0
        %v2528 = vadd.f32 %v2335, %v2527
        %2529 = vdwg.mxu0
        %2530 = vmatprep.subr.mxu0 0.0
        %v2531 = vand.u32 %v578, 4294901760
        %2532 = vmatpush1.xpose.msra.mxu0 %v2531
        %2533 = vmatprep.subr.mxu0 0.0
        %v2534 = vand.u32 %v581, 4294901760
        %2535 = vmatpush1.xpose.msra.mxu0 %v2534
        %2536 = vmatprep.subr.mxu0 0.0
        %v2537 = vand.u32 %v584, 4294901760
        %2538 = vmatpush1.xpose.msra.mxu0 %v2537
        %2539 = vmatprep.subr.mxu0 0.0
        %v2540 = vand.u32 %v587, 4294901760
        %2541 = vmatpush1.xpose.msra.mxu0 %v2540
        %2542 = vmatprep.subr.mxu0 0.0
        %v2543 = vand.u32 %v590, 4294901760
        %2544 = vmatpush1.xpose.msra.mxu0 %v2543
        %2545 = vmatprep.subr.mxu0 0.0
        %v2546 = vand.u32 %v593, 4294901760
        %2547 = vmatpush1.xpose.msra.mxu0 %v2546
        %2548 = vmatprep.subr.mxu0 0.0
        %v2549 = vand.u32 %v596, 4294901760
        %2550 = vmatpush1.xpose.msra.mxu0 %v2549
        %2551 = vmatprep.subr.mxu0 0.0
        %v2552 = vand.u32 %v599, 4294901760
        %2553 = vmatpush1.xpose.msra.mxu0 %v2552
        %2554 = vmatprep.subr.mxu0 0.0
        %v2555 = vand.u32 %v602, 4294901760
        %2556 = vmatpush1.xpose.msra.mxu0 %v2555
        %2557 = vmatprep.subr.mxu0 0.0
        %v2558 = vand.u32 %v605, 4294901760
        %2559 = vmatpush1.xpose.msra.mxu0 %v2558
        %2560 = vmatprep.subr.mxu0 0.0
        %v2561 = vand.u32 %v608, 4294901760
        %2562 = vmatpush1.xpose.msra.mxu0 %v2561
        %2563 = vmatprep.subr.mxu0 0.0
        %v2564 = vand.u32 %v611, 4294901760
        %2565 = vmatpush1.xpose.msra.mxu0 %v2564
        %2566 = vmatprep.subr.mxu0 0.0
        %v2567 = vand.u32 %v614, 4294901760
        %2568 = vmatpush1.xpose.msra.mxu0 %v2567
        %2569 = vmatprep.subr.mxu0 0.0
        %v2570 = vand.u32 %v617, 4294901760
        %2571 = vmatpush1.xpose.msra.mxu0 %v2570
        %2572 = vmatprep.subr.mxu0 0.0
        %v2573 = vand.u32 %v620, 4294901760
        %2574 = vmatpush1.xpose.msra.mxu0 %v2573
        %2575 = vmatprep.subr.mxu0 0.0
        %v2576 = vand.u32 %v623, 4294901760
        %2577 = vmatpush1.xpose.msra.mxu0 %v2576
        %2578 = vmatprep.subr.mxu0 0.0
        %v2579 = vand.u32 %v626, 4294901760
        %2580 = vmatpush1.xpose.msra.mxu0 %v2579
        %2581 = vmatprep.subr.mxu0 0.0
        %v2582 = vand.u32 %v629, 4294901760
        %2583 = vmatpush1.xpose.msra.mxu0 %v2582
        %2584 = vmatprep.subr.mxu0 0.0
        %v2585 = vand.u32 %v632, 4294901760
        %2586 = vmatpush1.xpose.msra.mxu0 %v2585
        %2587 = vmatprep.subr.mxu0 0.0
        %v2588 = vand.u32 %v635, 4294901760
        %2589 = vmatpush1.xpose.msra.mxu0 %v2588
        %2590 = vmatprep.subr.mxu0 0.0
        %v2591 = vand.u32 %v638, 4294901760
        %2592 = vmatpush1.xpose.msra.mxu0 %v2591
        %2593 = vmatprep.subr.mxu0 0.0
        %v2594 = vand.u32 %v641, 4294901760
        %2595 = vmatpush1.xpose.msra.mxu0 %v2594
        %2596 = vmatprep.subr.mxu0 0.0
        %v2597 = vand.u32 %v644, 4294901760
        %2598 = vmatpush1.xpose.msra.mxu0 %v2597
        %2599 = vmatprep.subr.mxu0 0.0
        %v2600 = vand.u32 %v647, 4294901760
        %2601 = vmatpush1.xpose.msra.mxu0 %v2600
        %2602 = vmatprep.subr.mxu0 0.0
        %v2603 = vand.u32 %v650, 4294901760
        %2604 = vmatpush1.xpose.msra.mxu0 %v2603
        %2605 = vmatprep.subr.mxu0 0.0
        %v2606 = vand.u32 %v653, 4294901760
        %2607 = vmatpush1.xpose.msra.mxu0 %v2606
        %2608 = vmatprep.subr.mxu0 0.0
        %v2609 = vand.u32 %v656, 4294901760
        %2610 = vmatpush1.xpose.msra.mxu0 %v2609
        %2611 = vmatprep.subr.mxu0 0.0
        %v2612 = vand.u32 %v659, 4294901760
        %2613 = vmatpush1.xpose.msra.mxu0 %v2612
        %2614 = vmatprep.subr.mxu0 0.0
        %v2615 = vand.u32 %v662, 4294901760
        %2616 = vmatpush1.xpose.msra.mxu0 %v2615
        %2617 = vmatprep.subr.mxu0 0.0
        %v2618 = vand.u32 %v665, 4294901760
        %2619 = vmatpush1.xpose.msra.mxu0 %v2618
        %2620 = vmatprep.subr.mxu0 0.0
        %v2621 = vand.u32 %v668, 4294901760
        %2622 = vmatpush1.xpose.msra.mxu0 %v2621
        %2623 = vmatprep.subr.mxu0 0.0
        %v2624 = vand.u32 %v671, 4294901760
        %2625 = vmatpush1.xpose.msra.mxu0 %v2624
        %2626 = vmatprep.mubr.f32.mxu0 0.0
        %v2627 = vand.u32 %v458, 4294901760
        %v2628 = vsub.f32 %v458, %v2627
        %v2629 = vand.u32 %v2628, 4294901760
        %2630 = vmatmul.mubr.f32.gmra.mrb[0].mxu0 %v2629
        %v2631 = vpop.f32.mrb[0].mxu0
        %v2632 = vadd.f32 %v2470, %v2631
        %v2633 = vpop.f32.mrb[0].mxu0
        %v2634 = vadd.f32 %v2472, %v2633
        %2635 = vmatprep.mubr.f32.mxu0 0.0
        %v2636 = vand.u32 %v461, 4294901760
        %v2637 = vsub.f32 %v461, %v2636
        %v2638 = vand.u32 %v2637, 4294901760
        %2639 = vmatmul.mubr.f32.gmra.mrb[0].mxu0 %v2638
        %v2640 = vpop.f32.mrb[0].mxu0
        %v2641 = vadd.f32 %v2478, %v2640
        %v2642 = vpop.f32.mrb[0].mxu0
        %v2643 = vadd.f32 %v2480, %v2642
        %2644 = vmatprep.mubr.f32.mxu0 0.0
        %v2645 = vand.u32 %v464, 4294901760
        %v2646 = vsub.f32 %v464, %v2645
        %v2647 = vand.u32 %v2646, 4294901760
        %2648 = vmatmul.mubr.f32.gmra.mrb[0].mxu0 %v2647
        %v2649 = vpop.f32.mrb[0].mxu0
        %v2650 = vadd.f32 %v2486, %v2649
        %v2651 = vpop.f32.mrb[0].mxu0
        %v2652 = vadd.f32 %v2488, %v2651
        %2653 = vmatprep.mubr.f32.mxu0 0.0
        %v2654 = vand.u32 %v467, 4294901760
        %v2655 = vsub.f32 %v467, %v2654
        %v2656 = vand.u32 %v2655, 4294901760
        %2657 = vmatmul.mubr.f32.gmra.mrb[0].mxu0 %v2656
        %v2658 = vpop.f32.mrb[0].mxu0
        %v2659 = vadd.f32 %v2494, %v2658
        %v2660 = vpop.f32.mrb[0].mxu0
        %v2661 = vadd.f32 %v2496, %v2660
        %2662 = vmatprep.mubr.f32.mxu0 0.0
        %v2663 = vand.u32 %v470, 4294901760
        %v2664 = vsub.f32 %v470, %v2663
        %v2665 = vand.u32 %v2664, 4294901760
        %2666 = vmatmul.mubr.f32.gmra.mrb[0].mxu0 %v2665
        %v2667 = vpop.f32.mrb[0].mxu0
        %v2668 = vadd.f32 %v2502, %v2667
        %v2669 = vpop.f32.mrb[0].mxu0
        %v2670 = vadd.f32 %v2504, %v2669
        %2671 = vmatprep.mubr.f32.mxu0 0.0
        %v2672 = vand.u32 %v473, 4294901760
        %v2673 = vsub.f32 %v473, %v2672
        %v2674 = vand.u32 %v2673, 4294901760
        %2675 = vmatmul.mubr.f32.gmra.mrb[0].mxu0 %v2674
        %v2676 = vpop.f32.mrb[0].mxu0
        %v2677 = vadd.f32 %v2510, %v2676
        %v2678 = vpop.f32.mrb[0].mxu0
        %v2679 = vadd.f32 %v2512, %v2678
        %2680 = vmatprep.mubr.f32.mxu0 0.0
        %v2681 = vand.u32 %v476, 4294901760
        %v2682 = vsub.f32 %v476, %v2681
        %v2683 = vand.u32 %v2682, 4294901760
        %2684 = vmatmul.mubr.f32.gmra.mrb[0].mxu0 %v2683
        %v2685 = vpop.f32.mrb[0].mxu0
        %v2686 = vadd.f32 %v2518, %v2685
        %v2687 = vpop.f32.mrb[0].mxu0
        %v2688 = vadd.f32 %v2520, %v2687
        %2689 = vmatprep.mubr.f32.mxu0 0.0
        %v2690 = vand.u32 %v479, 4294901760
        %v2691 = vsub.f32 %v479, %v2690
        %v2692 = vand.u32 %v2691, 4294901760
        %2693 = vmatmul.mubr.f32.gmra.mrb[0].mxu0 %v2692
        %v2694 = vpop.f32.mrb[0].mxu0
        %v2695 = vadd.f32 %v2526, %v2694
        %v2696 = vpop.f32.mrb[0].mxu0
        %v2697 = vadd.f32 %v2528, %v2696
        %2698 = vdwg.mxu0
        %2699 = vmatprep.subr.mxu0 0.0
        %v2700 = vand.u32 %v578, 4294901760
        %v2701 = vsub.f32 %v578, %v2700
        %v2702 = vand.u32 %v2701, 4294901760
        %2703 = vmatpush1.xpose.msra.mxu0 %v2702
        %2704 = vmatprep.subr.mxu0 0.0
        %v2705 = vand.u32 %v581, 4294901760
        %v2706 = vsub.f32 %v581, %v2705
        %v2707 = vand.u32 %v2706, 4294901760
        %2708 = vmatpush1.xpose.msra.mxu0 %v2707
        %2709 = vmatprep.subr.mxu0 0.0
        %v2710 = vand.u32 %v584, 4294901760
        %v2711 = vsub.f32 %v584, %v2710
        %v2712 = vand.u32 %v2711, 4294901760
        %2713 = vmatpush1.xpose.msra.mxu0 %v2712
        %2714 = vmatprep.subr.mxu0 0.0
        %v2715 = vand.u32 %v587, 4294901760
        %v2716 = vsub.f32 %v587, %v2715
        %v2717 = vand.u32 %v2716, 4294901760
        %2718 = vmatpush1.xpose.msra.mxu0 %v2717
        %2719 = vmatprep.subr.mxu0 0.0
        %v2720 = vand.u32 %v590, 4294901760
        %v2721 = vsub.f32 %v590, %v2720
        %v2722 = vand.u32 %v2721, 4294901760
        %2723 = vmatpush1.xpose.msra.mxu0 %v2722
        %2724 = vmatprep.subr.mxu0 0.0
        %v2725 = vand.u32 %v593, 4294901760
        %v2726 = vsub.f32 %v593, %v2725
        %v2727 = vand.u32 %v2726, 4294901760
        %2728 = vmatpush1.xpose.msra.mxu0 %v2727
        %2729 = vmatprep.subr.mxu0 0.0
        %v2730 = vand.u32 %v596, 4294901760
        %v2731 = vsub.f32 %v596, %v2730
        %v2732 = vand.u32 %v2731, 4294901760
        %2733 = vmatpush1.xpose.msra.mxu0 %v2732
        %2734 = vmatprep.subr.mxu0 0.0
        %v2735 = vand.u32 %v599, 4294901760
        %v2736 = vsub.f32 %v599, %v2735
        %v2737 = vand.u32 %v2736, 4294901760
        %2738 = vmatpush1.xpose.msra.mxu0 %v2737
        %2739 = vmatprep.subr.mxu0 0.0
        %v2740 = vand.u32 %v602, 4294901760
        %v2741 = vsub.f32 %v602, %v2740
        %v2742 = vand.u32 %v2741, 4294901760
        %2743 = vmatpush1.xpose.msra.mxu0 %v2742
        %2744 = vmatprep.subr.mxu0 0.0
        %v2745 = vand.u32 %v605, 4294901760
        %v2746 = vsub.f32 %v605, %v2745
        %v2747 = vand.u32 %v2746, 4294901760
        %2748 = vmatpush1.xpose.msra.mxu0 %v2747
        %2749 = vmatprep.subr.mxu0 0.0
        %v2750 = vand.u32 %v608, 4294901760
        %v2751 = vsub.f32 %v608, %v2750
        %v2752 = vand.u32 %v2751, 4294901760
        %2753 = vmatpush1.xpose.msra.mxu0 %v2752
        %2754 = vmatprep.subr.mxu0 0.0
        %v2755 = vand.u32 %v611, 4294901760
        %v2756 = vsub.f32 %v611, %v2755
        %v2757 = vand.u32 %v2756, 4294901760
        %2758 = vmatpush1.xpose.msra.mxu0 %v2757
        %2759 = vmatprep.subr.mxu0 0.0
        %v2760 = vand.u32 %v614, 4294901760
        %v2761 = vsub.f32 %v614, %v2760
        %v2762 = vand.u32 %v2761, 4294901760
        %2763 = vmatpush1.xpose.msra.mxu0 %v2762
        %2764 = vmatprep.subr.mxu0 0.0
        %v2765 = vand.u32 %v617, 4294901760
        %v2766 = vsub.f32 %v617, %v2765
        %v2767 = vand.u32 %v2766, 4294901760
        %2768 = vmatpush1.xpose.msra.mxu0 %v2767
        %2769 = vmatprep.subr.mxu0 0.0
        %v2770 = vand.u32 %v620, 4294901760
        %v2771 = vsub.f32 %v620, %v2770
        %v2772 = vand.u32 %v2771, 4294901760
        %2773 = vmatpush1.xpose.msra.mxu0 %v2772
        %2774 = vmatprep.subr.mxu0 0.0
        %v2775 = vand.u32 %v623, 4294901760
        %v2776 = vsub.f32 %v623, %v2775
        %v2777 = vand.u32 %v2776, 4294901760
        %2778 = vmatpush1.xpose.msra.mxu0 %v2777
        %2779 = vmatprep.subr.mxu0 0.0
        %v2780 = vand.u32 %v626, 4294901760
        %v2781 = vsub.f32 %v626, %v2780
        %v2782 = vand.u32 %v2781, 4294901760
        %2783 = vmatpush1.xpose.msra.mxu0 %v2782
        %2784 = vmatprep.subr.mxu0 0.0
        %v2785 = vand.u32 %v629, 4294901760
        %v2786 = vsub.f32 %v629, %v2785
        %v2787 = vand.u32 %v2786, 4294901760
        %2788 = vmatpush1.xpose.msra.mxu0 %v2787
        %2789 = vmatprep.subr.mxu0 0.0
        %v2790 = vand.u32 %v632, 4294901760
        %v2791 = vsub.f32 %v632, %v2790
        %v2792 = vand.u32 %v2791, 4294901760
        %2793 = vmatpush1.xpose.msra.mxu0 %v2792
        %2794 = vmatprep.subr.mxu0 0.0
        %v2795 = vand.u32 %v635, 4294901760
        %v2796 = vsub.f32 %v635, %v2795
        %v2797 = vand.u32 %v2796, 4294901760
        %2798 = vmatpush1.xpose.msra.mxu0 %v2797
        %2799 = vmatprep.subr.mxu0 0.0
        %v2800 = vand.u32 %v638, 4294901760
        %v2801 = vsub.f32 %v638, %v2800
        %v2802 = vand.u32 %v2801, 4294901760
        %2803 = vmatpush1.xpose.msra.mxu0 %v2802
        %2804 = vmatprep.subr.mxu0 0.0
        %v2805 = vand.u32 %v641, 4294901760
        %v2806 = vsub.f32 %v641, %v2805
        %v2807 = vand.u32 %v2806, 4294901760
        %2808 = vmatpush1.xpose.msra.mxu0 %v2807
        %2809 = vmatprep.subr.mxu0 0.0
        %v2810 = vand.u32 %v644, 4294901760
        %v2811 = vsub.f32 %v644, %v2810
        %v2812 = vand.u32 %v2811, 4294901760
        %2813 = vmatpush1.xpose.msra.mxu0 %v2812
        %2814 = vmatprep.subr.mxu0 0.0
        %v2815 = vand.u32 %v647, 4294901760
        %v2816 = vsub.f32 %v647, %v2815
        %v2817 = vand.u32 %v2816, 4294901760
        %2818 = vmatpush1.xpose.msra.mxu0 %v2817
        %2819 = vmatprep.subr.mxu0 0.0
        %v2820 = vand.u32 %v650, 4294901760
        %v2821 = vsub.f32 %v650, %v2820
        %v2822 = vand.u32 %v2821, 4294901760
        %2823 = vmatpush1.xpose.msra.mxu0 %v2822
        %2824 = vmatprep.subr.mxu0 0.0
        %v2825 = vand.u32 %v653, 4294901760
        %v2826 = vsub.f32 %v653, %v2825
        %v2827 = vand.u32 %v2826, 4294901760
        %2828 = vmatpush1.xpose.msra.mxu0 %v2827
        %2829 = vmatprep.subr.mxu0 0.0
        %v2830 = vand.u32 %v656, 4294901760
        %v2831 = vsub.f32 %v656, %v2830
        %v2832 = vand.u32 %v2831, 4294901760
        %2833 = vmatpush1.xpose.msra.mxu0 %v2832
        %2834 = vmatprep.subr.mxu0 0.0
        %v2835 = vand.u32 %v659, 4294901760
        %v2836 = vsub.f32 %v659, %v2835
        %v2837 = vand.u32 %v2836, 4294901760
        %2838 = vmatpush1.xpose.msra.mxu0 %v2837
        %2839 = vmatprep.subr.mxu0 0.0
        %v2840 = vand.u32 %v662, 4294901760
        %v2841 = vsub.f32 %v662, %v2840
        %v2842 = vand.u32 %v2841, 4294901760
        %2843 = vmatpush1.xpose.msra.mxu0 %v2842
        %2844 = vmatprep.subr.mxu0 0.0
        %v2845 = vand.u32 %v665, 4294901760
        %v2846 = vsub.f32 %v665, %v2845
        %v2847 = vand.u32 %v2846, 4294901760
        %2848 = vmatpush1.xpose.msra.mxu0 %v2847
        %2849 = vmatprep.subr.mxu0 0.0
        %v2850 = vand.u32 %v668, 4294901760
        %v2851 = vsub.f32 %v668, %v2850
        %v2852 = vand.u32 %v2851, 4294901760
        %2853 = vmatpush1.xpose.msra.mxu0 %v2852
        %2854 = vmatprep.subr.mxu0 0.0
        %v2855 = vand.u32 %v671, 4294901760
        %v2856 = vsub.f32 %v671, %v2855
        %v2857 = vand.u32 %v2856, 4294901760
        %2858 = vmatpush1.xpose.msra.mxu0 %v2857
        %2859 = vmatprep.mubr.f32.mxu0 0.0
        %v2860 = vand.u32 %v458, 4294901760
        %2861 = vmatmul.mubr.f32.gmra.mrb[0].mxu0 %v2860
        %v2862 = vpop.f32.mrb[0].mxu0
        %v2863 = vadd.f32 %v2632, %v2862
        %v2864 = vpop.f32.mrb[0].mxu0
        %v2865 = vadd.f32 %v2634, %v2864
        %2866 = vmatprep.mubr.f32.mxu0 0.0
        %v2867 = vand.u32 %v461, 4294901760
        %2868 = vmatmul.mubr.f32.gmra.mrb[0].mxu0 %v2867
        %v2869 = vpop.f32.mrb[0].mxu0
        %v2870 = vadd.f32 %v2641, %v2869
        %v2871 = vpop.f32.mrb[0].mxu0
        %v2872 = vadd.f32 %v2643, %v2871
        %2873 = vmatprep.mubr.f32.mxu0 0.0
        %v2874 = vand.u32 %v464, 4294901760
        %2875 = vmatmul.mubr.f32.gmra.mrb[0].mxu0 %v2874
        %v2876 = vpop.f32.mrb[0].mxu0
        %v2877 = vadd.f32 %v2650, %v2876
        %v2878 = vpop.f32.mrb[0].mxu0
        %v2879 = vadd.f32 %v2652, %v2878
        %2880 = vmatprep.mubr.f32.mxu0 0.0
        %v2881 = vand.u32 %v467, 4294901760
        %2882 = vmatmul.mubr.f32.gmra.mrb[0].mxu0 %v2881
        %v2883 = vpop.f32.mrb[0].mxu0
        %v2884 = vadd.f32 %v2659, %v2883
        %v2885 = vpop.f32.mrb[0].mxu0
        %v2886 = vadd.f32 %v2661, %v2885
        %2887 = vmatprep.mubr.f32.mxu0 0.0
        %v2888 = vand.u32 %v470, 4294901760
        %2889 = vmatmul.mubr.f32.gmra.mrb[0].mxu0 %v2888
        %v2890 = vpop.f32.mrb[0].mxu0
        %v2891 = vadd.f32 %v2668, %v2890
        %v2892 = vpop.f32.mrb[0].mxu0
        %v2893 = vadd.f32 %v2670, %v2892
        %2894 = vmatprep.mubr.f32.mxu0 0.0
        %v2895 = vand.u32 %v473, 4294901760
        %2896 = vmatmul.mubr.f32.gmra.mrb[0].mxu0 %v2895
        %v2897 = vpop.f32.mrb[0].mxu0
        %v2898 = vadd.f32 %v2677, %v2897
        %v2899 = vpop.f32.mrb[0].mxu0
        %v2900 = vadd.f32 %v2679, %v2899
        %2901 = vmatprep.mubr.f32.mxu0 0.0
        %v2902 = vand.u32 %v476, 4294901760
        %2903 = vmatmul.mubr.f32.gmra.mrb[0].mxu0 %v2902
        %v2904 = vpop.f32.mrb[0].mxu0
        %v2905 = vadd.f32 %v2686, %v2904
        %v2906 = vpop.f32.mrb[0].mxu0
        %v2907 = vadd.f32 %v2688, %v2906
        %2908 = vmatprep.mubr.f32.mxu0 0.0
        %v2909 = vand.u32 %v479, 4294901760
        %2910 = vmatmul.mubr.f32.gmra.mrb[0].mxu0 %v2909
        %v2911 = vpop.f32.mrb[0].mxu0
        %v2912 = vadd.f32 %v2695, %v2911
        %v2913 = vpop.f32.mrb[0].mxu0
        %v2914 = vadd.f32 %v2697, %v2913
        %2915 = vdwg.mxu0
        %2916 = vmatprep.subr.mxu0 0.0
        %v2917 = vand.u32 %v578, 4294901760
        %2918 = vmatpush1.xpose.msra.mxu0 %v2917
        %2919 = vmatprep.subr.mxu0 0.0
        %v2920 = vand.u32 %v581, 4294901760
        %2921 = vmatpush1.xpose.msra.mxu0 %v2920
        %2922 = vmatprep.subr.mxu0 0.0
        %v2923 = vand.u32 %v584, 4294901760
        %2924 = vmatpush1.xpose.msra.mxu0 %v2923
        %2925 = vmatprep.subr.mxu0 0.0
        %v2926 = vand.u32 %v587, 4294901760
        %2927 = vmatpush1.xpose.msra.mxu0 %v2926
        %2928 = vmatprep.subr.mxu0 0.0
        %v2929 = vand.u32 %v590, 4294901760
        %2930 = vmatpush1.xpose.msra.mxu0 %v2929
        %2931 = vmatprep.subr.mxu0 0.0
        %v2932 = vand.u32 %v593, 4294901760
        %2933 = vmatpush1.xpose.msra.mxu0 %v2932
        %2934 = vmatprep.subr.mxu0 0.0
        %v2935 = vand.u32 %v596, 4294901760
        %2936 = vmatpush1.xpose.msra.mxu0 %v2935
        %2937 = vmatprep.subr.mxu0 0.0
        %v2938 = vand.u32 %v599, 4294901760
        %2939 = vmatpush1.xpose.msra.mxu0 %v2938
        %2940 = vmatprep.subr.mxu0 0.0
        %v2941 = vand.u32 %v602, 4294901760
        %2942 = vmatpush1.xpose.msra.mxu0 %v2941
        %2943 = vmatprep.subr.mxu0 0.0
        %v2944 = vand.u32 %v605, 4294901760
        %2945 = vmatpush1.xpose.msra.mxu0 %v2944
        %2946 = vmatprep.subr.mxu0 0.0
        %v2947 = vand.u32 %v608, 4294901760
        %2948 = vmatpush1.xpose.msra.mxu0 %v2947
        %2949 = vmatprep.subr.mxu0 0.0
        %v2950 = vand.u32 %v611, 4294901760
        %2951 = vmatpush1.xpose.msra.mxu0 %v2950
        %2952 = vmatprep.subr.mxu0 0.0
        %v2953 = vand.u32 %v614, 4294901760
        %2954 = vmatpush1.xpose.msra.mxu0 %v2953
        %2955 = vmatprep.subr.mxu0 0.0
        %v2956 = vand.u32 %v617, 4294901760
        %2957 = vmatpush1.xpose.msra.mxu0 %v2956
        %2958 = vmatprep.subr.mxu0 0.0
        %v2959 = vand.u32 %v620, 4294901760
        %2960 = vmatpush1.xpose.msra.mxu0 %v2959
        %2961 = vmatprep.subr.mxu0 0.0
        %v2962 = vand.u32 %v623, 4294901760
        %2963 = vmatpush1.xpose.msra.mxu0 %v2962
        %2964 = vmatprep.subr.mxu0 0.0
        %v2965 = vand.u32 %v626, 4294901760
        %2966 = vmatpush1.xpose.msra.mxu0 %v2965
        %2967 = vmatprep.subr.mxu0 0.0
        %v2968 = vand.u32 %v629, 4294901760
        %2969 = vmatpush1.xpose.msra.mxu0 %v2968
        %2970 = vmatprep.subr.mxu0 0.0
        %v2971 = vand.u32 %v632, 4294901760
        %2972 = vmatpush1.xpose.msra.mxu0 %v2971
        %2973 = vmatprep.subr.mxu0 0.0
        %v2974 = vand.u32 %v635, 4294901760
        %2975 = vmatpush1.xpose.msra.mxu0 %v2974
        %2976 = vmatprep.subr.mxu0 0.0
        %v2977 = vand.u32 %v638, 4294901760
        %2978 = vmatpush1.xpose.msra.mxu0 %v2977
        %2979 = vmatprep.subr.mxu0 0.0
        %v2980 = vand.u32 %v641, 4294901760
        %2981 = vmatpush1.xpose.msra.mxu0 %v2980
        %2982 = vmatprep.subr.mxu0 0.0
        %v2983 = vand.u32 %v644, 4294901760
        %2984 = vmatpush1.xpose.msra.mxu0 %v2983
        %2985 = vmatprep.subr.mxu0 0.0
        %v2986 = vand.u32 %v647, 4294901760
        %2987 = vmatpush1.xpose.msra.mxu0 %v2986
        %2988 = vmatprep.subr.mxu0 0.0
        %v2989 = vand.u32 %v650, 4294901760
        %2990 = vmatpush1.xpose.msra.mxu0 %v2989
        %2991 = vmatprep.subr.mxu0 0.0
        %v2992 = vand.u32 %v653, 4294901760
        %2993 = vmatpush1.xpose.msra.mxu0 %v2992
        %2994 = vmatprep.subr.mxu0 0.0
        %v2995 = vand.u32 %v656, 4294901760
        %2996 = vmatpush1.xpose.msra.mxu0 %v2995
        %2997 = vmatprep.subr.mxu0 0.0
        %v2998 = vand.u32 %v659, 4294901760
        %2999 = vmatpush1.xpose.msra.mxu0 %v2998
        %3000 = vmatprep.subr.mxu0 0.0
        %v3001 = vand.u32 %v662, 4294901760
        %3002 = vmatpush1.xpose.msra.mxu0 %v3001
        %3003 = vmatprep.subr.mxu0 0.0
        %v3004 = vand.u32 %v665, 4294901760
        %3005 = vmatpush1.xpose.msra.mxu0 %v3004
        %3006 = vmatprep.subr.mxu0 0.0
        %v3007 = vand.u32 %v668, 4294901760
        %3008 = vmatpush1.xpose.msra.mxu0 %v3007
        %3009 = vmatprep.subr.mxu0 0.0
        %v3010 = vand.u32 %v671, 4294901760
        %3011 = vmatpush1.xpose.msra.mxu0 %v3010
        %3012 = vmatprep.mubr.f32.mxu0 0.0
        %v3013 = vand.u32 %v458, 4294901760
        %3014 = vmatmul.mubr.f32.gmra.mrb[0].mxu0 %v3013
        %v3015 = vpop.f32.mrb[0].mxu0
        %v3016 = vadd.f32 %v2863, %v3015
        %v3017 = vpop.f32.mrb[0].mxu0
        %v3018 = vadd.f32 %v2865, %v3017
        %3019 = vmatprep.mubr.f32.mxu0 0.0
        %v3020 = vand.u32 %v461, 4294901760
        %3021 = vmatmul.mubr.f32.gmra.mrb[0].mxu0 %v3020
        %v3022 = vpop.f32.mrb[0].mxu0
        %v3023 = vadd.f32 %v2870, %v3022
        %v3024 = vpop.f32.mrb[0].mxu0
        %v3025 = vadd.f32 %v2872, %v3024
        %3026 = vmatprep.mubr.f32.mxu0 0.0
        %v3027 = vand.u32 %v464, 4294901760
        %3028 = vmatmul.mubr.f32.gmra.mrb[0].mxu0 %v3027
        %v3029 = vpop.f32.mrb[0].mxu0
        %v3030 = vadd.f32 %v2877, %v3029
        %v3031 = vpop.f32.mrb[0].mxu0
        %v3032 = vadd.f32 %v2879, %v3031
        %3033 = vmatprep.mubr.f32.mxu0 0.0
        %v3034 = vand.u32 %v467, 4294901760
        %3035 = vmatmul.mubr.f32.gmra.mrb[0].mxu0 %v3034
        %v3036 = vpop.f32.mrb[0].mxu0
        %v3037 = vadd.f32 %v2884, %v3036
        %v3038 = vpop.f32.mrb[0].mxu0
        %v3039 = vadd.f32 %v2886, %v3038
        %3040 = vmatprep.mubr.f32.mxu0 0.0
        %v3041 = vand.u32 %v470, 4294901760
        %3042 = vmatmul.mubr.f32.gmra.mrb[0].mxu0 %v3041
        %v3043 = vpop.f32.mrb[0].mxu0
        %v3044 = vadd.f32 %v2891, %v3043
        %v3045 = vpop.f32.mrb[0].mxu0
        %v3046 = vadd.f32 %v2893, %v3045
        %3047 = vmatprep.mubr.f32.mxu0 0.0
        %v3048 = vand.u32 %v473, 4294901760
        %3049 = vmatmul.mubr.f32.gmra.mrb[0].mxu0 %v3048
        %v3050 = vpop.f32.mrb[0].mxu0
        %v3051 = vadd.f32 %v2898, %v3050
        %v3052 = vpop.f32.mrb[0].mxu0
        %v3053 = vadd.f32 %v2900, %v3052
        %3054 = vmatprep.mubr.f32.mxu0 0.0
        %v3055 = vand.u32 %v476, 4294901760
        %3056 = vmatmul.mubr.f32.gmra.mrb[0].mxu0 %v3055
        %v3057 = vpop.f32.mrb[0].mxu0
        %v3058 = vadd.f32 %v2905, %v3057
        %v3059 = vpop.f32.mrb[0].mxu0
        %v3060 = vadd.f32 %v2907, %v3059
        %3061 = vmatprep.mubr.f32.mxu0 0.0
        %v3062 = vand.u32 %v479, 4294901760
        %3063 = vmatmul.mubr.f32.gmra.mrb[0].mxu0 %v3062
        %v3064 = vpop.f32.mrb[0].mxu0
        %v3065 = vadd.f32 %v2912, %v3064
        %v3066 = vpop.f32.mrb[0].mxu0
        %v3067 = vadd.f32 %v2914, %v3066
        %3068 = vdwg.mxu0
        %v3069 = vmax.f32 %v1818, 0.0
        %v3070 = vmax.f32 %v1820, 0.0
        %v3071 = vmax.f32 %v3016, 0.0
        %v3072 = vmax.f32 %v3018, 0.0
        %v3073 = vmax.f32 %v1825, 0.0
        %v3074 = vmax.f32 %v1827, 0.0
        %v3075 = vmax.f32 %v3023, 0.0
        %v3076 = vmax.f32 %v3025, 0.0
        %v3077 = vmax.f32 %v1832, 0.0
        %v3078 = vmax.f32 %v1834, 0.0
        %v3079 = vmax.f32 %v3030, 0.0
        %v3080 = vmax.f32 %v3032, 0.0
        %v3081 = vmax.f32 %v1839, 0.0
        %v3082 = vmax.f32 %v1841, 0.0
        %v3083 = vmax.f32 %v3037, 0.0
        %v3084 = vmax.f32 %v3039, 0.0
        %v3085 = vmax.f32 %v1846, 0.0
        %v3086 = vmax.f32 %v1848, 0.0
        %v3087 = vmax.f32 %v3044, 0.0
        %v3088 = vmax.f32 %v3046, 0.0
        %v3089 = vmax.f32 %v1853, 0.0
        %v3090 = vmax.f32 %v1855, 0.0
        %v3091 = vmax.f32 %v3051, 0.0
        %v3092 = vmax.f32 %v3053, 0.0
        %v3093 = vmax.f32 %v1860, 0.0
        %v3094 = vmax.f32 %v1862, 0.0
        %v3095 = vmax.f32 %v3058, 0.0
        %v3096 = vmax.f32 %v3060, 0.0
        %v3097 = vmax.f32 %v1867, 0.0
        %v3098 = vmax.f32 %v1869, 0.0
        %v3099 = vmax.f32 %v3065, 0.0
        %v3100 = vmax.f32 %v3067, 0.0
        %v3101 = vld [vmem:[%s3] sm:$0xff]
        %v3102 = vld [vmem:[%s3 + $0x8] sm:$0xff]
        %v3103 = vld [vmem:[%s3 + $0x10] sm:$0xff]
        %v3104 = vld [vmem:[%s3 + $0x18] sm:$0xff]
        %v3105 = vld [vmem:[%s4] sm:$0xff]
        %v3106 = vld [vmem:[%s4 + $0x8] sm:$0xff]
        %v3107 = vld [vmem:[%s4 + $0x10] sm:$0xff]
        %v3108 = vld [vmem:[%s4 + $0x18] sm:$0xff]
        %3110 = vset.pattern.permute.xlu0 0
        %3111 = vperm.xlu0 %3110, %v3105
        %v3112 = vpop.permute.xlu0 %3111
        %3115 = vset.pattern.permute.xlu0 0
        %3116 = vperm.xlu0 %3115, %v3106
        %v3117 = vpop.permute.xlu0 %3116
        %3120 = vset.pattern.permute.xlu0 0
        %3121 = vperm.xlu0 %3120, %v3107
        %v3122 = vpop.permute.xlu0 %3121
        %3125 = vset.pattern.permute.xlu0 0
        %3126 = vperm.xlu0 %3125, %v3108
        %v3127 = vpop.permute.xlu0 %3126
        %vm3129 = vcmask 523264
        %v3131 = vsel %vm3129, %v3101, 0
        %v3134 = vsel %vm3129, %v3102, 0
        %v3137 = vsel %vm3129, %v3103, 0
        %v3140 = vsel %vm3129, %v3104, 0
        %v3142 = vand.u32 %v3070, 4294901760
        %3143 = vmatprep.subr.mxu0 %v3142
        %v3144 = vand.u32 %v3069, 4294901760
        %3145 = vmatpush1.msra.mxu0 %v3144
        %v3146 = vand.u32 %v3074, 4294901760
        %3147 = vmatprep.subr.mxu0 %v3146
        %v3148 = vand.u32 %v3073, 4294901760
        %3149 = vmatpush1.msra.mxu0 %v3148
        %v3150 = vand.u32 %v3078, 4294901760
        %3151 = vmatprep.subr.mxu0 %v3150
        %v3152 = vand.u32 %v3077, 4294901760
        %3153 = vmatpush1.msra.mxu0 %v3152
        %v3154 = vand.u32 %v3082, 4294901760
        %3155 = vmatprep.subr.mxu0 %v3154
        %v3156 = vand.u32 %v3081, 4294901760
        %3157 = vmatpush1.msra.mxu0 %v3156
        %v3158 = vand.u32 %v3086, 4294901760
        %3159 = vmatprep.subr.mxu0 %v3158
        %v3160 = vand.u32 %v3085, 4294901760
        %3161 = vmatpush1.msra.mxu0 %v3160
        %v3162 = vand.u32 %v3090, 4294901760
        %3163 = vmatprep.subr.mxu0 %v3162
        %v3164 = vand.u32 %v3089, 4294901760
        %3165 = vmatpush1.msra.mxu0 %v3164
        %v3166 = vand.u32 %v3094, 4294901760
        %3167 = vmatprep.subr.mxu0 %v3166
        %v3168 = vand.u32 %v3093, 4294901760
        %3169 = vmatpush1.msra.mxu0 %v3168
        %v3170 = vand.u32 %v3098, 4294901760
        %3171 = vmatprep.subr.mxu0 %v3170
        %v3172 = vand.u32 %v3097, 4294901760
        %3173 = vmatpush1.msra.mxu0 %v3172
        %3174 = vmatprep.subr.mxu0 0.0
        %3175 = vmatpush1.msra.mxu0 0.0
        %3176 = vmatprep.subr.mxu0 0.0
        %3177 = vmatpush1.msra.mxu0 0.0
        %3178 = vmatprep.subr.mxu0 0.0
        %3179 = vmatpush1.msra.mxu0 0.0
        %3180 = vmatprep.subr.mxu0 0.0
        %3181 = vmatpush1.msra.mxu0 0.0
        %3182 = vmatprep.subr.mxu0 0.0
        %3183 = vmatpush1.msra.mxu0 0.0
        %3184 = vmatprep.subr.mxu0 0.0
        %3185 = vmatpush1.msra.mxu0 0.0
        %3186 = vmatprep.subr.mxu0 0.0
        %3187 = vmatpush1.msra.mxu0 0.0
        %3188 = vmatprep.subr.mxu0 0.0
        %3189 = vmatpush1.msra.mxu0 0.0
        %3190 = vmatprep.subr.mxu0 0.0
        %3191 = vmatpush1.msra.mxu0 0.0
        %3192 = vmatprep.subr.mxu0 0.0
        %3193 = vmatpush1.msra.mxu0 0.0
        %3194 = vmatprep.subr.mxu0 0.0
        %3195 = vmatpush1.msra.mxu0 0.0
        %3196 = vmatprep.subr.mxu0 0.0
        %3197 = vmatpush1.msra.mxu0 0.0
        %3198 = vmatprep.subr.mxu0 0.0
        %3199 = vmatpush1.msra.mxu0 0.0
        %3200 = vmatprep.subr.mxu0 0.0
        %3201 = vmatpush1.msra.mxu0 0.0
        %3202 = vmatprep.subr.mxu0 0.0
        %3203 = vmatpush1.msra.mxu0 0.0
        %3204 = vmatprep.subr.mxu0 0.0
        %3205 = vmatpush1.msra.mxu0 0.0
        %3206 = vmatprep.subr.mxu0 0.0
        %3207 = vmatpush1.msra.mxu0 0.0
        %3208 = vmatprep.subr.mxu0 0.0
        %3209 = vmatpush1.msra.mxu0 0.0
        %3210 = vmatprep.subr.mxu0 0.0
        %3211 = vmatpush1.msra.mxu0 0.0
        %3212 = vmatprep.subr.mxu0 0.0
        %3213 = vmatpush1.msra.mxu0 0.0
        %3214 = vmatprep.subr.mxu0 0.0
        %3215 = vmatpush1.msra.mxu0 0.0
        %3216 = vmatprep.subr.mxu0 0.0
        %3217 = vmatpush1.msra.mxu0 0.0
        %3218 = vmatprep.subr.mxu0 0.0
        %3219 = vmatpush1.msra.mxu0 0.0
        %3220 = vmatprep.subr.mxu0 0.0
        %3221 = vmatpush1.msra.mxu0 0.0
        %3222 = vmatprep.mubr.f32.mxu0 0.0
        %v3223 = vand.u32 %v3131, 4294901760
        %v3224 = vsub.f32 %v3131, %v3223
        %v3225 = vand.u32 %v3224, 4294901760
        %v3226 = vsub.f32 %v3224, %v3225
        %v3227 = vand.u32 %v3226, 4294901760
        %3228 = vmatmul.mubr.f32.gmra.mrb[0].mxu0 %v3227
        %v3229 = vpop.f32.mrb[0].mxu0
        %v3230 = vadd.f32 %v3112, %v3229
        %v3231 = vpop.f32.mrb[0].mxu0
        %v3232 = vadd.f32 %v3112, %v3231
        %3233 = vmatprep.mubr.f32.mxu0 0.0
        %v3234 = vand.u32 %v3134, 4294901760
        %v3235 = vsub.f32 %v3134, %v3234
        %v3236 = vand.u32 %v3235, 4294901760
        %v3237 = vsub.f32 %v3235, %v3236
        %v3238 = vand.u32 %v3237, 4294901760
        %3239 = vmatmul.mubr.f32.gmra.mrb[0].mxu0 %v3238
        %v3240 = vpop.f32.mrb[0].mxu0
        %v3241 = vadd.f32 %v3117, %v3240
        %v3242 = vpop.f32.mrb[0].mxu0
        %v3243 = vadd.f32 %v3117, %v3242
        %3244 = vmatprep.mubr.f32.mxu0 0.0
        %v3245 = vand.u32 %v3137, 4294901760
        %v3246 = vsub.f32 %v3137, %v3245
        %v3247 = vand.u32 %v3246, 4294901760
        %v3248 = vsub.f32 %v3246, %v3247
        %v3249 = vand.u32 %v3248, 4294901760
        %3250 = vmatmul.mubr.f32.gmra.mrb[0].mxu0 %v3249
        %v3251 = vpop.f32.mrb[0].mxu0
        %v3252 = vadd.f32 %v3122, %v3251
        %v3253 = vpop.f32.mrb[0].mxu0
        %v3254 = vadd.f32 %v3122, %v3253
        %3255 = vmatprep.mubr.f32.mxu0 0.0
        %v3256 = vand.u32 %v3140, 4294901760
        %v3257 = vsub.f32 %v3140, %v3256
        %v3258 = vand.u32 %v3257, 4294901760
        %v3259 = vsub.f32 %v3257, %v3258
        %v3260 = vand.u32 %v3259, 4294901760
        %3261 = vmatmul.mubr.f32.gmra.mrb[0].mxu0 %v3260
        %v3262 = vpop.f32.mrb[0].mxu0
        %v3263 = vadd.f32 %v3127, %v3262
        %v3264 = vpop.f32.mrb[0].mxu0
        %v3265 = vadd.f32 %v3127, %v3264
        %3266 = vdwg.mxu0
        %v3267 = vand.u32 %v3070, 4294901760
        %v3268 = vsub.f32 %v3070, %v3267
        %v3269 = vand.u32 %v3268, 4294901760
        %v3270 = vsub.f32 %v3268, %v3269
        %v3271 = vand.u32 %v3270, 4294901760
        %3272 = vmatprep.subr.mxu0 %v3271
        %v3273 = vand.u32 %v3069, 4294901760
        %v3274 = vsub.f32 %v3069, %v3273
        %v3275 = vand.u32 %v3274, 4294901760
        %v3276 = vsub.f32 %v3274, %v3275
        %v3277 = vand.u32 %v3276, 4294901760
        %3278 = vmatpush1.msra.mxu0 %v3277
        %v3279 = vand.u32 %v3074, 4294901760
        %v3280 = vsub.f32 %v3074, %v3279
        %v3281 = vand.u32 %v3280, 4294901760
        %v3282 = vsub.f32 %v3280, %v3281
        %v3283 = vand.u32 %v3282, 4294901760
        %3284 = vmatprep.subr.mxu0 %v3283
        %v3285 = vand.u32 %v3073, 4294901760
        %v3286 = vsub.f32 %v3073, %v3285
        %v3287 = vand.u32 %v3286, 4294901760
        %v3288 = vsub.f32 %v3286, %v3287
        %v3289 = vand.u32 %v3288, 4294901760
        %3290 = vmatpush1.msra.mxu0 %v3289
        %v3291 = vand.u32 %v3078, 4294901760
        %v3292 = vsub.f32 %v3078, %v3291
        %v3293 = vand.u32 %v3292, 4294901760
        %v3294 = vsub.f32 %v3292, %v3293
        %v3295 = vand.u32 %v3294, 4294901760
        %3296 = vmatprep.subr.mxu0 %v3295
        %v3297 = vand.u32 %v3077, 4294901760
        %v3298 = vsub.f32 %v3077, %v3297
        %v3299 = vand.u32 %v3298, 4294901760
        %v3300 = vsub.f32 %v3298, %v3299
        %v3301 = vand.u32 %v3300, 4294901760
        %3302 = vmatpush1.msra.mxu0 %v3301
        %v3303 = vand.u32 %v3082, 4294901760
        %v3304 = vsub.f32 %v3082, %v3303
        %v3305 = vand.u32 %v3304, 4294901760
        %v3306 = vsub.f32 %v3304, %v3305
        %v3307 = vand.u32 %v3306, 4294901760
        %3308 = vmatprep.subr.mxu0 %v3307
        %v3309 = vand.u32 %v3081, 4294901760
        %v3310 = vsub.f32 %v3081, %v3309
        %v3311 = vand.u32 %v3310, 4294901760
        %v3312 = vsub.f32 %v3310, %v3311
        %v3313 = vand.u32 %v3312, 4294901760
        %3314 = vmatpush1.msra.mxu0 %v3313
        %v3315 = vand.u32 %v3086, 4294901760
        %v3316 = vsub.f32 %v3086, %v3315
        %v3317 = vand.u32 %v3316, 4294901760
        %v3318 = vsub.f32 %v3316, %v3317
        %v3319 = vand.u32 %v3318, 4294901760
        %3320 = vmatprep.subr.mxu0 %v3319
        %v3321 = vand.u32 %v3085, 4294901760
        %v3322 = vsub.f32 %v3085, %v3321
        %v3323 = vand.u32 %v3322, 4294901760
        %v3324 = vsub.f32 %v3322, %v3323
        %v3325 = vand.u32 %v3324, 4294901760
        %3326 = vmatpush1.msra.mxu0 %v3325
        %v3327 = vand.u32 %v3090, 4294901760
        %v3328 = vsub.f32 %v3090, %v3327
        %v3329 = vand.u32 %v3328, 4294901760
        %v3330 = vsub.f32 %v3328, %v3329
        %v3331 = vand.u32 %v3330, 4294901760
        %3332 = vmatprep.subr.mxu0 %v3331
        %v3333 = vand.u32 %v3089, 4294901760
        %v3334 = vsub.f32 %v3089, %v3333
        %v3335 = vand.u32 %v3334, 4294901760
        %v3336 = vsub.f32 %v3334, %v3335
        %v3337 = vand.u32 %v3336, 4294901760
        %3338 = vmatpush1.msra.mxu0 %v3337
        %v3339 = vand.u32 %v3094, 4294901760
        %v3340 = vsub.f32 %v3094, %v3339
        %v3341 = vand.u32 %v3340, 4294901760
        %v3342 = vsub.f32 %v3340, %v3341
        %v3343 = vand.u32 %v3342, 4294901760
        %3344 = vmatprep.subr.mxu0 %v3343
        %v3345 = vand.u32 %v3093, 4294901760
        %v3346 = vsub.f32 %v3093, %v3345
        %v3347 = vand.u32 %v3346, 4294901760
        %v3348 = vsub.f32 %v3346, %v3347
        %v3349 = vand.u32 %v3348, 4294901760
        %3350 = vmatpush1.msra.mxu0 %v3349
        %v3351 = vand.u32 %v3098, 4294901760
        %v3352 = vsub.f32 %v3098, %v3351
        %v3353 = vand.u32 %v3352, 4294901760
        %v3354 = vsub.f32 %v3352, %v3353
        %v3355 = vand.u32 %v3354, 4294901760
        %3356 = vmatprep.subr.mxu0 %v3355
        %v3357 = vand.u32 %v3097, 4294901760
        %v3358 = vsub.f32 %v3097, %v3357
        %v3359 = vand.u32 %v3358, 4294901760
        %v3360 = vsub.f32 %v3358, %v3359
        %v3361 = vand.u32 %v3360, 4294901760
        %3362 = vmatpush1.msra.mxu0 %v3361
        %3363 = vmatprep.subr.mxu0 0.0
        %3364 = vmatpush1.msra.mxu0 0.0
        %3365 = vmatprep.subr.mxu0 0.0
        %3366 = vmatpush1.msra.mxu0 0.0
        %3367 = vmatprep.subr.mxu0 0.0
        %3368 = vmatpush1.msra.mxu0 0.0
        %3369 = vmatprep.subr.mxu0 0.0
        %3370 = vmatpush1.msra.mxu0 0.0
        %3371 = vmatprep.subr.mxu0 0.0
        %3372 = vmatpush1.msra.mxu0 0.0
        %3373 = vmatprep.subr.mxu0 0.0
        %3374 = vmatpush1.msra.mxu0 0.0
        %3375 = vmatprep.subr.mxu0 0.0
        %3376 = vmatpush1.msra.mxu0 0.0
        %3377 = vmatprep.subr.mxu0 0.0
        %3378 = vmatpush1.msra.mxu0 0.0
        %3379 = vmatprep.subr.mxu0 0.0
        %3380 = vmatpush1.msra.mxu0 0.0
        %3381 = vmatprep.subr.mxu0 0.0
        %3382 = vmatpush1.msra.mxu0 0.0
        %3383 = vmatprep.subr.mxu0 0.0
        %3384 = vmatpush1.msra.mxu0 0.0
        %3385 = vmatprep.subr.mxu0 0.0
        %3386 = vmatpush1.msra.mxu0 0.0
        %3387 = vmatprep.subr.mxu0 0.0
        %3388 = vmatpush1.msra.mxu0 0.0
        %3389 = vmatprep.subr.mxu0 0.0
        %3390 = vmatpush1.msra.mxu0 0.0
        %3391 = vmatprep.subr.mxu0 0.0
        %3392 = vmatpush1.msra.mxu0 0.0
        %3393 = vmatprep.subr.mxu0 0.0
        %3394 = vmatpush1.msra.mxu0 0.0
        %3395 = vmatprep.subr.mxu0 0.0
        %3396 = vmatpush1.msra.mxu0 0.0
        %3397 = vmatprep.subr.mxu0 0.0
        %3398 = vmatpush1.msra.mxu0 0.0
        %3399 = vmatprep.subr.mxu0 0.0
        %3400 = vmatpush1.msra.mxu0 0.0
        %3401 = vmatprep.subr.mxu0 0.0
        %3402 = vmatpush1.msra.mxu0 0.0
        %3403 = vmatprep.subr.mxu0 0.0
        %3404 = vmatpush1.msra.mxu0 0.0
        %3405 = vmatprep.subr.mxu0 0.0
        %3406 = vmatpush1.msra.mxu0 0.0
        %3407 = vmatprep.subr.mxu0 0.0
        %3408 = vmatpush1.msra.mxu0 0.0
        %3409 = vmatprep.subr.mxu0 0.0
        %3410 = vmatpush1.msra.mxu0 0.0
        %3411 = vmatprep.mubr.f32.mxu0 0.0
        %v3412 = vand.u32 %v3131, 4294901760
        %3413 = vmatmul.mubr.f32.gmra.mrb[0].mxu0 %v3412
        %v3414 = vpop.f32.mrb[0].mxu0
        %v3415 = vadd.f32 %v3230, %v3414
        %v3416 = vpop.f32.mrb[0].mxu0
        %v3417 = vadd.f32 %v3232, %v3416
        %3418 = vmatprep.mubr.f32.mxu0 0.0
        %v3419 = vand.u32 %v3134, 4294901760
        %3420 = vmatmul.mubr.f32.gmra.mrb[0].mxu0 %v3419
        %v3421 = vpop.f32.mrb[0].mxu0
        %v3422 = vadd.f32 %v3241, %v3421
        %v3423 = vpop.f32.mrb[0].mxu0
        %v3424 = vadd.f32 %v3243, %v3423
        %3425 = vmatprep.mubr.f32.mxu0 0.0
        %v3426 = vand.u32 %v3137, 4294901760
        %3427 = vmatmul.mubr.f32.gmra.mrb[0].mxu0 %v3426
        %v3428 = vpop.f32.mrb[0].mxu0
        %v3429 = vadd.f32 %v3252, %v3428
        %v3430 = vpop.f32.mrb[0].mxu0
        %v3431 = vadd.f32 %v3254, %v3430
        %3432 = vmatprep.mubr.f32.mxu0 0.0
        %v3433 = vand.u32 %v3140, 4294901760
        %3434 = vmatmul.mubr.f32.gmra.mrb[0].mxu0 %v3433
        %v3435 = vpop.f32.mrb[0].mxu0
        %v3436 = vadd.f32 %v3263, %v3435
        %v3437 = vpop.f32.mrb[0].mxu0
        %v3438 = vadd.f32 %v3265, %v3437
        %3439 = vdwg.mxu0
        %v3440 = vand.u32 %v3070, 4294901760
        %v3441 = vsub.f32 %v3070, %v3440
        %3442 = vmatprep.subr.mxu0 %v3441
        %v3443 = vand.u32 %v3069, 4294901760
        %v3444 = vsub.f32 %v3069, %v3443
        %3445 = vmatpush1.msra.mxu0 %v3444
        %v3446 = vand.u32 %v3074, 4294901760
        %v3447 = vsub.f32 %v3074, %v3446
        %3448 = vmatprep.subr.mxu0 %v3447
        %v3449 = vand.u32 %v3073, 4294901760
        %v3450 = vsub.f32 %v3073, %v3449
        %3451 = vmatpush1.msra.mxu0 %v3450
        %v3452 = vand.u32 %v3078, 4294901760
        %v3453 = vsub.f32 %v3078, %v3452
        %3454 = vmatprep.subr.mxu0 %v3453
        %v3455 = vand.u32 %v3077, 4294901760
        %v3456 = vsub.f32 %v3077, %v3455
        %3457 = vmatpush1.msra.mxu0 %v3456
        %v3458 = vand.u32 %v3082, 4294901760
        %v3459 = vsub.f32 %v3082, %v3458
        %3460 = vmatprep.subr.mxu0 %v3459
        %v3461 = vand.u32 %v3081, 4294901760
        %v3462 = vsub.f32 %v3081, %v3461
        %3463 = vmatpush1.msra.mxu0 %v3462
        %v3464 = vand.u32 %v3086, 4294901760
        %v3465 = vsub.f32 %v3086, %v3464
        %3466 = vmatprep.subr.mxu0 %v3465
        %v3467 = vand.u32 %v3085, 4294901760
        %v3468 = vsub.f32 %v3085, %v3467
        %3469 = vmatpush1.msra.mxu0 %v3468
        %v3470 = vand.u32 %v3090, 4294901760
        %v3471 = vsub.f32 %v3090, %v3470
        %3472 = vmatprep.subr.mxu0 %v3471
        %v3473 = vand.u32 %v3089, 4294901760
        %v3474 = vsub.f32 %v3089, %v3473
        %3475 = vmatpush1.msra.mxu0 %v3474
        %v3476 = vand.u32 %v3094, 4294901760
        %v3477 = vsub.f32 %v3094, %v3476
        %3478 = vmatprep.subr.mxu0 %v3477
        %v3479 = vand.u32 %v3093, 4294901760
        %v3480 = vsub.f32 %v3093, %v3479
        %3481 = vmatpush1.msra.mxu0 %v3480
        %v3482 = vand.u32 %v3098, 4294901760
        %v3483 = vsub.f32 %v3098, %v3482
        %3484 = vmatprep.subr.mxu0 %v3483
        %v3485 = vand.u32 %v3097, 4294901760
        %v3486 = vsub.f32 %v3097, %v3485
        %3487 = vmatpush1.msra.mxu0 %v3486
        %3488 = vmatprep.subr.mxu0 0.0
        %3489 = vmatpush1.msra.mxu0 0.0
        %3490 = vmatprep.subr.mxu0 0.0
        %3491 = vmatpush1.msra.mxu0 0.0
        %3492 = vmatprep.subr.mxu0 0.0
        %3493 = vmatpush1.msra.mxu0 0.0
        %3494 = vmatprep.subr.mxu0 0.0
        %3495 = vmatpush1.msra.mxu0 0.0
        %3496 = vmatprep.subr.mxu0 0.0
        %3497 = vmatpush1.msra.mxu0 0.0
        %3498 = vmatprep.subr.mxu0 0.0
        %3499 = vmatpush1.msra.mxu0 0.0
        %3500 = vmatprep.subr.mxu0 0.0
        %3501 = vmatpush1.msra.mxu0 0.0
        %3502 = vmatprep.subr.mxu0 0.0
        %3503 = vmatpush1.msra.mxu0 0.0
        %3504 = vmatprep.subr.mxu0 0.0
        %3505 = vmatpush1.msra.mxu0 0.0
        %3506 = vmatprep.subr.mxu0 0.0
        %3507 = vmatpush1.msra.mxu0 0.0
        %3508 = vmatprep.subr.mxu0 0.0
        %3509 = vmatpush1.msra.mxu0 0.0
        %3510 = vmatprep.subr.mxu0 0.0
        %3511 = vmatpush1.msra.mxu0 0.0
        %3512 = vmatprep.subr.mxu0 0.0
        %3513 = vmatpush1.msra.mxu0 0.0
        %3514 = vmatprep.subr.mxu0 0.0
        %3515 = vmatpush1.msra.mxu0 0.0
        %3516 = vmatprep.subr.mxu0 0.0
        %3517 = vmatpush1.msra.mxu0 0.0
        %3518 = vmatprep.subr.mxu0 0.0
        %3519 = vmatpush1.msra.mxu0 0.0
        %3520 = vmatprep.subr.mxu0 0.0
        %3521 = vmatpush1.msra.mxu0 0.0
        %3522 = vmatprep.subr.mxu0 0.0
        %3523 = vmatpush1.msra.mxu0 0.0
        %3524 = vmatprep.subr.mxu0 0.0
        %3525 = vmatpush1.msra.mxu0 0.0
        %3526 = vmatprep.subr.mxu0 0.0
        %3527 = vmatpush1.msra.mxu0 0.0
        %3528 = vmatprep.subr.mxu0 0.0
        %3529 = vmatpush1.msra.mxu0 0.0
        %3530 = vmatprep.subr.mxu0 0.0
        %3531 = vmatpush1.msra.mxu0 0.0
        %3532 = vmatprep.subr.mxu0 0.0
        %3533 = vmatpush1.msra.mxu0 0.0
        %3534 = vmatprep.subr.mxu0 0.0
        %3535 = vmatpush1.msra.mxu0 0.0
        %3536 = vmatprep.mubr.f32.mxu0 0.0
        %v3537 = vand.u32 %v3131, 4294901760
        %v3538 = vsub.f32 %v3131, %v3537
        %3539 = vmatmul.mubr.f32.gmra.mrb[0].mxu0 %v3538
        %v3540 = vpop.f32.mrb[0].mxu0
        %v3541 = vadd.f32 %v3415, %v3540
        %v3542 = vpop.f32.mrb[0].mxu0
        %v3543 = vadd.f32 %v3417, %v3542
        %3544 = vmatprep.mubr.f32.mxu0 0.0
        %v3545 = vand.u32 %v3134, 4294901760
        %v3546 = vsub.f32 %v3134, %v3545
        %3547 = vmatmul.mubr.f32.gmra.mrb[0].mxu0 %v3546
        %v3548 = vpop.f32.mrb[0].mxu0
        %v3549 = vadd.f32 %v3422, %v3548
        %v3550 = vpop.f32.mrb[0].mxu0
        %v3551 = vadd.f32 %v3424, %v3550
        %3552 = vmatprep.mubr.f32.mxu0 0.0
        %v3553 = vand.u32 %v3137, 4294901760
        %v3554 = vsub.f32 %v3137, %v3553
        %3555 = vmatmul.mubr.f32.gmra.mrb[0].mxu0 %v3554
        %v3556 = vpop.f32.mrb[0].mxu0
        %v3557 = vadd.f32 %v3429, %v3556
        %v3558 = vpop.f32.mrb[0].mxu0
        %v3559 = vadd.f32 %v3431, %v3558
        %3560 = vmatprep.mubr.f32.mxu0 0.0
        %v3561 = vand.u32 %v3140, 4294901760
        %v3562 = vsub.f32 %v3140, %v3561
        %3563 = vmatmul.mubr.f32.gmra.mrb[0].mxu0 %v3562
        %v3564 = vpop.f32.mrb[0].mxu0
        %v3565 = vadd.f32 %v3436, %v3564
        %v3566 = vpop.f32.mrb[0].mxu0
        %v3567 = vadd.f32 %v3438, %v3566
        %3568 = vdwg.mxu0
        %v3569 = vand.u32 %v3070, 4294901760
        %3570 = vmatprep.subr.mxu0 %v3569
        %v3571 = vand.u32 %v3069, 4294901760
        %3572 = vmatpush1.msra.mxu0 %v3571
        %v3573 = vand.u32 %v3074, 4294901760
        %3574 = vmatprep.subr.mxu0 %v3573
        %v3575 = vand.u32 %v3073, 4294901760
        %3576 = vmatpush1.msra.mxu0 %v3575
        %v3577 = vand.u32 %v3078, 4294901760
        %3578 = vmatprep.subr.mxu0 %v3577
        %v3579 = vand.u32 %v3077, 4294901760
        %3580 = vmatpush1.msra.mxu0 %v3579
        %v3581 = vand.u32 %v3082, 4294901760
        %3582 = vmatprep.subr.mxu0 %v3581
        %v3583 = vand.u32 %v3081, 4294901760
        %3584 = vmatpush1.msra.mxu0 %v3583
        %v3585 = vand.u32 %v3086, 4294901760
        %3586 = vmatprep.subr.mxu0 %v3585
        %v3587 = vand.u32 %v3085, 4294901760
        %3588 = vmatpush1.msra.mxu0 %v3587
        %v3589 = vand.u32 %v3090, 4294901760
        %3590 = vmatprep.subr.mxu0 %v3589
        %v3591 = vand.u32 %v3089, 4294901760
        %3592 = vmatpush1.msra.mxu0 %v3591
        %v3593 = vand.u32 %v3094, 4294901760
        %3594 = vmatprep.subr.mxu0 %v3593
        %v3595 = vand.u32 %v3093, 4294901760
        %3596 = vmatpush1.msra.mxu0 %v3595
        %v3597 = vand.u32 %v3098, 4294901760
        %3598 = vmatprep.subr.mxu0 %v3597
        %v3599 = vand.u32 %v3097, 4294901760
        %3600 = vmatpush1.msra.mxu0 %v3599
        %3601 = vmatprep.subr.mxu0 0.0
        %3602 = vmatpush1.msra.mxu0 0.0
        %3603 = vmatprep.subr.mxu0 0.0
        %3604 = vmatpush1.msra.mxu0 0.0
        %3605 = vmatprep.subr.mxu0 0.0
        %3606 = vmatpush1.msra.mxu0 0.0
        %3607 = vmatprep.subr.mxu0 0.0
        %3608 = vmatpush1.msra.mxu0 0.0
        %3609 = vmatprep.subr.mxu0 0.0
        %3610 = vmatpush1.msra.mxu0 0.0
        %3611 = vmatprep.subr.mxu0 0.0
        %3612 = vmatpush1.msra.mxu0 0.0
        %3613 = vmatprep.subr.mxu0 0.0
        %3614 = vmatpush1.msra.mxu0 0.0
        %3615 = vmatprep.subr.mxu0 0.0
        %3616 = vmatpush1.msra.mxu0 0.0
        %3617 = vmatprep.subr.mxu0 0.0
        %3618 = vmatpush1.msra.mxu0 0.0
        %3619 = vmatprep.subr.mxu0 0.0
        %3620 = vmatpush1.msra.mxu0 0.0
        %3621 = vmatprep.subr.mxu0 0.0
        %3622 = vmatpush1.msra.mxu0 0.0
        %3623 = vmatprep.subr.mxu0 0.0
        %3624 = vmatpush1.msra.mxu0 0.0
        %3625 = vmatprep.subr.mxu0 0.0
        %3626 = vmatpush1.msra.mxu0 0.0
        %3627 = vmatprep.subr.mxu0 0.0
        %3628 = vmatpush1.msra.mxu0 0.0
        %3629 = vmatprep.subr.mxu0 0.0
        %3630 = vmatpush1.msra.mxu0 0.0
        %3631 = vmatprep.subr.mxu0 0.0
        %3632 = vmatpush1.msra.mxu0 0.0
        %3633 = vmatprep.subr.mxu0 0.0
        %3634 = vmatpush1.msra.mxu0 0.0
        %3635 = vmatprep.subr.mxu0 0.0
        %3636 = vmatpush1.msra.mxu0 0.0
        %3637 = vmatprep.subr.mxu0 0.0
        %3638 = vmatpush1.msra.mxu0 0.0
        %3639 = vmatprep.subr.mxu0 0.0
        %3640 = vmatpush1.msra.mxu0 0.0
        %3641 = vmatprep.subr.mxu0 0.0
        %3642 = vmatpush1.msra.mxu0 0.0
        %3643 = vmatprep.subr.mxu0 0.0
        %3644 = vmatpush1.msra.mxu0 0.0
        %3645 = vmatprep.subr.mxu0 0.0
        %3646 = vmatpush1.msra.mxu0 0.0
        %3647 = vmatprep.subr.mxu0 0.0
        %3648 = vmatpush1.msra.mxu0 0.0
        %3649 = vmatprep.mubr.f32.mxu0 0.0
        %v3650 = vand.u32 %v3131, 4294901760
        %v3651 = vsub.f32 %v3131, %v3650
        %v3652 = vand.u32 %v3651, 4294901760
        %3653 = vmatmul.mubr.f32.gmra.mrb[0].mxu0 %v3652
        %v3654 = vpop.f32.mrb[0].mxu0
        %v3655 = vadd.f32 %v3541, %v3654
        %v3656 = vpop.f32.mrb[0].mxu0
        %v3657 = vadd.f32 %v3543, %v3656
        %3658 = vmatprep.mubr.f32.mxu0 0.0
        %v3659 = vand.u32 %v3134, 4294901760
        %v3660 = vsub.f32 %v3134, %v3659
        %v3661 = vand.u32 %v3660, 4294901760
        %3662 = vmatmul.mubr.f32.gmra.mrb[0].mxu0 %v3661
        %v3663 = vpop.f32.mrb[0].mxu0
        %v3664 = vadd.f32 %v3549, %v3663
        %v3665 = vpop.f32.mrb[0].mxu0
        %v3666 = vadd.f32 %v3551, %v3665
        %3667 = vmatprep.mubr.f32.mxu0 0.0
        %v3668 = vand.u32 %v3137, 4294901760
        %v3669 = vsub.f32 %v3137, %v3668
        %v3670 = vand.u32 %v3669, 4294901760
        %3671 = vmatmul.mubr.f32.gmra.mrb[0].mxu0 %v3670
        %v3672 = vpop.f32.mrb[0].mxu0
        %v3673 = vadd.f32 %v3557, %v3672
        %v3674 = vpop.f32.mrb[0].mxu0
        %v3675 = vadd.f32 %v3559, %v3674
        %3676 = vmatprep.mubr.f32.mxu0 0.0
        %v3677 = vand.u32 %v3140, 4294901760
        %v3678 = vsub.f32 %v3140, %v3677
        %v3679 = vand.u32 %v3678, 4294901760
        %3680 = vmatmul.mubr.f32.gmra.mrb[0].mxu0 %v3679
        %v3681 = vpop.f32.mrb[0].mxu0
        %v3682 = vadd.f32 %v3565, %v3681
        %v3683 = vpop.f32.mrb[0].mxu0
        %v3684 = vadd.f32 %v3567, %v3683
        %3685 = vdwg.mxu0
        %v3686 = vand.u32 %v3070, 4294901760
        %v3687 = vsub.f32 %v3070, %v3686
        %v3688 = vand.u32 %v3687, 4294901760
        %3689 = vmatprep.subr.mxu0 %v3688
        %v3690 = vand.u32 %v3069, 4294901760
        %v3691 = vsub.f32 %v3069, %v3690
        %v3692 = vand.u32 %v3691, 4294901760
        %3693 = vmatpush1.msra.mxu0 %v3692
        %v3694 = vand.u32 %v3074, 4294901760
        %v3695 = vsub.f32 %v3074, %v3694
        %v3696 = vand.u32 %v3695, 4294901760
        %3697 = vmatprep.subr.mxu0 %v3696
        %v3698 = vand.u32 %v3073, 4294901760
        %v3699 = vsub.f32 %v3073, %v3698
        %v3700 = vand.u32 %v3699, 4294901760
        %3701 = vmatpush1.msra.mxu0 %v3700
        %v3702 = vand.u32 %v3078, 4294901760
        %v3703 = vsub.f32 %v3078, %v3702
        %v3704 = vand.u32 %v3703, 4294901760
        %3705 = vmatprep.subr.mxu0 %v3704
        %v3706 = vand.u32 %v3077, 4294901760
        %v3707 = vsub.f32 %v3077, %v3706
        %v3708 = vand.u32 %v3707, 4294901760
        %3709 = vmatpush1.msra.mxu0 %v3708
        %v3710 = vand.u32 %v3082, 4294901760
        %v3711 = vsub.f32 %v3082, %v3710
        %v3712 = vand.u32 %v3711, 4294901760
        %3713 = vmatprep.subr.mxu0 %v3712
        %v3714 = vand.u32 %v3081, 4294901760
        %v3715 = vsub.f32 %v3081, %v3714
        %v3716 = vand.u32 %v3715, 4294901760
        %3717 = vmatpush1.msra.mxu0 %v3716
        %v3718 = vand.u32 %v3086, 4294901760
        %v3719 = vsub.f32 %v3086, %v3718
        %v3720 = vand.u32 %v3719, 4294901760
        %3721 = vmatprep.subr.mxu0 %v3720
        %v3722 = vand.u32 %v3085, 4294901760
        %v3723 = vsub.f32 %v3085, %v3722
        %v3724 = vand.u32 %v3723, 4294901760
        %3725 = vmatpush1.msra.mxu0 %v3724
        %v3726 = vand.u32 %v3090, 4294901760
        %v3727 = vsub.f32 %v3090, %v3726
        %v3728 = vand.u32 %v3727, 4294901760
        %3729 = vmatprep.subr.mxu0 %v3728
        %v3730 = vand.u32 %v3089, 4294901760
        %v3731 = vsub.f32 %v3089, %v3730
        %v3732 = vand.u32 %v3731, 4294901760
        %3733 = vmatpush1.msra.mxu0 %v3732
        %v3734 = vand.u32 %v3094, 4294901760
        %v3735 = vsub.f32 %v3094, %v3734
        %v3736 = vand.u32 %v3735, 4294901760
        %3737 = vmatprep.subr.mxu0 %v3736
        %v3738 = vand.u32 %v3093, 4294901760
        %v3739 = vsub.f32 %v3093, %v3738
        %v3740 = vand.u32 %v3739, 4294901760
        %3741 = vmatpush1.msra.mxu0 %v3740
        %v3742 = vand.u32 %v3098, 4294901760
        %v3743 = vsub.f32 %v3098, %v3742
        %v3744 = vand.u32 %v3743, 4294901760
        %3745 = vmatprep.subr.mxu0 %v3744
        %v3746 = vand.u32 %v3097, 4294901760
        %v3747 = vsub.f32 %v3097, %v3746
        %v3748 = vand.u32 %v3747, 4294901760
        %3749 = vmatpush1.msra.mxu0 %v3748
        %3750 = vmatprep.subr.mxu0 0.0
        %3751 = vmatpush1.msra.mxu0 0.0
        %3752 = vmatprep.subr.mxu0 0.0
        %3753 = vmatpush1.msra.mxu0 0.0
        %3754 = vmatprep.subr.mxu0 0.0
        %3755 = vmatpush1.msra.mxu0 0.0
        %3756 = vmatprep.subr.mxu0 0.0
        %3757 = vmatpush1.msra.mxu0 0.0
        %3758 = vmatprep.subr.mxu0 0.0
        %3759 = vmatpush1.msra.mxu0 0.0
        %3760 = vmatprep.subr.mxu0 0.0
        %3761 = vmatpush1.msra.mxu0 0.0
        %3762 = vmatprep.subr.mxu0 0.0
        %3763 = vmatpush1.msra.mxu0 0.0
        %3764 = vmatprep.subr.mxu0 0.0
        %3765 = vmatpush1.msra.mxu0 0.0
        %3766 = vmatprep.subr.mxu0 0.0
        %3767 = vmatpush1.msra.mxu0 0.0
        %3768 = vmatprep.subr.mxu0 0.0
        %3769 = vmatpush1.msra.mxu0 0.0
        %3770 = vmatprep.subr.mxu0 0.0
        %3771 = vmatpush1.msra.mxu0 0.0
        %3772 = vmatprep.subr.mxu0 0.0
        %3773 = vmatpush1.msra.mxu0 0.0
        %3774 = vmatprep.subr.mxu0 0.0
        %3775 = vmatpush1.msra.mxu0 0.0
        %3776 = vmatprep.subr.mxu0 0.0
        %3777 = vmatpush1.msra.mxu0 0.0
        %3778 = vmatprep.subr.mxu0 0.0
        %3779 = vmatpush1.msra.mxu0 0.0
        %3780 = vmatprep.subr.mxu0 0.0
        %3781 = vmatpush1.msra.mxu0 0.0
        %3782 = vmatprep.subr.mxu0 0.0
        %3783 = vmatpush1.msra.mxu0 0.0
        %3784 = vmatprep.subr.mxu0 0.0
        %3785 = vmatpush1.msra.mxu0 0.0
        %3786 = vmatprep.subr.mxu0 0.0
        %3787 = vmatpush1.msra.mxu0 0.0
        %3788 = vmatprep.subr.mxu0 0.0
        %3789 = vmatpush1.msra.mxu0 0.0
        %3790 = vmatprep.subr.mxu0 0.0
        %3791 = vmatpush1.msra.mxu0 0.0
        %3792 = vmatprep.subr.mxu0 0.0
        %3793 = vmatpush1.msra.mxu0 0.0
        %3794 = vmatprep.subr.mxu0 0.0
        %3795 = vmatpush1.msra.mxu0 0.0
        %3796 = vmatprep.subr.mxu0 0.0
        %3797 = vmatpush1.msra.mxu0 0.0
        %3798 = vmatprep.mubr.f32.mxu0 0.0
        %v3799 = vand.u32 %v3131, 4294901760
        %3800 = vmatmul.mubr.f32.gmra.mrb[0].mxu0 %v3799
        %v3801 = vpop.f32.mrb[0].mxu0
        %v3802 = vadd.f32 %v3655, %v3801
        %v3803 = vpop.f32.mrb[0].mxu0
        %v3804 = vadd.f32 %v3657, %v3803
        %3805 = vmatprep.mubr.f32.mxu0 0.0
        %v3806 = vand.u32 %v3134, 4294901760
        %3807 = vmatmul.mubr.f32.gmra.mrb[0].mxu0 %v3806
        %v3808 = vpop.f32.mrb[0].mxu0
        %v3809 = vadd.f32 %v3664, %v3808
        %v3810 = vpop.f32.mrb[0].mxu0
        %v3811 = vadd.f32 %v3666, %v3810
        %3812 = vmatprep.mubr.f32.mxu0 0.0
        %v3813 = vand.u32 %v3137, 4294901760
        %3814 = vmatmul.mubr.f32.gmra.mrb[0].mxu0 %v3813
        %v3815 = vpop.f32.mrb[0].mxu0
        %v3816 = vadd.f32 %v3673, %v3815
        %v3817 = vpop.f32.mrb[0].mxu0
        %v3818 = vadd.f32 %v3675, %v3817
        %3819 = vmatprep.mubr.f32.mxu0 0.0
        %v3820 = vand.u32 %v3140, 4294901760
        %3821 = vmatmul.mubr.f32.gmra.mrb[0].mxu0 %v3820
        %v3822 = vpop.f32.mrb[0].mxu0
        %v3823 = vadd.f32 %v3682, %v3822
        %v3824 = vpop.f32.mrb[0].mxu0
        %v3825 = vadd.f32 %v3684, %v3824
        %3826 = vdwg.mxu0
        %v3827 = vand.u32 %v3070, 4294901760
        %3828 = vmatprep.subr.mxu0 %v3827
        %v3829 = vand.u32 %v3069, 4294901760
        %3830 = vmatpush1.msra.mxu0 %v3829
        %v3831 = vand.u32 %v3074, 4294901760
        %3832 = vmatprep.subr.mxu0 %v3831
        %v3833 = vand.u32 %v3073, 4294901760
        %3834 = vmatpush1.msra.mxu0 %v3833
        %v3835 = vand.u32 %v3078, 4294901760
        %3836 = vmatprep.subr.mxu0 %v3835
        %v3837 = vand.u32 %v3077, 4294901760
        %3838 = vmatpush1.msra.mxu0 %v3837
        %v3839 = vand.u32 %v3082, 4294901760
        %3840 = vmatprep.subr.mxu0 %v3839
        %v3841 = vand.u32 %v3081, 4294901760
        %3842 = vmatpush1.msra.mxu0 %v3841
        %v3843 = vand.u32 %v3086, 4294901760
        %3844 = vmatprep.subr.mxu0 %v3843
        %v3845 = vand.u32 %v3085, 4294901760
        %3846 = vmatpush1.msra.mxu0 %v3845
        %v3847 = vand.u32 %v3090, 4294901760
        %3848 = vmatprep.subr.mxu0 %v3847
        %v3849 = vand.u32 %v3089, 4294901760
        %3850 = vmatpush1.msra.mxu0 %v3849
        %v3851 = vand.u32 %v3094, 4294901760
        %3852 = vmatprep.subr.mxu0 %v3851
        %v3853 = vand.u32 %v3093, 4294901760
        %3854 = vmatpush1.msra.mxu0 %v3853
        %v3855 = vand.u32 %v3098, 4294901760
        %3856 = vmatprep.subr.mxu0 %v3855
        %v3857 = vand.u32 %v3097, 4294901760
        %3858 = vmatpush1.msra.mxu0 %v3857
        %3859 = vmatprep.subr.mxu0 0.0
        %3860 = vmatpush1.msra.mxu0 0.0
        %3861 = vmatprep.subr.mxu0 0.0
        %3862 = vmatpush1.msra.mxu0 0.0
        %3863 = vmatprep.subr.mxu0 0.0
        %3864 = vmatpush1.msra.mxu0 0.0
        %3865 = vmatprep.subr.mxu0 0.0
        %3866 = vmatpush1.msra.mxu0 0.0
        %3867 = vmatprep.subr.mxu0 0.0
        %3868 = vmatpush1.msra.mxu0 0.0
        %3869 = vmatprep.subr.mxu0 0.0
        %3870 = vmatpush1.msra.mxu0 0.0
        %3871 = vmatprep.subr.mxu0 0.0
        %3872 = vmatpush1.msra.mxu0 0.0
        %3873 = vmatprep.subr.mxu0 0.0
        %3874 = vmatpush1.msra.mxu0 0.0
        %3875 = vmatprep.subr.mxu0 0.0
        %3876 = vmatpush1.msra.mxu0 0.0
        %3877 = vmatprep.subr.mxu0 0.0
        %3878 = vmatpush1.msra.mxu0 0.0
        %3879 = vmatprep.subr.mxu0 0.0
        %3880 = vmatpush1.msra.mxu0 0.0
        %3881 = vmatprep.subr.mxu0 0.0
        %3882 = vmatpush1.msra.mxu0 0.0
        %3883 = vmatprep.subr.mxu0 0.0
        %3884 = vmatpush1.msra.mxu0 0.0
        %3885 = vmatprep.subr.mxu0 0.0
        %3886 = vmatpush1.msra.mxu0 0.0
        %3887 = vmatprep.subr.mxu0 0.0
        %3888 = vmatpush1.msra.mxu0 0.0
        %3889 = vmatprep.subr.mxu0 0.0
        %3890 = vmatpush1.msra.mxu0 0.0
        %3891 = vmatprep.subr.mxu0 0.0
        %3892 = vmatpush1.msra.mxu0 0.0
        %3893 = vmatprep.subr.mxu0 0.0
        %3894 = vmatpush1.msra.mxu0 0.0
        %3895 = vmatprep.subr.mxu0 0.0
        %3896 = vmatpush1.msra.mxu0 0.0
        %3897 = vmatprep.subr.mxu0 0.0
        %3898 = vmatpush1.msra.mxu0 0.0
        %3899 = vmatprep.subr.mxu0 0.0
        %3900 = vmatpush1.msra.mxu0 0.0
        %3901 = vmatprep.subr.mxu0 0.0
        %3902 = vmatpush1.msra.mxu0 0.0
        %3903 = vmatprep.subr.mxu0 0.0
        %3904 = vmatpush1.msra.mxu0 0.0
        %3905 = vmatprep.subr.mxu0 0.0
        %3906 = vmatpush1.msra.mxu0 0.0
        %3907 = vmatprep.mubr.f32.mxu0 0.0
        %v3908 = vand.u32 %v3131, 4294901760
        %3909 = vmatmul.mubr.f32.gmra.mrb[0].mxu0 %v3908
        %v3910 = vpop.f32.mrb[0].mxu0
        %v3911 = vadd.f32 %v3802, %v3910
        %v3912 = vpop.f32.mrb[0].mxu0
        %v3913 = vadd.f32 %v3804, %v3912
        %3914 = vmatprep.mubr.f32.mxu0 0.0
        %v3915 = vand.u32 %v3134, 4294901760
        %3916 = vmatmul.mubr.f32.gmra.mrb[0].mxu0 %v3915
        %v3917 = vpop.f32.mrb[0].mxu0
        %v3918 = vadd.f32 %v3809, %v3917
        %v3919 = vpop.f32.mrb[0].mxu0
        %v3920 = vadd.f32 %v3811, %v3919
        %3921 = vmatprep.mubr.f32.mxu0 0.0
        %v3922 = vand.u32 %v3137, 4294901760
        %3923 = vmatmul.mubr.f32.gmra.mrb[0].mxu0 %v3922
        %v3924 = vpop.f32.mrb[0].mxu0
        %v3925 = vadd.f32 %v3816, %v3924
        %v3926 = vpop.f32.mrb[0].mxu0
        %v3927 = vadd.f32 %v3818, %v3926
        %3928 = vmatprep.mubr.f32.mxu0 0.0
        %v3929 = vand.u32 %v3140, 4294901760
        %3930 = vmatmul.mubr.f32.gmra.mrb[0].mxu0 %v3929
        %v3931 = vpop.f32.mrb[0].mxu0
        %v3932 = vadd.f32 %v3823, %v3931
        %v3933 = vpop.f32.mrb[0].mxu0
        %v3934 = vadd.f32 %v3825, %v3933
        %3935 = vdwg.mxu0
        %v3936 = vand.u32 %v3072, 4294901760
        %3937 = vmatprep.subr.mxu0 %v3936
        %v3938 = vand.u32 %v3071, 4294901760
        %3939 = vmatpush1.msra.mxu0 %v3938
        %v3940 = vand.u32 %v3076, 4294901760
        %3941 = vmatprep.subr.mxu0 %v3940
        %v3942 = vand.u32 %v3075, 4294901760
        %3943 = vmatpush1.msra.mxu0 %v3942
        %v3944 = vand.u32 %v3080, 4294901760
        %3945 = vmatprep.subr.mxu0 %v3944
        %v3946 = vand.u32 %v3079, 4294901760
        %3947 = vmatpush1.msra.mxu0 %v3946
        %v3948 = vand.u32 %v3084, 4294901760
        %3949 = vmatprep.subr.mxu0 %v3948
        %v3950 = vand.u32 %v3083, 4294901760
        %3951 = vmatpush1.msra.mxu0 %v3950
        %v3952 = vand.u32 %v3088, 4294901760
        %3953 = vmatprep.subr.mxu0 %v3952
        %v3954 = vand.u32 %v3087, 4294901760
        %3955 = vmatpush1.msra.mxu0 %v3954
        %v3956 = vand.u32 %v3092, 4294901760
        %3957 = vmatprep.subr.mxu0 %v3956
        %v3958 = vand.u32 %v3091, 4294901760
        %3959 = vmatpush1.msra.mxu0 %v3958
        %v3960 = vand.u32 %v3096, 4294901760
        %3961 = vmatprep.subr.mxu0 %v3960
        %v3962 = vand.u32 %v3095, 4294901760
        %3963 = vmatpush1.msra.mxu0 %v3962
        %v3964 = vand.u32 %v3100, 4294901760
        %3965 = vmatprep.subr.mxu0 %v3964
        %v3966 = vand.u32 %v3099, 4294901760
        %3967 = vmatpush1.msra.mxu0 %v3966
        %3968 = vmatprep.subr.mxu0 0.0
        %3969 = vmatpush1.msra.mxu0 0.0
        %3970 = vmatprep.subr.mxu0 0.0
        %3971 = vmatpush1.msra.mxu0 0.0
        %3972 = vmatprep.subr.mxu0 0.0
        %3973 = vmatpush1.msra.mxu0 0.0
        %3974 = vmatprep.subr.mxu0 0.0
        %3975 = vmatpush1.msra.mxu0 0.0
        %3976 = vmatprep.subr.mxu0 0.0
        %3977 = vmatpush1.msra.mxu0 0.0
        %3978 = vmatprep.subr.mxu0 0.0
        %3979 = vmatpush1.msra.mxu0 0.0
        %3980 = vmatprep.subr.mxu0 0.0
        %3981 = vmatpush1.msra.mxu0 0.0
        %3982 = vmatprep.subr.mxu0 0.0
        %3983 = vmatpush1.msra.mxu0 0.0
        %3984 = vmatprep.subr.mxu0 0.0
        %3985 = vmatpush1.msra.mxu0 0.0
        %3986 = vmatprep.subr.mxu0 0.0
        %3987 = vmatpush1.msra.mxu0 0.0
        %3988 = vmatprep.subr.mxu0 0.0
        %3989 = vmatpush1.msra.mxu0 0.0
        %3990 = vmatprep.subr.mxu0 0.0
        %3991 = vmatpush1.msra.mxu0 0.0
        %3992 = vmatprep.subr.mxu0 0.0
        %3993 = vmatpush1.msra.mxu0 0.0
        %3994 = vmatprep.subr.mxu0 0.0
        %3995 = vmatpush1.msra.mxu0 0.0
        %3996 = vmatprep.subr.mxu0 0.0
        %3997 = vmatpush1.msra.mxu0 0.0
        %3998 = vmatprep.subr.mxu0 0.0
        %3999 = vmatpush1.msra.mxu0 0.0
        %4000 = vmatprep.subr.mxu0 0.0
        %4001 = vmatpush1.msra.mxu0 0.0
        %4002 = vmatprep.subr.mxu0 0.0
        %4003 = vmatpush1.msra.mxu0 0.0
        %4004 = vmatprep.subr.mxu0 0.0
        %4005 = vmatpush1.msra.mxu0 0.0
        %4006 = vmatprep.subr.mxu0 0.0
        %4007 = vmatpush1.msra.mxu0 0.0
        %4008 = vmatprep.subr.mxu0 0.0
        %4009 = vmatpush1.msra.mxu0 0.0
        %4010 = vmatprep.subr.mxu0 0.0
        %4011 = vmatpush1.msra.mxu0 0.0
        %4012 = vmatprep.subr.mxu0 0.0
        %4013 = vmatpush1.msra.mxu0 0.0
        %4014 = vmatprep.subr.mxu0 0.0
        %4015 = vmatpush1.msra.mxu0 0.0
        %4016 = vmatprep.mubr.f32.mxu0 0.0
        %v4017 = vand.u32 %v3131, 4294901760
        %v4018 = vsub.f32 %v3131, %v4017
        %v4019 = vand.u32 %v4018, 4294901760
        %v4020 = vsub.f32 %v4018, %v4019
        %v4021 = vand.u32 %v4020, 4294901760
        %4022 = vmatmul.mubr.f32.gmra.mrb[0].mxu0 %v4021
        %v4023 = vpop.f32.mrb[0].mxu0
        %v4024 = vadd.f32 %v3112, %v4023
        %v4025 = vpop.f32.mrb[0].mxu0
        %v4026 = vadd.f32 %v3112, %v4025
        %4027 = vmatprep.mubr.f32.mxu0 0.0
        %v4028 = vand.u32 %v3134, 4294901760
        %v4029 = vsub.f32 %v3134, %v4028
        %v4030 = vand.u32 %v4029, 4294901760
        %v4031 = vsub.f32 %v4029, %v4030
        %v4032 = vand.u32 %v4031, 4294901760
        %4033 = vmatmul.mubr.f32.gmra.mrb[0].mxu0 %v4032
        %v4034 = vpop.f32.mrb[0].mxu0
        %v4035 = vadd.f32 %v3117, %v4034
        %v4036 = vpop.f32.mrb[0].mxu0
        %v4037 = vadd.f32 %v3117, %v4036
        %4038 = vmatprep.mubr.f32.mxu0 0.0
        %v4039 = vand.u32 %v3137, 4294901760
        %v4040 = vsub.f32 %v3137, %v4039
        %v4041 = vand.u32 %v4040, 4294901760
        %v4042 = vsub.f32 %v4040, %v4041
        %v4043 = vand.u32 %v4042, 4294901760
        %4044 = vmatmul.mubr.f32.gmra.mrb[0].mxu0 %v4043
        %v4045 = vpop.f32.mrb[0].mxu0
        %v4046 = vadd.f32 %v3122, %v4045
        %v4047 = vpop.f32.mrb[0].mxu0
        %v4048 = vadd.f32 %v3122, %v4047
        %4049 = vmatprep.mubr.f32.mxu0 0.0
        %v4050 = vand.u32 %v3140, 4294901760
        %v4051 = vsub.f32 %v3140, %v4050
        %v4052 = vand.u32 %v4051, 4294901760
        %v4053 = vsub.f32 %v4051, %v4052
        %v4054 = vand.u32 %v4053, 4294901760
        %4055 = vmatmul.mubr.f32.gmra.mrb[0].mxu0 %v4054
        %v4056 = vpop.f32.mrb[0].mxu0
        %v4057 = vadd.f32 %v3127, %v4056
        %v4058 = vpop.f32.mrb[0].mxu0
        %v4059 = vadd.f32 %v3127, %v4058
        %4060 = vdwg.mxu0
        %v4061 = vand.u32 %v3072, 4294901760
        %v4062 = vsub.f32 %v3072, %v4061
        %v4063 = vand.u32 %v4062, 4294901760
        %v4064 = vsub.f32 %v4062, %v4063
        %v4065 = vand.u32 %v4064, 4294901760
        %4066 = vmatprep.subr.mxu0 %v4065
        %v4067 = vand.u32 %v3071, 4294901760
        %v4068 = vsub.f32 %v3071, %v4067
        %v4069 = vand.u32 %v4068, 4294901760
        %v4070 = vsub.f32 %v4068, %v4069
        %v4071 = vand.u32 %v4070, 4294901760
        %4072 = vmatpush1.msra.mxu0 %v4071
        %v4073 = vand.u32 %v3076, 4294901760
        %v4074 = vsub.f32 %v3076, %v4073
        %v4075 = vand.u32 %v4074, 4294901760
        %v4076 = vsub.f32 %v4074, %v4075
        %v4077 = vand.u32 %v4076, 4294901760
        %4078 = vmatprep.subr.mxu0 %v4077
        %v4079 = vand.u32 %v3075, 4294901760
        %v4080 = vsub.f32 %v3075, %v4079
        %v4081 = vand.u32 %v4080, 4294901760
        %v4082 = vsub.f32 %v4080, %v4081
        %v4083 = vand.u32 %v4082, 4294901760
        %4084 = vmatpush1.msra.mxu0 %v4083
        %v4085 = vand.u32 %v3080, 4294901760
        %v4086 = vsub.f32 %v3080, %v4085
        %v4087 = vand.u32 %v4086, 4294901760
        %v4088 = vsub.f32 %v4086, %v4087
        %v4089 = vand.u32 %v4088, 4294901760
        %4090 = vmatprep.subr.mxu0 %v4089
        %v4091 = vand.u32 %v3079, 4294901760
        %v4092 = vsub.f32 %v3079, %v4091
        %v4093 = vand.u32 %v4092, 4294901760
        %v4094 = vsub.f32 %v4092, %v4093
        %v4095 = vand.u32 %v4094, 4294901760
        %4096 = vmatpush1.msra.mxu0 %v4095
        %v4097 = vand.u32 %v3084, 4294901760
        %v4098 = vsub.f32 %v3084, %v4097
        %v4099 = vand.u32 %v4098, 4294901760
        %v4100 = vsub.f32 %v4098, %v4099
        %v4101 = vand.u32 %v4100, 4294901760
        %4102 = vmatprep.subr.mxu0 %v4101
        %v4103 = vand.u32 %v3083, 4294901760
        %v4104 = vsub.f32 %v3083, %v4103
        %v4105 = vand.u32 %v4104, 4294901760
        %v4106 = vsub.f32 %v4104, %v4105
        %v4107 = vand.u32 %v4106, 4294901760
        %4108 = vmatpush1.msra.mxu0 %v4107
        %v4109 = vand.u32 %v3088, 4294901760
        %v4110 = vsub.f32 %v3088, %v4109
        %v4111 = vand.u32 %v4110, 4294901760
        %v4112 = vsub.f32 %v4110, %v4111
        %v4113 = vand.u32 %v4112, 4294901760
        %4114 = vmatprep.subr.mxu0 %v4113
        %v4115 = vand.u32 %v3087, 4294901760
        %v4116 = vsub.f32 %v3087, %v4115
        %v4117 = vand.u32 %v4116, 4294901760
        %v4118 = vsub.f32 %v4116, %v4117
        %v4119 = vand.u32 %v4118, 4294901760
        %4120 = vmatpush1.msra.mxu0 %v4119
        %v4121 = vand.u32 %v3092, 4294901760
        %v4122 = vsub.f32 %v3092, %v4121
        %v4123 = vand.u32 %v4122, 4294901760
        %v4124 = vsub.f32 %v4122, %v4123
        %v4125 = vand.u32 %v4124, 4294901760
        %4126 = vmatprep.subr.mxu0 %v4125
        %v4127 = vand.u32 %v3091, 4294901760
        %v4128 = vsub.f32 %v3091, %v4127
        %v4129 = vand.u32 %v4128, 4294901760
        %v4130 = vsub.f32 %v4128, %v4129
        %v4131 = vand.u32 %v4130, 4294901760
        %4132 = vmatpush1.msra.mxu0 %v4131
        %v4133 = vand.u32 %v3096, 4294901760
        %v4134 = vsub.f32 %v3096, %v4133
        %v4135 = vand.u32 %v4134, 4294901760
        %v4136 = vsub.f32 %v4134, %v4135
        %v4137 = vand.u32 %v4136, 4294901760
        %4138 = vmatprep.subr.mxu0 %v4137
        %v4139 = vand.u32 %v3095, 4294901760
        %v4140 = vsub.f32 %v3095, %v4139
        %v4141 = vand.u32 %v4140, 4294901760
        %v4142 = vsub.f32 %v4140, %v4141
        %v4143 = vand.u32 %v4142, 4294901760
        %4144 = vmatpush1.msra.mxu0 %v4143
        %v4145 = vand.u32 %v3100, 4294901760
        %v4146 = vsub.f32 %v3100, %v4145
        %v4147 = vand.u32 %v4146, 4294901760
        %v4148 = vsub.f32 %v4146, %v4147
        %v4149 = vand.u32 %v4148, 4294901760
        %4150 = vmatprep.subr.mxu0 %v4149
        %v4151 = vand.u32 %v3099, 4294901760
        %v4152 = vsub.f32 %v3099, %v4151
        %v4153 = vand.u32 %v4152, 4294901760
        %v4154 = vsub.f32 %v4152, %v4153
        %v4155 = vand.u32 %v4154, 4294901760
        %4156 = vmatpush1.msra.mxu0 %v4155
        %4157 = vmatprep.subr.mxu0 0.0
        %4158 = vmatpush1.msra.mxu0 0.0
        %4159 = vmatprep.subr.mxu0 0.0
        %4160 = vmatpush1.msra.mxu0 0.0
        %4161 = vmatprep.subr.mxu0 0.0
        %4162 = vmatpush1.msra.mxu0 0.0
        %4163 = vmatprep.subr.mxu0 0.0
        %4164 = vmatpush1.msra.mxu0 0.0
        %4165 = vmatprep.subr.mxu0 0.0
        %4166 = vmatpush1.msra.mxu0 0.0
        %4167 = vmatprep.subr.mxu0 0.0
        %4168 = vmatpush1.msra.mxu0 0.0
        %4169 = vmatprep.subr.mxu0 0.0
        %4170 = vmatpush1.msra.mxu0 0.0
        %4171 = vmatprep.subr.mxu0 0.0
        %4172 = vmatpush1.msra.mxu0 0.0
        %4173 = vmatprep.subr.mxu0 0.0
        %4174 = vmatpush1.msra.mxu0 0.0
        %4175 = vmatprep.subr.mxu0 0.0
        %4176 = vmatpush1.msra.mxu0 0.0
        %4177 = vmatprep.subr.mxu0 0.0
        %4178 = vmatpush1.msra.mxu0 0.0
        %4179 = vmatprep.subr.mxu0 0.0
        %4180 = vmatpush1.msra.mxu0 0.0
        %4181 = vmatprep.subr.mxu0 0.0
        %4182 = vmatpush1.msra.mxu0 0.0
        %4183 = vmatprep.subr.mxu0 0.0
        %4184 = vmatpush1.msra.mxu0 0.0
        %4185 = vmatprep.subr.mxu0 0.0
        %4186 = vmatpush1.msra.mxu0 0.0
        %4187 = vmatprep.subr.mxu0 0.0
        %4188 = vmatpush1.msra.mxu0 0.0
        %4189 = vmatprep.subr.mxu0 0.0
        %4190 = vmatpush1.msra.mxu0 0.0
        %4191 = vmatprep.subr.mxu0 0.0
        %4192 = vmatpush1.msra.mxu0 0.0
        %4193 = vmatprep.subr.mxu0 0.0
        %4194 = vmatpush1.msra.mxu0 0.0
        %4195 = vmatprep.subr.mxu0 0.0
        %4196 = vmatpush1.msra.mxu0 0.0
        %4197 = vmatprep.subr.mxu0 0.0
        %4198 = vmatpush1.msra.mxu0 0.0
        %4199 = vmatprep.subr.mxu0 0.0
        %4200 = vmatpush1.msra.mxu0 0.0
        %4201 = vmatprep.subr.mxu0 0.0
        %4202 = vmatpush1.msra.mxu0 0.0
        %4203 = vmatprep.subr.mxu0 0.0
        %4204 = vmatpush1.msra.mxu0 0.0
        %4205 = vmatprep.mubr.f32.mxu0 0.0
        %v4206 = vand.u32 %v3131, 4294901760
        %4207 = vmatmul.mubr.f32.gmra.mrb[0].mxu0 %v4206
        %v4208 = vpop.f32.mrb[0].mxu0
        %v4209 = vadd.f32 %v4024, %v4208
        %v4210 = vpop.f32.mrb[0].mxu0
        %v4211 = vadd.f32 %v4026, %v4210
        %4212 = vmatprep.mubr.f32.mxu0 0.0
        %v4213 = vand.u32 %v3134, 4294901760
        %4214 = vmatmul.mubr.f32.gmra.mrb[0].mxu0 %v4213
        %v4215 = vpop.f32.mrb[0].mxu0
        %v4216 = vadd.f32 %v4035, %v4215
        %v4217 = vpop.f32.mrb[0].mxu0
        %v4218 = vadd.f32 %v4037, %v4217
        %4219 = vmatprep.mubr.f32.mxu0 0.0
        %v4220 = vand.u32 %v3137, 4294901760
        %4221 = vmatmul.mubr.f32.gmra.mrb[0].mxu0 %v4220
        %v4222 = vpop.f32.mrb[0].mxu0
        %v4223 = vadd.f32 %v4046, %v4222
        %v4224 = vpop.f32.mrb[0].mxu0
        %v4225 = vadd.f32 %v4048, %v4224
        %4226 = vmatprep.mubr.f32.mxu0 0.0
        %v4227 = vand.u32 %v3140, 4294901760
        %4228 = vmatmul.mubr.f32.gmra.mrb[0].mxu0 %v4227
        %v4229 = vpop.f32.mrb[0].mxu0
        %v4230 = vadd.f32 %v4057, %v4229
        %v4231 = vpop.f32.mrb[0].mxu0
        %v4232 = vadd.f32 %v4059, %v4231
        %4233 = vdwg.mxu0
        %v4234 = vand.u32 %v3072, 4294901760
        %v4235 = vsub.f32 %v3072, %v4234
        %4236 = vmatprep.subr.mxu0 %v4235
        %v4237 = vand.u32 %v3071, 4294901760
        %v4238 = vsub.f32 %v3071, %v4237
        %4239 = vmatpush1.msra.mxu0 %v4238
        %v4240 = vand.u32 %v3076, 4294901760
        %v4241 = vsub.f32 %v3076, %v4240
        %4242 = vmatprep.subr.mxu0 %v4241
        %v4243 = vand.u32 %v3075, 4294901760
        %v4244 = vsub.f32 %v3075, %v4243
        %4245 = vmatpush1.msra.mxu0 %v4244
        %v4246 = vand.u32 %v3080, 4294901760
        %v4247 = vsub.f32 %v3080, %v4246
        %4248 = vmatprep.subr.mxu0 %v4247
        %v4249 = vand.u32 %v3079, 4294901760
        %v4250 = vsub.f32 %v3079, %v4249
        %4251 = vmatpush1.msra.mxu0 %v4250
        %v4252 = vand.u32 %v3084, 4294901760
        %v4253 = vsub.f32 %v3084, %v4252
        %4254 = vmatprep.subr.mxu0 %v4253
        %v4255 = vand.u32 %v3083, 4294901760
        %v4256 = vsub.f32 %v3083, %v4255
        %4257 = vmatpush1.msra.mxu0 %v4256
        %v4258 = vand.u32 %v3088, 4294901760
        %v4259 = vsub.f32 %v3088, %v4258
        %4260 = vmatprep.subr.mxu0 %v4259
        %v4261 = vand.u32 %v3087, 4294901760
        %v4262 = vsub.f32 %v3087, %v4261
        %4263 = vmatpush1.msra.mxu0 %v4262
        %v4264 = vand.u32 %v3092, 4294901760
        %v4265 = vsub.f32 %v3092, %v4264
        %4266 = vmatprep.subr.mxu0 %v4265
        %v4267 = vand.u32 %v3091, 4294901760
        %v4268 = vsub.f32 %v3091, %v4267
        %4269 = vmatpush1.msra.mxu0 %v4268
        %v4270 = vand.u32 %v3096, 4294901760
        %v4271 = vsub.f32 %v3096, %v4270
        %4272 = vmatprep.subr.mxu0 %v4271
        %v4273 = vand.u32 %v3095, 4294901760
        %v4274 = vsub.f32 %v3095, %v4273
        %4275 = vmatpush1.msra.mxu0 %v4274
        %v4276 = vand.u32 %v3100, 4294901760
        %v4277 = vsub.f32 %v3100, %v4276
        %4278 = vmatprep.subr.mxu0 %v4277
        %v4279 = vand.u32 %v3099, 4294901760
        %v4280 = vsub.f32 %v3099, %v4279
        %4281 = vmatpush1.msra.mxu0 %v4280
        %4282 = vmatprep.subr.mxu0 0.0
        %4283 = vmatpush1.msra.mxu0 0.0
        %4284 = vmatprep.subr.mxu0 0.0
        %4285 = vmatpush1.msra.mxu0 0.0
        %4286 = vmatprep.subr.mxu0 0.0
        %4287 = vmatpush1.msra.mxu0 0.0
        %4288 = vmatprep.subr.mxu0 0.0
        %4289 = vmatpush1.msra.mxu0 0.0
        %4290 = vmatprep.subr.mxu0 0.0
        %4291 = vmatpush1.msra.mxu0 0.0
        %4292 = vmatprep.subr.mxu0 0.0
        %4293 = vmatpush1.msra.mxu0 0.0
        %4294 = vmatprep.subr.mxu0 0.0
        %4295 = vmatpush1.msra.mxu0 0.0
        %4296 = vmatprep.subr.mxu0 0.0
        %4297 = vmatpush1.msra.mxu0 0.0
        %4298 = vmatprep.subr.mxu0 0.0
        %4299 = vmatpush1.msra.mxu0 0.0
        %4300 = vmatprep.subr.mxu0 0.0
        %4301 = vmatpush1.msra.mxu0 0.0
        %4302 = vmatprep.subr.mxu0 0.0
        %4303 = vmatpush1.msra.mxu0 0.0
        %4304 = vmatprep.subr.mxu0 0.0
        %4305 = vmatpush1.msra.mxu0 0.0
        %4306 = vmatprep.subr.mxu0 0.0
        %4307 = vmatpush1.msra.mxu0 0.0
        %4308 = vmatprep.subr.mxu0 0.0
        %4309 = vmatpush1.msra.mxu0 0.0
        %4310 = vmatprep.subr.mxu0 0.0
        %4311 = vmatpush1.msra.mxu0 0.0
        %4312 = vmatprep.subr.mxu0 0.0
        %4313 = vmatpush1.msra.mxu0 0.0
        %4314 = vmatprep.subr.mxu0 0.0
        %4315 = vmatpush1.msra.mxu0 0.0
        %4316 = vmatprep.subr.mxu0 0.0
        %4317 = vmatpush1.msra.mxu0 0.0
        %4318 = vmatprep.subr.mxu0 0.0
        %4319 = vmatpush1.msra.mxu0 0.0
        %4320 = vmatprep.subr.mxu0 0.0
        %4321 = vmatpush1.msra.mxu0 0.0
        %4322 = vmatprep.subr.mxu0 0.0
        %4323 = vmatpush1.msra.mxu0 0.0
        %4324 = vmatprep.subr.mxu0 0.0
        %4325 = vmatpush1.msra.mxu0 0.0
        %4326 = vmatprep.subr.mxu0 0.0
        %4327 = vmatpush1.msra.mxu0 0.0
        %4328 = vmatprep.subr.mxu0 0.0
        %4329 = vmatpush1.msra.mxu0 0.0
        %4330 = vmatprep.mubr.f32.mxu0 0.0
        %v4331 = vand.u32 %v3131, 4294901760
        %v4332 = vsub.f32 %v3131, %v4331
        %4333 = vmatmul.mubr.f32.gmra.mrb[0].mxu0 %v4332
        %v4334 = vpop.f32.mrb[0].mxu0
        %v4335 = vadd.f32 %v4209, %v4334
        %v4336 = vpop.f32.mrb[0].mxu0
        %v4337 = vadd.f32 %v4211, %v4336
        %4338 = vmatprep.mubr.f32.mxu0 0.0
        %v4339 = vand.u32 %v3134, 4294901760
        %v4340 = vsub.f32 %v3134, %v4339
        %4341 = vmatmul.mubr.f32.gmra.mrb[0].mxu0 %v4340
        %v4342 = vpop.f32.mrb[0].mxu0
        %v4343 = vadd.f32 %v4216, %v4342
        %v4344 = vpop.f32.mrb[0].mxu0
        %v4345 = vadd.f32 %v4218, %v4344
        %4346 = vmatprep.mubr.f32.mxu0 0.0
        %v4347 = vand.u32 %v3137, 4294901760
        %v4348 = vsub.f32 %v3137, %v4347
        %4349 = vmatmul.mubr.f32.gmra.mrb[0].mxu0 %v4348
        %v4350 = vpop.f32.mrb[0].mxu0
        %v4351 = vadd.f32 %v4223, %v4350
        %v4352 = vpop.f32.mrb[0].mxu0
        %v4353 = vadd.f32 %v4225, %v4352
        %4354 = vmatprep.mubr.f32.mxu0 0.0
        %v4355 = vand.u32 %v3140, 4294901760
        %v4356 = vsub.f32 %v3140, %v4355
        %4357 = vmatmul.mubr.f32.gmra.mrb[0].mxu0 %v4356
        %v4358 = vpop.f32.mrb[0].mxu0
        %v4359 = vadd.f32 %v4230, %v4358
        %v4360 = vpop.f32.mrb[0].mxu0
        %v4361 = vadd.f32 %v4232, %v4360
        %4362 = vdwg.mxu0
        %v4363 = vand.u32 %v3072, 4294901760
        %4364 = vmatprep.subr.mxu0 %v4363
        %v4365 = vand.u32 %v3071, 4294901760
        %4366 = vmatpush1.msra.mxu0 %v4365
        %v4367 = vand.u32 %v3076, 4294901760
        %4368 = vmatprep.subr.mxu0 %v4367
        %v4369 = vand.u32 %v3075, 4294901760
        %4370 = vmatpush1.msra.mxu0 %v4369
        %v4371 = vand.u32 %v3080, 4294901760
        %4372 = vmatprep.subr.mxu0 %v4371
        %v4373 = vand.u32 %v3079, 4294901760
        %4374 = vmatpush1.msra.mxu0 %v4373
        %v4375 = vand.u32 %v3084, 4294901760
        %4376 = vmatprep.subr.mxu0 %v4375
        %v4377 = vand.u32 %v3083, 4294901760
        %4378 = vmatpush1.msra.mxu0 %v4377
        %v4379 = vand.u32 %v3088, 4294901760
        %4380 = vmatprep.subr.mxu0 %v4379
        %v4381 = vand.u32 %v3087, 4294901760
        %4382 = vmatpush1.msra.mxu0 %v4381
        %v4383 = vand.u32 %v3092, 4294901760
        %4384 = vmatprep.subr.mxu0 %v4383
        %v4385 = vand.u32 %v3091, 4294901760
        %4386 = vmatpush1.msra.mxu0 %v4385
        %v4387 = vand.u32 %v3096, 4294901760
        %4388 = vmatprep.subr.mxu0 %v4387
        %v4389 = vand.u32 %v3095, 4294901760
        %4390 = vmatpush1.msra.mxu0 %v4389
        %v4391 = vand.u32 %v3100, 4294901760
        %4392 = vmatprep.subr.mxu0 %v4391
        %v4393 = vand.u32 %v3099, 4294901760
        %4394 = vmatpush1.msra.mxu0 %v4393
        %4395 = vmatprep.subr.mxu0 0.0
        %4396 = vmatpush1.msra.mxu0 0.0
        %4397 = vmatprep.subr.mxu0 0.0
        %4398 = vmatpush1.msra.mxu0 0.0
        %4399 = vmatprep.subr.mxu0 0.0
        %4400 = vmatpush1.msra.mxu0 0.0
        %4401 = vmatprep.subr.mxu0 0.0
        %4402 = vmatpush1.msra.mxu0 0.0
        %4403 = vmatprep.subr.mxu0 0.0
        %4404 = vmatpush1.msra.mxu0 0.0
        %4405 = vmatprep.subr.mxu0 0.0
        %4406 = vmatpush1.msra.mxu0 0.0
        %4407 = vmatprep.subr.mxu0 0.0
        %4408 = vmatpush1.msra.mxu0 0.0
        %4409 = vmatprep.subr.mxu0 0.0
        %4410 = vmatpush1.msra.mxu0 0.0
        %4411 = vmatprep.subr.mxu0 0.0
        %4412 = vmatpush1.msra.mxu0 0.0
        %4413 = vmatprep.subr.mxu0 0.0
        %4414 = vmatpush1.msra.mxu0 0.0
        %4415 = vmatprep.subr.mxu0 0.0
        %4416 = vmatpush1.msra.mxu0 0.0
        %4417 = vmatprep.subr.mxu0 0.0
        %4418 = vmatpush1.msra.mxu0 0.0
        %4419 = vmatprep.subr.mxu0 0.0
        %4420 = vmatpush1.msra.mxu0 0.0
        %4421 = vmatprep.subr.mxu0 0.0
        %4422 = vmatpush1.msra.mxu0 0.0
        %4423 = vmatprep.subr.mxu0 0.0
        %4424 = vmatpush1.msra.mxu0 0.0
        %4425 = vmatprep.subr.mxu0 0.0
        %4426 = vmatpush1.msra.mxu0 0.0
        %4427 = vmatprep.subr.mxu0 0.0
        %4428 = vmatpush1.msra.mxu0 0.0
        %4429 = vmatprep.subr.mxu0 0.0
        %4430 = vmatpush1.msra.mxu0 0.0
        %4431 = vmatprep.subr.mxu0 0.0
        %4432 = vmatpush1.msra.mxu0 0.0
        %4433 = vmatprep.subr.mxu0 0.0
        %4434 = vmatpush1.msra.mxu0 0.0
        %4435 = vmatprep.subr.mxu0 0.0
        %4436 = vmatpush1.msra.mxu0 0.0
        %4437 = vmatprep.subr.mxu0 0.0
        %4438 = vmatpush1.msra.mxu0 0.0
        %4439 = vmatprep.subr.mxu0 0.0
        %4440 = vmatpush1.msra.mxu0 0.0
        %4441 = vmatprep.subr.mxu0 0.0
        %4442 = vmatpush1.msra.mxu0 0.0
        %4443 = vmatprep.mubr.f32.mxu0 0.0
        %v4444 = vand.u32 %v3131, 4294901760
        %v4445 = vsub.f32 %v3131, %v4444
        %v4446 = vand.u32 %v4445, 4294901760
        %4447 = vmatmul.mubr.f32.gmra.mrb[0].mxu0 %v4446
        %v4448 = vpop.f32.mrb[0].mxu0
        %v4449 = vadd.f32 %v4335, %v4448
        %v4450 = vpop.f32.mrb[0].mxu0
        %v4451 = vadd.f32 %v4337, %v4450
        %4452 = vmatprep.mubr.f32.mxu0 0.0
        %v4453 = vand.u32 %v3134, 4294901760
        %v4454 = vsub.f32 %v3134, %v4453
        %v4455 = vand.u32 %v4454, 4294901760
        %4456 = vmatmul.mubr.f32.gmra.mrb[0].mxu0 %v4455
        %v4457 = vpop.f32.mrb[0].mxu0
        %v4458 = vadd.f32 %v4343, %v4457
        %v4459 = vpop.f32.mrb[0].mxu0
        %v4460 = vadd.f32 %v4345, %v4459
        %4461 = vmatprep.mubr.f32.mxu0 0.0
        %v4462 = vand.u32 %v3137, 4294901760
        %v4463 = vsub.f32 %v3137, %v4462
        %v4464 = vand.u32 %v4463, 4294901760
        %4465 = vmatmul.mubr.f32.gmra.mrb[0].mxu0 %v4464
        %v4466 = vpop.f32.mrb[0].mxu0
        %v4467 = vadd.f32 %v4351, %v4466
        %v4468 = vpop.f32.mrb[0].mxu0
        %v4469 = vadd.f32 %v4353, %v4468
        %4470 = vmatprep.mubr.f32.mxu0 0.0
        %v4471 = vand.u32 %v3140, 4294901760
        %v4472 = vsub.f32 %v3140, %v4471
        %v4473 = vand.u32 %v4472, 4294901760
        %4474 = vmatmul.mubr.f32.gmra.mrb[0].mxu0 %v4473
        %v4475 = vpop.f32.mrb[0].mxu0
        %v4476 = vadd.f32 %v4359, %v4475
        %v4477 = vpop.f32.mrb[0].mxu0
        %v4478 = vadd.f32 %v4361, %v4477
        %4479 = vdwg.mxu0
        %v4480 = vand.u32 %v3072, 4294901760
        %v4481 = vsub.f32 %v3072, %v4480
        %v4482 = vand.u32 %v4481, 4294901760
        %4483 = vmatprep.subr.mxu0 %v4482
        %v4484 = vand.u32 %v3071, 4294901760
        %v4485 = vsub.f32 %v3071, %v4484
        %v4486 = vand.u32 %v4485, 4294901760
        %4487 = vmatpush1.msra.mxu0 %v4486
        %v4488 = vand.u32 %v3076, 4294901760
        %v4489 = vsub.f32 %v3076, %v4488
        %v4490 = vand.u32 %v4489, 4294901760
        %4491 = vmatprep.subr.mxu0 %v4490
        %v4492 = vand.u32 %v3075, 4294901760
        %v4493 = vsub.f32 %v3075, %v4492
        %v4494 = vand.u32 %v4493, 4294901760
        %4495 = vmatpush1.msra.mxu0 %v4494
        %v4496 = vand.u32 %v3080, 4294901760
        %v4497 = vsub.f32 %v3080, %v4496
        %v4498 = vand.u32 %v4497, 4294901760
        %4499 = vmatprep.subr.mxu0 %v4498
        %v4500 = vand.u32 %v3079, 4294901760
        %v4501 = vsub.f32 %v3079, %v4500
        %v4502 = vand.u32 %v4501, 4294901760
        %4503 = vmatpush1.msra.mxu0 %v4502
        %v4504 = vand.u32 %v3084, 4294901760
        %v4505 = vsub.f32 %v3084, %v4504
        %v4506 = vand.u32 %v4505, 4294901760
        %4507 = vmatprep.subr.mxu0 %v4506
        %v4508 = vand.u32 %v3083, 4294901760
        %v4509 = vsub.f32 %v3083, %v4508
        %v4510 = vand.u32 %v4509, 4294901760
        %4511 = vmatpush1.msra.mxu0 %v4510
        %v4512 = vand.u32 %v3088, 4294901760
        %v4513 = vsub.f32 %v3088, %v4512
        %v4514 = vand.u32 %v4513, 4294901760
        %4515 = vmatprep.subr.mxu0 %v4514
        %v4516 = vand.u32 %v3087, 4294901760
        %v4517 = vsub.f32 %v3087, %v4516
        %v4518 = vand.u32 %v4517, 4294901760
        %4519 = vmatpush1.msra.mxu0 %v4518
        %v4520 = vand.u32 %v3092, 4294901760
        %v4521 = vsub.f32 %v3092, %v4520
        %v4522 = vand.u32 %v4521, 4294901760
        %4523 = vmatprep.subr.mxu0 %v4522
        %v4524 = vand.u32 %v3091, 4294901760
        %v4525 = vsub.f32 %v3091, %v4524
        %v4526 = vand.u32 %v4525, 4294901760
        %4527 = vmatpush1.msra.mxu0 %v4526
        %v4528 = vand.u32 %v3096, 4294901760
        %v4529 = vsub.f32 %v3096, %v4528
        %v4530 = vand.u32 %v4529, 4294901760
        %4531 = vmatprep.subr.mxu0 %v4530
        %v4532 = vand.u32 %v3095, 4294901760
        %v4533 = vsub.f32 %v3095, %v4532
        %v4534 = vand.u32 %v4533, 4294901760
        %4535 = vmatpush1.msra.mxu0 %v4534
        %v4536 = vand.u32 %v3100, 4294901760
        %v4537 = vsub.f32 %v3100, %v4536
        %v4538 = vand.u32 %v4537, 4294901760
        %4539 = vmatprep.subr.mxu0 %v4538
        %v4540 = vand.u32 %v3099, 4294901760
        %v4541 = vsub.f32 %v3099, %v4540
        %v4542 = vand.u32 %v4541, 4294901760
        %4543 = vmatpush1.msra.mxu0 %v4542
        %4544 = vmatprep.subr.mxu0 0.0
        %4545 = vmatpush1.msra.mxu0 0.0
        %4546 = vmatprep.subr.mxu0 0.0
        %4547 = vmatpush1.msra.mxu0 0.0
        %4548 = vmatprep.subr.mxu0 0.0
        %4549 = vmatpush1.msra.mxu0 0.0
        %4550 = vmatprep.subr.mxu0 0.0
        %4551 = vmatpush1.msra.mxu0 0.0
        %4552 = vmatprep.subr.mxu0 0.0
        %4553 = vmatpush1.msra.mxu0 0.0
        %4554 = vmatprep.subr.mxu0 0.0
        %4555 = vmatpush1.msra.mxu0 0.0
        %4556 = vmatprep.subr.mxu0 0.0
        %4557 = vmatpush1.msra.mxu0 0.0
        %4558 = vmatprep.subr.mxu0 0.0
        %4559 = vmatpush1.msra.mxu0 0.0
        %4560 = vmatprep.subr.mxu0 0.0
        %4561 = vmatpush1.msra.mxu0 0.0
        %4562 = vmatprep.subr.mxu0 0.0
        %4563 = vmatpush1.msra.mxu0 0.0
        %4564 = vmatprep.subr.mxu0 0.0
        %4565 = vmatpush1.msra.mxu0 0.0
        %4566 = vmatprep.subr.mxu0 0.0
        %4567 = vmatpush1.msra.mxu0 0.0
        %4568 = vmatprep.subr.mxu0 0.0
        %4569 = vmatpush1.msra.mxu0 0.0
        %4570 = vmatprep.subr.mxu0 0.0
        %4571 = vmatpush1.msra.mxu0 0.0
        %4572 = vmatprep.subr.mxu0 0.0
        %4573 = vmatpush1.msra.mxu0 0.0
        %4574 = vmatprep.subr.mxu0 0.0
        %4575 = vmatpush1.msra.mxu0 0.0
        %4576 = vmatprep.subr.mxu0 0.0
        %4577 = vmatpush1.msra.mxu0 0.0
        %4578 = vmatprep.subr.mxu0 0.0
        %4579 = vmatpush1.msra.mxu0 0.0
        %4580 = vmatprep.subr.mxu0 0.0
        %4581 = vmatpush1.msra.mxu0 0.0
        %4582 = vmatprep.subr.mxu0 0.0
        %4583 = vmatpush1.msra.mxu0 0.0
        %4584 = vmatprep.subr.mxu0 0.0
        %4585 = vmatpush1.msra.mxu0 0.0
        %4586 = vmatprep.subr.mxu0 0.0
        %4587 = vmatpush1.msra.mxu0 0.0
        %4588 = vmatprep.subr.mxu0 0.0
        %4589 = vmatpush1.msra.mxu0 0.0
        %4590 = vmatprep.subr.mxu0 0.0
        %4591 = vmatpush1.msra.mxu0 0.0
        %4592 = vmatprep.mubr.f32.mxu0 0.0
        %v4593 = vand.u32 %v3131, 4294901760
        %4594 = vmatmul.mubr.f32.gmra.mrb[0].mxu0 %v4593
        %v4595 = vpop.f32.mrb[0].mxu0
        %v4596 = vadd.f32 %v4449, %v4595
        %v4597 = vpop.f32.mrb[0].mxu0
        %v4598 = vadd.f32 %v4451, %v4597
        %4599 = vmatprep.mubr.f32.mxu0 0.0
        %v4600 = vand.u32 %v3134, 4294901760
        %4601 = vmatmul.mubr.f32.gmra.mrb[0].mxu0 %v4600
        %v4602 = vpop.f32.mrb[0].mxu0
        %v4603 = vadd.f32 %v4458, %v4602
        %v4604 = vpop.f32.mrb[0].mxu0
        %v4605 = vadd.f32 %v4460, %v4604
        %4606 = vmatprep.mubr.f32.mxu0 0.0
        %v4607 = vand.u32 %v3137, 4294901760
        %4608 = vmatmul.mubr.f32.gmra.mrb[0].mxu0 %v4607
        %v4609 = vpop.f32.mrb[0].mxu0
        %v4610 = vadd.f32 %v4467, %v4609
        %v4611 = vpop.f32.mrb[0].mxu0
        %v4612 = vadd.f32 %v4469, %v4611
        %4613 = vmatprep.mubr.f32.mxu0 0.0
        %v4614 = vand.u32 %v3140, 4294901760
        %4615 = vmatmul.mubr.f32.gmra.mrb[0].mxu0 %v4614
        %v4616 = vpop.f32.mrb[0].mxu0
        %v4617 = vadd.f32 %v4476, %v4616
        %v4618 = vpop.f32.mrb[0].mxu0
        %v4619 = vadd.f32 %v4478, %v4618
        %4620 = vdwg.mxu0
        %v4621 = vand.u32 %v3072, 4294901760
        %4622 = vmatprep.subr.mxu0 %v4621
        %v4623 = vand.u32 %v3071, 4294901760
        %4624 = vmatpush1.msra.mxu0 %v4623
        %v4625 = vand.u32 %v3076, 4294901760
        %4626 = vmatprep.subr.mxu0 %v4625
        %v4627 = vand.u32 %v3075, 4294901760
        %4628 = vmatpush1.msra.mxu0 %v4627
        %v4629 = vand.u32 %v3080, 4294901760
        %4630 = vmatprep.subr.mxu0 %v4629
        %v4631 = vand.u32 %v3079, 4294901760
        %4632 = vmatpush1.msra.mxu0 %v4631
        %v4633 = vand.u32 %v3084, 4294901760
        %4634 = vmatprep.subr.mxu0 %v4633
        %v4635 = vand.u32 %v3083, 4294901760
        %4636 = vmatpush1.msra.mxu0 %v4635
        %v4637 = vand.u32 %v3088, 4294901760
        %4638 = vmatprep.subr.mxu0 %v4637
        %v4639 = vand.u32 %v3087, 4294901760
        %4640 = vmatpush1.msra.mxu0 %v4639
        %v4641 = vand.u32 %v3092, 4294901760
        %4642 = vmatprep.subr.mxu0 %v4641
        %v4643 = vand.u32 %v3091, 4294901760
        %4644 = vmatpush1.msra.mxu0 %v4643
        %v4645 = vand.u32 %v3096, 4294901760
        %4646 = vmatprep.subr.mxu0 %v4645
        %v4647 = vand.u32 %v3095, 4294901760
        %4648 = vmatpush1.msra.mxu0 %v4647
        %v4649 = vand.u32 %v3100, 4294901760
        %4650 = vmatprep.subr.mxu0 %v4649
        %v4651 = vand.u32 %v3099, 4294901760
        %4652 = vmatpush1.msra.mxu0 %v4651
        %4653 = vmatprep.subr.mxu0 0.0
        %4654 = vmatpush1.msra.mxu0 0.0
        %4655 = vmatprep.subr.mxu0 0.0
        %4656 = vmatpush1.msra.mxu0 0.0
        %4657 = vmatprep.subr.mxu0 0.0
        %4658 = vmatpush1.msra.mxu0 0.0
        %4659 = vmatprep.subr.mxu0 0.0
        %4660 = vmatpush1.msra.mxu0 0.0
        %4661 = vmatprep.subr.mxu0 0.0
        %4662 = vmatpush1.msra.mxu0 0.0
        %4663 = vmatprep.subr.mxu0 0.0
        %4664 = vmatpush1.msra.mxu0 0.0
        %4665 = vmatprep.subr.mxu0 0.0
        %4666 = vmatpush1.msra.mxu0 0.0
        %4667 = vmatprep.subr.mxu0 0.0
        %4668 = vmatpush1.msra.mxu0 0.0
        %4669 = vmatprep.subr.mxu0 0.0
        %4670 = vmatpush1.msra.mxu0 0.0
        %4671 = vmatprep.subr.mxu0 0.0
        %4672 = vmatpush1.msra.mxu0 0.0
        %4673 = vmatprep.subr.mxu0 0.0
        %4674 = vmatpush1.msra.mxu0 0.0
        %4675 = vmatprep.subr.mxu0 0.0
        %4676 = vmatpush1.msra.mxu0 0.0
        %4677 = vmatprep.subr.mxu0 0.0
        %4678 = vmatpush1.msra.mxu0 0.0
        %4679 = vmatprep.subr.mxu0 0.0
        %4680 = vmatpush1.msra.mxu0 0.0
        %4681 = vmatprep.subr.mxu0 0.0
        %4682 = vmatpush1.msra.mxu0 0.0
        %4683 = vmatprep.subr.mxu0 0.0
        %4684 = vmatpush1.msra.mxu0 0.0
        %4685 = vmatprep.subr.mxu0 0.0
        %4686 = vmatpush1.msra.mxu0 0.0
        %4687 = vmatprep.subr.mxu0 0.0
        %4688 = vmatpush1.msra.mxu0 0.0
        %4689 = vmatprep.subr.mxu0 0.0
        %4690 = vmatpush1.msra.mxu0 0.0
        %4691 = vmatprep.subr.mxu0 0.0
        %4692 = vmatpush1.msra.mxu0 0.0
        %4693 = vmatprep.subr.mxu0 0.0
        %4694 = vmatpush1.msra.mxu0 0.0
        %4695 = vmatprep.subr.mxu0 0.0
        %4696 = vmatpush1.msra.mxu0 0.0
        %4697 = vmatprep.subr.mxu0 0.0
        %4698 = vmatpush1.msra.mxu0 0.0
        %4699 = vmatprep.subr.mxu0 0.0
        %4700 = vmatpush1.msra.mxu0 0.0
        %4701 = vmatprep.mubr.f32.mxu0 0.0
        %v4702 = vand.u32 %v3131, 4294901760
        %4703 = vmatmul.mubr.f32.gmra.mrb[0].mxu0 %v4702
        %v4704 = vpop.f32.mrb[0].mxu0
        %v4705 = vadd.f32 %v4596, %v4704
        %v4706 = vpop.f32.mrb[0].mxu0
        %v4707 = vadd.f32 %v4598, %v4706
        %4708 = vmatprep.mubr.f32.mxu0 0.0
        %v4709 = vand.u32 %v3134, 4294901760
        %4710 = vmatmul.mubr.f32.gmra.mrb[0].mxu0 %v4709
        %v4711 = vpop.f32.mrb[0].mxu0
        %v4712 = vadd.f32 %v4603, %v4711
        %v4713 = vpop.f32.mrb[0].mxu0
        %v4714 = vadd.f32 %v4605, %v4713
        %4715 = vmatprep.mubr.f32.mxu0 0.0
        %v4716 = vand.u32 %v3137, 4294901760
        %4717 = vmatmul.mubr.f32.gmra.mrb[0].mxu0 %v4716
        %v4718 = vpop.f32.mrb[0].mxu0
        %v4719 = vadd.f32 %v4610, %v4718
        %v4720 = vpop.f32.mrb[0].mxu0
        %v4721 = vadd.f32 %v4612, %v4720
        %4722 = vmatprep.mubr.f32.mxu0 0.0
        %v4723 = vand.u32 %v3140, 4294901760
        %4724 = vmatmul.mubr.f32.gmra.mrb[0].mxu0 %v4723
        %v4725 = vpop.f32.mrb[0].mxu0
        %v4726 = vadd.f32 %v4617, %v4725
        %v4727 = vpop.f32.mrb[0].mxu0
        %v4728 = vadd.f32 %v4619, %v4727
        %4729 = vdwg.mxu0
        %v4730 = vmax.f32 %v3911, 0.0
        %v4731 = vmax.f32 %v3913, 0.0
        %v4732 = vmax.f32 %v4705, 0.0
        %v4733 = vmax.f32 %v4707, 0.0
        %v4734 = vmax.f32 %v3918, 0.0
        %v4735 = vmax.f32 %v3920, 0.0
        %v4736 = vmax.f32 %v4712, 0.0
        %v4737 = vmax.f32 %v4714, 0.0
        %v4738 = vmax.f32 %v3925, 0.0
        %v4739 = vmax.f32 %v3927, 0.0
        %v4740 = vmax.f32 %v4719, 0.0
        %v4741 = vmax.f32 %v4721, 0.0
        %v4742 = vmax.f32 %v3932, 0.0
        %v4743 = vmax.f32 %v3934, 0.0
        %v4744 = vmax.f32 %v4726, 0.0
        %v4745 = vmax.f32 %v4728, 0.0
        %v4746 = vld [vmem:[%s5] sm:$0xff]
        %v4747 = vld [vmem:[%s5 + $0x8] sm:$0xff]
        %v4748 = vld [vmem:[%s6] sm:$0xff]
        %v4749 = vld [vmem:[%s6 + $0x8] sm:$0xff]
        %4751 = vset.pattern.permute.xlu0 0
        %4752 = vperm.xlu0 %4751, %v4748
        %v4753 = vpop.permute.xlu0 %4752
        %4756 = vset.pattern.permute.xlu0 0
        %4757 = vperm.xlu0 %4756, %v4749
        %v4758 = vpop.permute.xlu0 %4757
        %vm4760 = vcmask 261120
        %v4762 = vsel %vm4760, %v4746, 0
        %v4765 = vsel %vm4760, %v4747, 0
        %v4767 = vand.u32 %v4731, 4294901760
        %4768 = vmatprep.subr.mxu0 %v4767
        %v4769 = vand.u32 %v4730, 4294901760
        %4770 = vmatpush1.msra.mxu0 %v4769
        %v4771 = vand.u32 %v4735, 4294901760
        %4772 = vmatprep.subr.mxu0 %v4771
        %v4773 = vand.u32 %v4734, 4294901760
        %4774 = vmatpush1.msra.mxu0 %v4773
        %v4775 = vand.u32 %v4739, 4294901760
        %4776 = vmatprep.subr.mxu0 %v4775
        %v4777 = vand.u32 %v4738, 4294901760
        %4778 = vmatpush1.msra.mxu0 %v4777
        %v4779 = vand.u32 %v4743, 4294901760
        %4780 = vmatprep.subr.mxu0 %v4779
        %v4781 = vand.u32 %v4742, 4294901760
        %4782 = vmatpush1.msra.mxu0 %v4781
        %4783 = vmatprep.subr.mxu0 0.0
        %4784 = vmatpush1.msra.mxu0 0.0
        %4785 = vmatprep.subr.mxu0 0.0
        %4786 = vmatpush1.msra.mxu0 0.0
        %4787 = vmatprep.subr.mxu0 0.0
        %4788 = vmatpush1.msra.mxu0 0.0
        %4789 = vmatprep.subr.mxu0 0.0
        %4790 = vmatpush1.msra.mxu0 0.0
        %4791 = vmatprep.subr.mxu0 0.0
        %4792 = vmatpush1.msra.mxu0 0.0
        %4793 = vmatprep.subr.mxu0 0.0
        %4794 = vmatpush1.msra.mxu0 0.0
        %4795 = vmatprep.subr.mxu0 0.0
        %4796 = vmatpush1.msra.mxu0 0.0
        %4797 = vmatprep.subr.mxu0 0.0
        %4798 = vmatpush1.msra.mxu0 0.0
        %4799 = vmatprep.subr.mxu0 0.0
        %4800 = vmatpush1.msra.mxu0 0.0
        %4801 = vmatprep.subr.mxu0 0.0
        %4802 = vmatpush1.msra.mxu0 0.0
        %4803 = vmatprep.subr.mxu0 0.0
        %4804 = vmatpush1.msra.mxu0 0.0
        %4805 = vmatprep.subr.mxu0 0.0
        %4806 = vmatpush1.msra.mxu0 0.0
        %4807 = vmatprep.subr.mxu0 0.0
        %4808 = vmatpush1.msra.mxu0 0.0
        %4809 = vmatprep.subr.mxu0 0.0
        %4810 = vmatpush1.msra.mxu0 0.0
        %4811 = vmatprep.subr.mxu0 0.0
        %4812 = vmatpush1.msra.mxu0 0.0
        %4813 = vmatprep.subr.mxu0 0.0
        %4814 = vmatpush1.msra.mxu0 0.0
        %4815 = vmatprep.subr.mxu0 0.0
        %4816 = vmatpush1.msra.mxu0 0.0
        %4817 = vmatprep.subr.mxu0 0.0
        %4818 = vmatpush1.msra.mxu0 0.0
        %4819 = vmatprep.subr.mxu0 0.0
        %4820 = vmatpush1.msra.mxu0 0.0
        %4821 = vmatprep.subr.mxu0 0.0
        %4822 = vmatpush1.msra.mxu0 0.0
        %4823 = vmatprep.subr.mxu0 0.0
        %4824 = vmatpush1.msra.mxu0 0.0
        %4825 = vmatprep.subr.mxu0 0.0
        %4826 = vmatpush1.msra.mxu0 0.0
        %4827 = vmatprep.subr.mxu0 0.0
        %4828 = vmatpush1.msra.mxu0 0.0
        %4829 = vmatprep.subr.mxu0 0.0
        %4830 = vmatpush1.msra.mxu0 0.0
        %4831 = vmatprep.subr.mxu0 0.0
        %4832 = vmatpush1.msra.mxu0 0.0
        %4833 = vmatprep.subr.mxu0 0.0
        %4834 = vmatpush1.msra.mxu0 0.0
        %4835 = vmatprep.subr.mxu0 0.0
        %4836 = vmatpush1.msra.mxu0 0.0
        %4837 = vmatprep.subr.mxu0 0.0
        %4838 = vmatpush1.msra.mxu0 0.0
        %4839 = vmatprep.mubr.f32.mxu0 0.0
        %v4840 = vand.u32 %v4762, 4294901760
        %v4841 = vsub.f32 %v4762, %v4840
        %v4842 = vand.u32 %v4841, 4294901760
        %v4843 = vsub.f32 %v4841, %v4842
        %v4844 = vand.u32 %v4843, 4294901760
        %4845 = vmatmul.mubr.f32.gmra.mrb[0].mxu0 %v4844
        %v4846 = vpop.f32.mrb[0].mxu0
        %v4847 = vadd.f32 %v4753, %v4846
        %v4848 = vpop.f32.mrb[0].mxu0
        %v4849 = vadd.f32 %v4753, %v4848
        %4850 = vmatprep.mubr.f32.mxu0 0.0
        %v4851 = vand.u32 %v4765, 4294901760
        %v4852 = vsub.f32 %v4765, %v4851
        %v4853 = vand.u32 %v4852, 4294901760
        %v4854 = vsub.f32 %v4852, %v4853
        %v4855 = vand.u32 %v4854, 4294901760
        %4856 = vmatmul.mubr.f32.gmra.mrb[0].mxu0 %v4855
        %v4857 = vpop.f32.mrb[0].mxu0
        %v4858 = vadd.f32 %v4758, %v4857
        %v4859 = vpop.f32.mrb[0].mxu0
        %v4860 = vadd.f32 %v4758, %v4859
        %4861 = vdwg.mxu0
        %v4862 = vand.u32 %v4731, 4294901760
        %v4863 = vsub.f32 %v4731, %v4862
        %v4864 = vand.u32 %v4863, 4294901760
        %v4865 = vsub.f32 %v4863, %v4864
        %v4866 = vand.u32 %v4865, 4294901760
        %4867 = vmatprep.subr.mxu0 %v4866
        %v4868 = vand.u32 %v4730, 4294901760
        %v4869 = vsub.f32 %v4730, %v4868
        %v4870 = vand.u32 %v4869, 4294901760
        %v4871 = vsub.f32 %v4869, %v4870
        %v4872 = vand.u32 %v4871, 4294901760
        %4873 = vmatpush1.msra.mxu0 %v4872
        %v4874 = vand.u32 %v4735, 4294901760
        %v4875 = vsub.f32 %v4735, %v4874
        %v4876 = vand.u32 %v4875, 4294901760
        %v4877 = vsub.f32 %v4875, %v4876
        %v4878 = vand.u32 %v4877, 4294901760
        %4879 = vmatprep.subr.mxu0 %v4878
        %v4880 = vand.u32 %v4734, 4294901760
        %v4881 = vsub.f32 %v4734, %v4880
        %v4882 = vand.u32 %v4881, 4294901760
        %v4883 = vsub.f32 %v4881, %v4882
        %v4884 = vand.u32 %v4883, 4294901760
        %4885 = vmatpush1.msra.mxu0 %v4884
        %v4886 = vand.u32 %v4739, 4294901760
        %v4887 = vsub.f32 %v4739, %v4886
        %v4888 = vand.u32 %v4887, 4294901760
        %v4889 = vsub.f32 %v4887, %v4888
        %v4890 = vand.u32 %v4889, 4294901760
        %4891 = vmatprep.subr.mxu0 %v4890
        %v4892 = vand.u32 %v4738, 4294901760
        %v4893 = vsub.f32 %v4738, %v4892
        %v4894 = vand.u32 %v4893, 4294901760
        %v4895 = vsub.f32 %v4893, %v4894
        %v4896 = vand.u32 %v4895, 4294901760
        %4897 = vmatpush1.msra.mxu0 %v4896
        %v4898 = vand.u32 %v4743, 4294901760
        %v4899 = vsub.f32 %v4743, %v4898
        %v4900 = vand.u32 %v4899, 4294901760
        %v4901 = vsub.f32 %v4899, %v4900
        %v4902 = vand.u32 %v4901, 4294901760
        %4903 = vmatprep.subr.mxu0 %v4902
        %v4904 = vand.u32 %v4742, 4294901760
        %v4905 = vsub.f32 %v4742, %v4904
        %v4906 = vand.u32 %v4905, 4294901760
        %v4907 = vsub.f32 %v4905, %v4906
        %v4908 = vand.u32 %v4907, 4294901760
        %4909 = vmatpush1.msra.mxu0 %v4908
        %4910 = vmatprep.subr.mxu0 0.0
        %4911 = vmatpush1.msra.mxu0 0.0
        %4912 = vmatprep.subr.mxu0 0.0
        %4913 = vmatpush1.msra.mxu0 0.0
        %4914 = vmatprep.subr.mxu0 0.0
        %4915 = vmatpush1.msra.mxu0 0.0
        %4916 = vmatprep.subr.mxu0 0.0
        %4917 = vmatpush1.msra.mxu0 0.0
        %4918 = vmatprep.subr.mxu0 0.0
        %4919 = vmatpush1.msra.mxu0 0.0
        %4920 = vmatprep.subr.mxu0 0.0
        %4921 = vmatpush1.msra.mxu0 0.0
        %4922 = vmatprep.subr.mxu0 0.0
        %4923 = vmatpush1.msra.mxu0 0.0
        %4924 = vmatprep.subr.mxu0 0.0
        %4925 = vmatpush1.msra.mxu0 0.0
        %4926 = vmatprep.subr.mxu0 0.0
        %4927 = vmatpush1.msra.mxu0 0.0
        %4928 = vmatprep.subr.mxu0 0.0
        %4929 = vmatpush1.msra.mxu0 0.0
        %4930 = vmatprep.subr.mxu0 0.0
        %4931 = vmatpush1.msra.mxu0 0.0
        %4932 = vmatprep.subr.mxu0 0.0
        %4933 = vmatpush1.msra.mxu0 0.0
        %4934 = vmatprep.subr.mxu0 0.0
        %4935 = vmatpush1.msra.mxu0 0.0
        %4936 = vmatprep.subr.mxu0 0.0
        %4937 = vmatpush1.msra.mxu0 0.0
        %4938 = vmatprep.subr.mxu0 0.0
        %4939 = vmatpush1.msra.mxu0 0.0
        %4940 = vmatprep.subr.mxu0 0.0
        %4941 = vmatpush1.msra.mxu0 0.0
        %4942 = vmatprep.subr.mxu0 0.0
        %4943 = vmatpush1.msra.mxu0 0.0
        %4944 = vmatprep.subr.mxu0 0.0
        %4945 = vmatpush1.msra.mxu0 0.0
        %4946 = vmatprep.subr.mxu0 0.0
        %4947 = vmatpush1.msra.mxu0 0.0
        %4948 = vmatprep.subr.mxu0 0.0
        %4949 = vmatpush1.msra.mxu0 0.0
        %4950 = vmatprep.subr.mxu0 0.0
        %4951 = vmatpush1.msra.mxu0 0.0
        %4952 = vmatprep.subr.mxu0 0.0
        %4953 = vmatpush1.msra.mxu0 0.0
        %4954 = vmatprep.subr.mxu0 0.0
        %4955 = vmatpush1.msra.mxu0 0.0
        %4956 = vmatprep.subr.mxu0 0.0
        %4957 = vmatpush1.msra.mxu0 0.0
        %4958 = vmatprep.subr.mxu0 0.0
        %4959 = vmatpush1.msra.mxu0 0.0
        %4960 = vmatprep.subr.mxu0 0.0
        %4961 = vmatpush1.msra.mxu0 0.0
        %4962 = vmatprep.subr.mxu0 0.0
        %4963 = vmatpush1.msra.mxu0 0.0
        %4964 = vmatprep.subr.mxu0 0.0
        %4965 = vmatpush1.msra.mxu0 0.0
        %4966 = vmatprep.mubr.f32.mxu0 0.0
        %v4967 = vand.u32 %v4762, 4294901760
        %4968 = vmatmul.mubr.f32.gmra.mrb[0].mxu0 %v4967
        %v4969 = vpop.f32.mrb[0].mxu0
        %v4970 = vadd.f32 %v4847, %v4969
        %v4971 = vpop.f32.mrb[0].mxu0
        %v4972 = vadd.f32 %v4849, %v4971
        %4973 = vmatprep.mubr.f32.mxu0 0.0
        %v4974 = vand.u32 %v4765, 4294901760
        %4975 = vmatmul.mubr.f32.gmra.mrb[0].mxu0 %v4974
        %v4976 = vpop.f32.mrb[0].mxu0
        %v4977 = vadd.f32 %v4858, %v4976
        %v4978 = vpop.f32.mrb[0].mxu0
        %v4979 = vadd.f32 %v4860, %v4978
        %4980 = vdwg.mxu0
        %v4981 = vand.u32 %v4731, 4294901760
        %v4982 = vsub.f32 %v4731, %v4981
        %4983 = vmatprep.subr.mxu0 %v4982
        %v4984 = vand.u32 %v4730, 4294901760
        %v4985 = vsub.f32 %v4730, %v4984
        %4986 = vmatpush1.msra.mxu0 %v4985
        %v4987 = vand.u32 %v4735, 4294901760
        %v4988 = vsub.f32 %v4735, %v4987
        %4989 = vmatprep.subr.mxu0 %v4988
        %v4990 = vand.u32 %v4734, 4294901760
        %v4991 = vsub.f32 %v4734, %v4990
        %4992 = vmatpush1.msra.mxu0 %v4991
        %v4993 = vand.u32 %v4739, 4294901760
        %v4994 = vsub.f32 %v4739, %v4993
        %4995 = vmatprep.subr.mxu0 %v4994
        %v4996 = vand.u32 %v4738, 4294901760
        %v4997 = vsub.f32 %v4738, %v4996
        %4998 = vmatpush1.msra.mxu0 %v4997
        %v4999 = vand.u32 %v4743, 4294901760
        %v5000 = vsub.f32 %v4743, %v4999
        %5001 = vmatprep.subr.mxu0 %v5000
        %v5002 = vand.u32 %v4742, 4294901760
        %v5003 = vsub.f32 %v4742, %v5002
        %5004 = vmatpush1.msra.mxu0 %v5003
        %5005 = vmatprep.subr.mxu0 0.0
        %5006 = vmatpush1.msra.mxu0 0.0
        %5007 = vmatprep.subr.mxu0 0.0
        %5008 = vmatpush1.msra.mxu0 0.0
        %5009 = vmatprep.subr.mxu0 0.0
        %5010 = vmatpush1.msra.mxu0 0.0
        %5011 = vmatprep.subr.mxu0 0.0
        %5012 = vmatpush1.msra.mxu0 0.0
        %5013 = vmatprep.subr.mxu0 0.0
        %5014 = vmatpush1.msra.mxu0 0.0
        %5015 = vmatprep.subr.mxu0 0.0
        %5016 = vmatpush1.msra.mxu0 0.0
        %5017 = vmatprep.subr.mxu0 0.0
        %5018 = vmatpush1.msra.mxu0 0.0
        %5019 = vmatprep.subr.mxu0 0.0
        %5020 = vmatpush1.msra.mxu0 0.0
        %5021 = vmatprep.subr.mxu0 0.0
        %5022 = vmatpush1.msra.mxu0 0.0
        %5023 = vmatprep.subr.mxu0 0.0
        %5024 = vmatpush1.msra.mxu0 0.0
        %5025 = vmatprep.subr.mxu0 0.0
        %5026 = vmatpush1.msra.mxu0 0.0
        %5027 = vmatprep.subr.mxu0 0.0
        %5028 = vmatpush1.msra.mxu0 0.0
        %5029 = vmatprep.subr.mxu0 0.0
        %5030 = vmatpush1.msra.mxu0 0.0
        %5031 = vmatprep.subr.mxu0 0.0
        %5032 = vmatpush1.msra.mxu0 0.0
        %5033 = vmatprep.subr.mxu0 0.0
        %5034 = vmatpush1.msra.mxu0 0.0
        %5035 = vmatprep.subr.mxu0 0.0
        %5036 = vmatpush1.msra.mxu0 0.0
        %5037 = vmatprep.subr.mxu0 0.0
        %5038 = vmatpush1.msra.mxu0 0.0
        %5039 = vmatprep.subr.mxu0 0.0
        %5040 = vmatpush1.msra.mxu0 0.0
        %5041 = vmatprep.subr.mxu0 0.0
        %5042 = vmatpush1.msra.mxu0 0.0
        %5043 = vmatprep.subr.mxu0 0.0
        %5044 = vmatpush1.msra.mxu0 0.0
        %5045 = vmatprep.subr.mxu0 0.0
        %5046 = vmatpush1.msra.mxu0 0.0
        %5047 = vmatprep.subr.mxu0 0.0
        %5048 = vmatpush1.msra.mxu0 0.0
        %5049 = vmatprep.subr.mxu0 0.0
        %5050 = vmatpush1.msra.mxu0 0.0
        %5051 = vmatprep.subr.mxu0 0.0
        %5052 = vmatpush1.msra.mxu0 0.0
        %5053 = vmatprep.subr.mxu0 0.0
        %5054 = vmatpush1.msra.mxu0 0.0
        %5055 = vmatprep.subr.mxu0 0.0
        %5056 = vmatpush1.msra.mxu0 0.0
        %5057 = vmatprep.subr.mxu0 0.0
        %5058 = vmatpush1.msra.mxu0 0.0
        %5059 = vmatprep.subr.mxu0 0.0
        %5060 = vmatpush1.msra.mxu0 0.0
        %5061 = vmatprep.mubr.f32.mxu0 0.0
        %v5062 = vand.u32 %v4762, 4294901760
        %v5063 = vsub.f32 %v4762, %v5062
        %5064 = vmatmul.mubr.f32.gmra.mrb[0].mxu0 %v5063
        %v5065 = vpop.f32.mrb[0].mxu0
        %v5066 = vadd.f32 %v4970, %v5065
        %v5067 = vpop.f32.mrb[0].mxu0
        %v5068 = vadd.f32 %v4972, %v5067
        %5069 = vmatprep.mubr.f32.mxu0 0.0
        %v5070 = vand.u32 %v4765, 4294901760
        %v5071 = vsub.f32 %v4765, %v5070
        %5072 = vmatmul.mubr.f32.gmra.mrb[0].mxu0 %v5071
        %v5073 = vpop.f32.mrb[0].mxu0
        %v5074 = vadd.f32 %v4977, %v5073
        %v5075 = vpop.f32.mrb[0].mxu0
        %v5076 = vadd.f32 %v4979, %v5075
        %5077 = vdwg.mxu0
        %v5078 = vand.u32 %v4731, 4294901760
        %5079 = vmatprep.subr.mxu0 %v5078
        %v5080 = vand.u32 %v4730, 4294901760
        %5081 = vmatpush1.msra.mxu0 %v5080
        %v5082 = vand.u32 %v4735, 4294901760
        %5083 = vmatprep.subr.mxu0 %v5082
        %v5084 = vand.u32 %v4734, 4294901760
        %5085 = vmatpush1.msra.mxu0 %v5084
        %v5086 = vand.u32 %v4739, 4294901760
        %5087 = vmatprep.subr.mxu0 %v5086
        %v5088 = vand.u32 %v4738, 4294901760
        %5089 = vmatpush1.msra.mxu0 %v5088
        %v5090 = vand.u32 %v4743, 4294901760
        %5091 = vmatprep.subr.mxu0 %v5090
        %v5092 = vand.u32 %v4742, 4294901760
        %5093 = vmatpush1.msra.mxu0 %v5092
        %5094 = vmatprep.subr.mxu0 0.0
        %5095 = vmatpush1.msra.mxu0 0.0
        %5096 = vmatprep.subr.mxu0 0.0
        %5097 = vmatpush1.msra.mxu0 0.0
        %5098 = vmatprep.subr.mxu0 0.0
        %5099 = vmatpush1.msra.mxu0 0.0
        %5100 = vmatprep.subr.mxu0 0.0
        %5101 = vmatpush1.msra.mxu0 0.0
        %5102 = vmatprep.subr.mxu0 0.0
        %5103 = vmatpush1.msra.mxu0 0.0
        %5104 = vmatprep.subr.mxu0 0.0
        %5105 = vmatpush1.msra.mxu0 0.0
        %5106 = vmatprep.subr.mxu0 0.0
        %5107 = vmatpush1.msra.mxu0 0.0
        %5108 = vmatprep.subr.mxu0 0.0
        %5109 = vmatpush1.msra.mxu0 0.0
        %5110 = vmatprep.subr.mxu0 0.0
        %5111 = vmatpush1.msra.mxu0 0.0
        %5112 = vmatprep.subr.mxu0 0.0
        %5113 = vmatpush1.msra.mxu0 0.0
        %5114 = vmatprep.subr.mxu0 0.0
        %5115 = vmatpush1.msra.mxu0 0.0
        %5116 = vmatprep.subr.mxu0 0.0
        %5117 = vmatpush1.msra.mxu0 0.0
        %5118 = vmatprep.subr.mxu0 0.0
        %5119 = vmatpush1.msra.mxu0 0.0
        %5120 = vmatprep.subr.mxu0 0.0
        %5121 = vmatpush1.msra.mxu0 0.0
        %5122 = vmatprep.subr.mxu0 0.0
        %5123 = vmatpush1.msra.mxu0 0.0
        %5124 = vmatprep.subr.mxu0 0.0
        %5125 = vmatpush1.msra.mxu0 0.0
        %5126 = vmatprep.subr.mxu0 0.0
        %5127 = vmatpush1.msra.mxu0 0.0
        %5128 = vmatprep.subr.mxu0 0.0
        %5129 = vmatpush1.msra.mxu0 0.0
        %5130 = vmatprep.subr.mxu0 0.0
        %5131 = vmatpush1.msra.mxu0 0.0
        %5132 = vmatprep.subr.mxu0 0.0
        %5133 = vmatpush1.msra.mxu0 0.0
        %5134 = vmatprep.subr.mxu0 0.0
        %5135 = vmatpush1.msra.mxu0 0.0
        %5136 = vmatprep.subr.mxu0 0.0
        %5137 = vmatpush1.msra.mxu0 0.0
        %5138 = vmatprep.subr.mxu0 0.0
        %5139 = vmatpush1.msra.mxu0 0.0
        %5140 = vmatprep.subr.mxu0 0.0
        %5141 = vmatpush1.msra.mxu0 0.0
        %5142 = vmatprep.subr.mxu0 0.0
        %5143 = vmatpush1.msra.mxu0 0.0
        %5144 = vmatprep.subr.mxu0 0.0
        %5145 = vmatpush1.msra.mxu0 0.0
        %5146 = vmatprep.subr.mxu0 0.0
        %5147 = vmatpush1.msra.mxu0 0.0
        %5148 = vmatprep.subr.mxu0 0.0
        %5149 = vmatpush1.msra.mxu0 0.0
        %5150 = vmatprep.mubr.f32.mxu0 0.0
        %v5151 = vand.u32 %v4762, 4294901760
        %v5152 = vsub.f32 %v4762, %v5151
        %v5153 = vand.u32 %v5152, 4294901760
        %5154 = vmatmul.mubr.f32.gmra.mrb[0].mxu0 %v5153
        %v5155 = vpop.f32.mrb[0].mxu0
        %v5156 = vadd.f32 %v5066, %v5155
        %v5157 = vpop.f32.mrb[0].mxu0
        %v5158 = vadd.f32 %v5068, %v5157
        %5159 = vmatprep.mubr.f32.mxu0 0.0
        %v5160 = vand.u32 %v4765, 4294901760
        %v5161 = vsub.f32 %v4765, %v5160
        %v5162 = vand.u32 %v5161, 4294901760
        %5163 = vmatmul.mubr.f32.gmra.mrb[0].mxu0 %v5162
        %v5164 = vpop.f32.mrb[0].mxu0
        %v5165 = vadd.f32 %v5074, %v5164
        %v5166 = vpop.f32.mrb[0].mxu0
        %v5167 = vadd.f32 %v5076, %v5166
        %5168 = vdwg.mxu0
        %v5169 = vand.u32 %v4731, 4294901760
        %v5170 = vsub.f32 %v4731, %v5169
        %v5171 = vand.u32 %v5170, 4294901760
        %5172 = vmatprep.subr.mxu0 %v5171
        %v5173 = vand.u32 %v4730, 4294901760
        %v5174 = vsub.f32 %v4730, %v5173
        %v5175 = vand.u32 %v5174, 4294901760
        %5176 = vmatpush1.msra.mxu0 %v5175
        %v5177 = vand.u32 %v4735, 4294901760
        %v5178 = vsub.f32 %v4735, %v5177
        %v5179 = vand.u32 %v5178, 4294901760
        %5180 = vmatprep.subr.mxu0 %v5179
        %v5181 = vand.u32 %v4734, 4294901760
        %v5182 = vsub.f32 %v4734, %v5181
        %v5183 = vand.u32 %v5182, 4294901760
        %5184 = vmatpush1.msra.mxu0 %v5183
        %v5185 = vand.u32 %v4739, 4294901760
        %v5186 = vsub.f32 %v4739, %v5185
        %v5187 = vand.u32 %v5186, 4294901760
        %5188 = vmatprep.subr.mxu0 %v5187
        %v5189 = vand.u32 %v4738, 4294901760
        %v5190 = vsub.f32 %v4738, %v5189
        %v5191 = vand.u32 %v5190, 4294901760
        %5192 = vmatpush1.msra.mxu0 %v5191
        %v5193 = vand.u32 %v4743, 4294901760
        %v5194 = vsub.f32 %v4743, %v5193
        %v5195 = vand.u32 %v5194, 4294901760
        %5196 = vmatprep.subr.mxu0 %v5195
        %v5197 = vand.u32 %v4742, 4294901760
        %v5198 = vsub.f32 %v4742, %v5197
        %v5199 = vand.u32 %v5198, 4294901760
        %5200 = vmatpush1.msra.mxu0 %v5199
        %5201 = vmatprep.subr.mxu0 0.0
        %5202 = vmatpush1.msra.mxu0 0.0
        %5203 = vmatprep.subr.mxu0 0.0
        %5204 = vmatpush1.msra.mxu0 0.0
        %5205 = vmatprep.subr.mxu0 0.0
        %5206 = vmatpush1.msra.mxu0 0.0
        %5207 = vmatprep.subr.mxu0 0.0
        %5208 = vmatpush1.msra.mxu0 0.0
        %5209 = vmatprep.subr.mxu0 0.0
        %5210 = vmatpush1.msra.mxu0 0.0
        %5211 = vmatprep.subr.mxu0 0.0
        %5212 = vmatpush1.msra.mxu0 0.0
        %5213 = vmatprep.subr.mxu0 0.0
        %5214 = vmatpush1.msra.mxu0 0.0
        %5215 = vmatprep.subr.mxu0 0.0
        %5216 = vmatpush1.msra.mxu0 0.0
        %5217 = vmatprep.subr.mxu0 0.0
        %5218 = vmatpush1.msra.mxu0 0.0
        %5219 = vmatprep.subr.mxu0 0.0
        %5220 = vmatpush1.msra.mxu0 0.0
        %5221 = vmatprep.subr.mxu0 0.0
        %5222 = vmatpush1.msra.mxu0 0.0
        %5223 = vmatprep.subr.mxu0 0.0
        %5224 = vmatpush1.msra.mxu0 0.0
        %5225 = vmatprep.subr.mxu0 0.0
        %5226 = vmatpush1.msra.mxu0 0.0
        %5227 = vmatprep.subr.mxu0 0.0
        %5228 = vmatpush1.msra.mxu0 0.0
        %5229 = vmatprep.subr.mxu0 0.0
        %5230 = vmatpush1.msra.mxu0 0.0
        %5231 = vmatprep.subr.mxu0 0.0
        %5232 = vmatpush1.msra.mxu0 0.0
        %5233 = vmatprep.subr.mxu0 0.0
        %5234 = vmatpush1.msra.mxu0 0.0
        %5235 = vmatprep.subr.mxu0 0.0
        %5236 = vmatpush1.msra.mxu0 0.0
        %5237 = vmatprep.subr.mxu0 0.0
        %5238 = vmatpush1.msra.mxu0 0.0
        %5239 = vmatprep.subr.mxu0 0.0
        %5240 = vmatpush1.msra.mxu0 0.0
        %5241 = vmatprep.subr.mxu0 0.0
        %5242 = vmatpush1.msra.mxu0 0.0
        %5243 = vmatprep.subr.mxu0 0.0
        %5244 = vmatpush1.msra.mxu0 0.0
        %5245 = vmatprep.subr.mxu0 0.0
        %5246 = vmatpush1.msra.mxu0 0.0
        %5247 = vmatprep.subr.mxu0 0.0
        %5248 = vmatpush1.msra.mxu0 0.0
        %5249 = vmatprep.subr.mxu0 0.0
        %5250 = vmatpush1.msra.mxu0 0.0
        %5251 = vmatprep.subr.mxu0 0.0
        %5252 = vmatpush1.msra.mxu0 0.0
        %5253 = vmatprep.subr.mxu0 0.0
        %5254 = vmatpush1.msra.mxu0 0.0
        %5255 = vmatprep.subr.mxu0 0.0
        %5256 = vmatpush1.msra.mxu0 0.0
        %5257 = vmatprep.mubr.f32.mxu0 0.0
        %v5258 = vand.u32 %v4762, 4294901760
        %5259 = vmatmul.mubr.f32.gmra.mrb[0].mxu0 %v5258
        %v5260 = vpop.f32.mrb[0].mxu0
        %v5261 = vadd.f32 %v5156, %v5260
        %v5262 = vpop.f32.mrb[0].mxu0
        %v5263 = vadd.f32 %v5158, %v5262
        %5264 = vmatprep.mubr.f32.mxu0 0.0
        %v5265 = vand.u32 %v4765, 4294901760
        %5266 = vmatmul.mubr.f32.gmra.mrb[0].mxu0 %v5265
        %v5267 = vpop.f32.mrb[0].mxu0
        %v5268 = vadd.f32 %v5165, %v5267
        %v5269 = vpop.f32.mrb[0].mxu0
        %v5270 = vadd.f32 %v5167, %v5269
        %5271 = vdwg.mxu0
        %v5272 = vand.u32 %v4731, 4294901760
        %5273 = vmatprep.subr.mxu0 %v5272
        %v5274 = vand.u32 %v4730, 4294901760
        %5275 = vmatpush1.msra.mxu0 %v5274
        %v5276 = vand.u32 %v4735, 4294901760
        %5277 = vmatprep.subr.mxu0 %v5276
        %v5278 = vand.u32 %v4734, 4294901760
        %5279 = vmatpush1.msra.mxu0 %v5278
        %v5280 = vand.u32 %v4739, 4294901760
        %5281 = vmatprep.subr.mxu0 %v5280
        %v5282 = vand.u32 %v4738, 4294901760
        %5283 = vmatpush1.msra.mxu0 %v5282
        %v5284 = vand.u32 %v4743, 4294901760
        %5285 = vmatprep.subr.mxu0 %v5284
        %v5286 = vand.u32 %v4742, 4294901760
        %5287 = vmatpush1.msra.mxu0 %v5286
        %5288 = vmatprep.subr.mxu0 0.0
        %5289 = vmatpush1.msra.mxu0 0.0
        %5290 = vmatprep.subr.mxu0 0.0
        %5291 = vmatpush1.msra.mxu0 0.0
        %5292 = vmatprep.subr.mxu0 0.0
        %5293 = vmatpush1.msra.mxu0 0.0
        %5294 = vmatprep.subr.mxu0 0.0
        %5295 = vmatpush1.msra.mxu0 0.0
        %5296 = vmatprep.subr.mxu0 0.0
        %5297 = vmatpush1.msra.mxu0 0.0
        %5298 = vmatprep.subr.mxu0 0.0
        %5299 = vmatpush1.msra.mxu0 0.0
        %5300 = vmatprep.subr.mxu0 0.0
        %5301 = vmatpush1.msra.mxu0 0.0
        %5302 = vmatprep.subr.mxu0 0.0
        %5303 = vmatpush1.msra.mxu0 0.0
        %5304 = vmatprep.subr.mxu0 0.0
        %5305 = vmatpush1.msra.mxu0 0.0
        %5306 = vmatprep.subr.mxu0 0.0
        %5307 = vmatpush1.msra.mxu0 0.0
        %5308 = vmatprep.subr.mxu0 0.0
        %5309 = vmatpush1.msra.mxu0 0.0
        %5310 = vmatprep.subr.mxu0 0.0
        %5311 = vmatpush1.msra.mxu0 0.0
        %5312 = vmatprep.subr.mxu0 0.0
        %5313 = vmatpush1.msra.mxu0 0.0
        %5314 = vmatprep.subr.mxu0 0.0
        %5315 = vmatpush1.msra.mxu0 0.0
        %5316 = vmatprep.subr.mxu0 0.0
        %5317 = vmatpush1.msra.mxu0 0.0
        %5318 = vmatprep.subr.mxu0 0.0
        %5319 = vmatpush1.msra.mxu0 0.0
        %5320 = vmatprep.subr.mxu0 0.0
        %5321 = vmatpush1.msra.mxu0 0.0
        %5322 = vmatprep.subr.mxu0 0.0
        %5323 = vmatpush1.msra.mxu0 0.0
        %5324 = vmatprep.subr.mxu0 0.0
        %5325 = vmatpush1.msra.mxu0 0.0
        %5326 = vmatprep.subr.mxu0 0.0
        %5327 = vmatpush1.msra.mxu0 0.0
        %5328 = vmatprep.subr.mxu0 0.0
        %5329 = vmatpush1.msra.mxu0 0.0
        %5330 = vmatprep.subr.mxu0 0.0
        %5331 = vmatpush1.msra.mxu0 0.0
        %5332 = vmatprep.subr.mxu0 0.0
        %5333 = vmatpush1.msra.mxu0 0.0
        %5334 = vmatprep.subr.mxu0 0.0
        %5335 = vmatpush1.msra.mxu0 0.0
        %5336 = vmatprep.subr.mxu0 0.0
        %5337 = vmatpush1.msra.mxu0 0.0
        %5338 = vmatprep.subr.mxu0 0.0
        %5339 = vmatpush1.msra.mxu0 0.0
        %5340 = vmatprep.subr.mxu0 0.0
        %5341 = vmatpush1.msra.mxu0 0.0
        %5342 = vmatprep.subr.mxu0 0.0
        %5343 = vmatpush1.msra.mxu0 0.0
        %5344 = vmatprep.mubr.f32.mxu0 0.0
        %v5345 = vand.u32 %v4762, 4294901760
        %5346 = vmatmul.mubr.f32.gmra.mrb[0].mxu0 %v5345
        %v5347 = vpop.f32.mrb[0].mxu0
        %v5348 = vadd.f32 %v5261, %v5347
        %v5349 = vpop.f32.mrb[0].mxu0
        %v5350 = vadd.f32 %v5263, %v5349
        %5351 = vmatprep.mubr.f32.mxu0 0.0
        %v5352 = vand.u32 %v4765, 4294901760
        %5353 = vmatmul.mubr.f32.gmra.mrb[0].mxu0 %v5352
        %v5354 = vpop.f32.mrb[0].mxu0
        %v5355 = vadd.f32 %v5268, %v5354
        %v5356 = vpop.f32.mrb[0].mxu0
        %v5357 = vadd.f32 %v5270, %v5356
        %5358 = vdwg.mxu0
        %v5359 = vand.u32 %v4733, 4294901760
        %5360 = vmatprep.subr.mxu0 %v5359
        %v5361 = vand.u32 %v4732, 4294901760
        %5362 = vmatpush1.msra.mxu0 %v5361
        %v5363 = vand.u32 %v4737, 4294901760
        %5364 = vmatprep.subr.mxu0 %v5363
        %v5365 = vand.u32 %v4736, 4294901760
        %5366 = vmatpush1.msra.mxu0 %v5365
        %v5367 = vand.u32 %v4741, 4294901760
        %5368 = vmatprep.subr.mxu0 %v5367
        %v5369 = vand.u32 %v4740, 4294901760
        %5370 = vmatpush1.msra.mxu0 %v5369
        %v5371 = vand.u32 %v4745, 4294901760
        %5372 = vmatprep.subr.mxu0 %v5371
        %v5373 = vand.u32 %v4744, 4294901760
        %5374 = vmatpush1.msra.mxu0 %v5373
        %5375 = vmatprep.subr.mxu0 0.0
        %5376 = vmatpush1.msra.mxu0 0.0
        %5377 = vmatprep.subr.mxu0 0.0
        %5378 = vmatpush1.msra.mxu0 0.0
        %5379 = vmatprep.subr.mxu0 0.0
        %5380 = vmatpush1.msra.mxu0 0.0
        %5381 = vmatprep.subr.mxu0 0.0
        %5382 = vmatpush1.msra.mxu0 0.0
        %5383 = vmatprep.subr.mxu0 0.0
        %5384 = vmatpush1.msra.mxu0 0.0
        %5385 = vmatprep.subr.mxu0 0.0
        %5386 = vmatpush1.msra.mxu0 0.0
        %5387 = vmatprep.subr.mxu0 0.0
        %5388 = vmatpush1.msra.mxu0 0.0
        %5389 = vmatprep.subr.mxu0 0.0
        %5390 = vmatpush1.msra.mxu0 0.0
        %5391 = vmatprep.subr.mxu0 0.0
        %5392 = vmatpush1.msra.mxu0 0.0
        %5393 = vmatprep.subr.mxu0 0.0
        %5394 = vmatpush1.msra.mxu0 0.0
        %5395 = vmatprep.subr.mxu0 0.0
        %5396 = vmatpush1.msra.mxu0 0.0
        %5397 = vmatprep.subr.mxu0 0.0
        %5398 = vmatpush1.msra.mxu0 0.0
        %5399 = vmatprep.subr.mxu0 0.0
        %5400 = vmatpush1.msra.mxu0 0.0
        %5401 = vmatprep.subr.mxu0 0.0
        %5402 = vmatpush1.msra.mxu0 0.0
        %5403 = vmatprep.subr.mxu0 0.0
        %5404 = vmatpush1.msra.mxu0 0.0
        %5405 = vmatprep.subr.mxu0 0.0
        %5406 = vmatpush1.msra.mxu0 0.0
        %5407 = vmatprep.subr.mxu0 0.0
        %5408 = vmatpush1.msra.mxu0 0.0
        %5409 = vmatprep.subr.mxu0 0.0
        %5410 = vmatpush1.msra.mxu0 0.0
        %5411 = vmatprep.subr.mxu0 0.0
        %5412 = vmatpush1.msra.mxu0 0.0
        %5413 = vmatprep.subr.mxu0 0.0
        %5414 = vmatpush1.msra.mxu0 0.0
        %5415 = vmatprep.subr.mxu0 0.0
        %5416 = vmatpush1.msra.mxu0 0.0
        %5417 = vmatprep.subr.mxu0 0.0
        %5418 = vmatpush1.msra.mxu0 0.0
        %5419 = vmatprep.subr.mxu0 0.0
        %5420 = vmatpush1.msra.mxu0 0.0
        %5421 = vmatprep.subr.mxu0 0.0
        %5422 = vmatpush1.msra.mxu0 0.0
        %5423 = vmatprep.subr.mxu0 0.0
        %5424 = vmatpush1.msra.mxu0 0.0
        %5425 = vmatprep.subr.mxu0 0.0
        %5426 = vmatpush1.msra.mxu0 0.0
        %5427 = vmatprep.subr.mxu0 0.0
        %5428 = vmatpush1.msra.mxu0 0.0
        %5429 = vmatprep.subr.mxu0 0.0
        %5430 = vmatpush1.msra.mxu0 0.0
        %5431 = vmatprep.mubr.f32.mxu0 0.0
        %v5432 = vand.u32 %v4762, 4294901760
        %v5433 = vsub.f32 %v4762, %v5432
        %v5434 = vand.u32 %v5433, 4294901760
        %v5435 = vsub.f32 %v5433, %v5434
        %v5436 = vand.u32 %v5435, 4294901760
        %5437 = vmatmul.mubr.f32.gmra.mrb[0].mxu0 %v5436
        %v5438 = vpop.f32.mrb[0].mxu0
        %v5439 = vadd.f32 %v4753, %v5438
        %v5440 = vpop.f32.mrb[0].mxu0
        %v5441 = vadd.f32 %v4753, %v5440
        %5442 = vmatprep.mubr.f32.mxu0 0.0
        %v5443 = vand.u32 %v4765, 4294901760
        %v5444 = vsub.f32 %v4765, %v5443
        %v5445 = vand.u32 %v5444, 4294901760
        %v5446 = vsub.f32 %v5444, %v5445
        %v5447 = vand.u32 %v5446, 4294901760
        %5448 = vmatmul.mubr.f32.gmra.mrb[0].mxu0 %v5447
        %v5449 = vpop.f32.mrb[0].mxu0
        %v5450 = vadd.f32 %v4758, %v5449
        %v5451 = vpop.f32.mrb[0].mxu0
        %v5452 = vadd.f32 %v4758, %v5451
        %5453 = vdwg.mxu0
        %v5454 = vand.u32 %v4733, 4294901760
        %v5455 = vsub.f32 %v4733, %v5454
        %v5456 = vand.u32 %v5455, 4294901760
        %v5457 = vsub.f32 %v5455, %v5456
        %v5458 = vand.u32 %v5457, 4294901760
        %5459 = vmatprep.subr.mxu0 %v5458
        %v5460 = vand.u32 %v4732, 4294901760
        %v5461 = vsub.f32 %v4732, %v5460
        %v5462 = vand.u32 %v5461, 4294901760
        %v5463 = vsub.f32 %v5461, %v5462
        %v5464 = vand.u32 %v5463, 4294901760
        %5465 = vmatpush1.msra.mxu0 %v5464
        %v5466 = vand.u32 %v4737, 4294901760
        %v5467 = vsub.f32 %v4737, %v5466
        %v5468 = vand.u32 %v5467, 4294901760
        %v5469 = vsub.f32 %v5467, %v5468
        %v5470 = vand.u32 %v5469, 4294901760
        %5471 = vmatprep.subr.mxu0 %v5470
        %v5472 = vand.u32 %v4736, 4294901760
        %v5473 = vsub.f32 %v4736, %v5472
        %v5474 = vand.u32 %v5473, 4294901760
        %v5475 = vsub.f32 %v5473, %v5474
        %v5476 = vand.u32 %v5475, 4294901760
        %5477 = vmatpush1.msra.mxu0 %v5476
        %v5478 = vand.u32 %v4741, 4294901760
        %v5479 = vsub.f32 %v4741, %v5478
        %v5480 = vand.u32 %v5479, 4294901760
        %v5481 = vsub.f32 %v5479, %v5480
        %v5482 = vand.u32 %v5481, 4294901760
        %5483 = vmatprep.subr.mxu0 %v5482
        %v5484 = vand.u32 %v4740, 4294901760
        %v5485 = vsub.f32 %v4740, %v5484
        %v5486 = vand.u32 %v5485, 4294901760
        %v5487 = vsub.f32 %v5485, %v5486
        %v5488 = vand.u32 %v5487, 4294901760
        %5489 = vmatpush1.msra.mxu0 %v5488
        %v5490 = vand.u32 %v4745, 4294901760
        %v5491 = vsub.f32 %v4745, %v5490
        %v5492 = vand.u32 %v5491, 4294901760
        %v5493 = vsub.f32 %v5491, %v5492
        %v5494 = vand.u32 %v5493, 4294901760
        %5495 = vmatprep.subr.mxu0 %v5494
        %v5496 = vand.u32 %v4744, 4294901760
        %v5497 = vsub.f32 %v4744, %v5496
        %v5498 = vand.u32 %v5497, 4294901760
        %v5499 = vsub.f32 %v5497, %v5498
        %v5500 = vand.u32 %v5499, 4294901760
        %5501 = vmatpush1.msra.mxu0 %v5500
        %5502 = vmatprep.subr.mxu0 0.0
        %5503 = vmatpush1.msra.mxu0 0.0
        %5504 = vmatprep.subr.mxu0 0.0
        %5505 = vmatpush1.msra.mxu0 0.0
        %5506 = vmatprep.subr.mxu0 0.0
        %5507 = vmatpush1.msra.mxu0 0.0
        %5508 = vmatprep.subr.mxu0 0.0
        %5509 = vmatpush1.msra.mxu0 0.0
        %5510 = vmatprep.subr.mxu0 0.0
        %5511 = vmatpush1.msra.mxu0 0.0
        %5512 = vmatprep.subr.mxu0 0.0
        %5513 = vmatpush1.msra.mxu0 0.0
        %5514 = vmatprep.subr.mxu0 0.0
        %5515 = vmatpush1.msra.mxu0 0.0
        %5516 = vmatprep.subr.mxu0 0.0
        %5517 = vmatpush1.msra.mxu0 0.0
        %5518 = vmatprep.subr.mxu0 0.0
        %5519 = vmatpush1.msra.mxu0 0.0
        %5520 = vmatprep.subr.mxu0 0.0
        %5521 = vmatpush1.msra.mxu0 0.0
        %5522 = vmatprep.subr.mxu0 0.0
        %5523 = vmatpush1.msra.mxu0 0.0
        %5524 = vmatprep.subr.mxu0 0.0
        %5525 = vmatpush1.msra.mxu0 0.0
        %5526 = vmatprep.subr.mxu0 0.0
        %5527 = vmatpush1.msra.mxu0 0.0
        %5528 = vmatprep.subr.mxu0 0.0
        %5529 = vmatpush1.msra.mxu0 0.0
        %5530 = vmatprep.subr.mxu0 0.0
        %5531 = vmatpush1.msra.mxu0 0.0
        %5532 = vmatprep.subr.mxu0 0.0
        %5533 = vmatpush1.msra.mxu0 0.0
        %5534 = vmatprep.subr.mxu0 0.0
        %5535 = vmatpush1.msra.mxu0 0.0
        %5536 = vmatprep.subr.mxu0 0.0
        %5537 = vmatpush1.msra.mxu0 0.0
        %5538 = vmatprep.subr.mxu0 0.0
        %5539 = vmatpush1.msra.mxu0 0.0
        %5540 = vmatprep.subr.mxu0 0.0
        %5541 = vmatpush1.msra.mxu0 0.0
        %5542 = vmatprep.subr.mxu0 0.0
        %5543 = vmatpush1.msra.mxu0 0.0
        %5544 = vmatprep.subr.mxu0 0.0
        %5545 = vmatpush1.msra.mxu0 0.0
        %5546 = vmatprep.subr.mxu0 0.0
        %5547 = vmatpush1.msra.mxu0 0.0
        %5548 = vmatprep.subr.mxu0 0.0
        %5549 = vmatpush1.msra.mxu0 0.0
        %5550 = vmatprep.subr.mxu0 0.0
        %5551 = vmatpush1.msra.mxu0 0.0
        %5552 = vmatprep.subr.mxu0 0.0
        %5553 = vmatpush1.msra.mxu0 0.0
        %5554 = vmatprep.subr.mxu0 0.0
        %5555 = vmatpush1.msra.mxu0 0.0
        %5556 = vmatprep.subr.mxu0 0.0
        %5557 = vmatpush1.msra.mxu0 0.0
        %5558 = vmatprep.mubr.f32.mxu0 0.0
        %v5559 = vand.u32 %v4762, 4294901760
        %5560 = vmatmul.mubr.f32.gmra.mrb[0].mxu0 %v5559
        %v5561 = vpop.f32.mrb[0].mxu0
        %v5562 = vadd.f32 %v5439, %v5561
        %v5563 = vpop.f32.mrb[0].mxu0
        %v5564 = vadd.f32 %v5441, %v5563
        %5565 = vmatprep.mubr.f32.mxu0 0.0
        %v5566 = vand.u32 %v4765, 4294901760
        %5567 = vmatmul.mubr.f32.gmra.mrb[0].mxu0 %v5566
        %v5568 = vpop.f32.mrb[0].mxu0
        %v5569 = vadd.f32 %v5450, %v5568
        %v5570 = vpop.f32.mrb[0].mxu0
        %v5571 = vadd.f32 %v5452, %v5570
        %5572 = vdwg.mxu0
        %v5573 = vand.u32 %v4733, 4294901760
        %v5574 = vsub.f32 %v4733, %v5573
        %5575 = vmatprep.subr.mxu0 %v5574
        %v5576 = vand.u32 %v4732, 4294901760
        %v5577 = vsub.f32 %v4732, %v5576
        %5578 = vmatpush1.msra.mxu0 %v5577
        %v5579 = vand.u32 %v4737, 4294901760
        %v5580 = vsub.f32 %v4737, %v5579
        %5581 = vmatprep.subr.mxu0 %v5580
        %v5582 = vand.u32 %v4736, 4294901760
        %v5583 = vsub.f32 %v4736, %v5582
        %5584 = vmatpush1.msra.mxu0 %v5583
        %v5585 = vand.u32 %v4741, 4294901760
        %v5586 = vsub.f32 %v4741, %v5585
        %5587 = vmatprep.subr.mxu0 %v5586
        %v5588 = vand.u32 %v4740, 4294901760
        %v5589 = vsub.f32 %v4740, %v5588
        %5590 = vmatpush1.msra.mxu0 %v5589
        %v5591 = vand.u32 %v4745, 4294901760
        %v5592 = vsub.f32 %v4745, %v5591
        %5593 = vmatprep.subr.mxu0 %v5592
        %v5594 = vand.u32 %v4744, 4294901760
        %v5595 = vsub.f32 %v4744, %v5594
        %5596 = vmatpush1.msra.mxu0 %v5595
        %5597 = vmatprep.subr.mxu0 0.0
        %5598 = vmatpush1.msra.mxu0 0.0
        %5599 = vmatprep.subr.mxu0 0.0
        %5600 = vmatpush1.msra.mxu0 0.0
        %5601 = vmatprep.subr.mxu0 0.0
        %5602 = vmatpush1.msra.mxu0 0.0
        %5603 = vmatprep.subr.mxu0 0.0
        %5604 = vmatpush1.msra.mxu0 0.0
        %5605 = vmatprep.subr.mxu0 0.0
        %5606 = vmatpush1.msra.mxu0 0.0
        %5607 = vmatprep.subr.mxu0 0.0
        %5608 = vmatpush1.msra.mxu0 0.0
        %5609 = vmatprep.subr.mxu0 0.0
        %5610 = vmatpush1.msra.mxu0 0.0
        %5611 = vmatprep.subr.mxu0 0.0
        %5612 = vmatpush1.msra.mxu0 0.0
        %5613 = vmatprep.subr.mxu0 0.0
        %5614 = vmatpush1.msra.mxu0 0.0
        %5615 = vmatprep.subr.mxu0 0.0
        %5616 = vmatpush1.msra.mxu0 0.0
        %5617 = vmatprep.subr.mxu0 0.0
        %5618 = vmatpush1.msra.mxu0 0.0
        %5619 = vmatprep.subr.mxu0 0.0
        %5620 = vmatpush1.msra.mxu0 0.0
        %5621 = vmatprep.subr.mxu0 0.0
        %5622 = vmatpush1.msra.mxu0 0.0
        %5623 = vmatprep.subr.mxu0 0.0
        %5624 = vmatpush1.msra.mxu0 0.0
        %5625 = vmatprep.subr.mxu0 0.0
        %5626 = vmatpush1.msra.mxu0 0.0
        %5627 = vmatprep.subr.mxu0 0.0
        %5628 = vmatpush1.msra.mxu0 0.0
        %5629 = vmatprep.subr.mxu0 0.0
        %5630 = vmatpush1.msra.mxu0 0.0
        %5631 = vmatprep.subr.mxu0 0.0
        %5632 = vmatpush1.msra.mxu0 0.0
        %5633 = vmatprep.subr.mxu0 0.0
        %5634 = vmatpush1.msra.mxu0 0.0
        %5635 = vmatprep.subr.mxu0 0.0
        %5636 = vmatpush1.msra.mxu0 0.0
        %5637 = vmatprep.subr.mxu0 0.0
        %5638 = vmatpush1.msra.mxu0 0.0
        %5639 = vmatprep.subr.mxu0 0.0
        %5640 = vmatpush1.msra.mxu0 0.0
        %5641 = vmatprep.subr.mxu0 0.0
        %5642 = vmatpush1.msra.mxu0 0.0
        %5643 = vmatprep.subr.mxu0 0.0
        %5644 = vmatpush1.msra.mxu0 0.0
        %5645 = vmatprep.subr.mxu0 0.0
        %5646 = vmatpush1.msra.mxu0 0.0
        %5647 = vmatprep.subr.mxu0 0.0
        %5648 = vmatpush1.msra.mxu0 0.0
        %5649 = vmatprep.subr.mxu0 0.0
        %5650 = vmatpush1.msra.mxu0 0.0
        %5651 = vmatprep.subr.mxu0 0.0
        %5652 = vmatpush1.msra.mxu0 0.0
        %5653 = vmatprep.mubr.f32.mxu0 0.0
        %v5654 = vand.u32 %v4762, 4294901760
        %v5655 = vsub.f32 %v4762, %v5654
        %5656 = vmatmul.mubr.f32.gmra.mrb[0].mxu0 %v5655
        %v5657 = vpop.f32.mrb[0].mxu0
        %v5658 = vadd.f32 %v5562, %v5657
        %v5659 = vpop.f32.mrb[0].mxu0
        %v5660 = vadd.f32 %v5564, %v5659
        %5661 = vmatprep.mubr.f32.mxu0 0.0
        %v5662 = vand.u32 %v4765, 4294901760
        %v5663 = vsub.f32 %v4765, %v5662
        %5664 = vmatmul.mubr.f32.gmra.mrb[0].mxu0 %v5663
        %v5665 = vpop.f32.mrb[0].mxu0
        %v5666 = vadd.f32 %v5569, %v5665
        %v5667 = vpop.f32.mrb[0].mxu0
        %v5668 = vadd.f32 %v5571, %v5667
        %5669 = vdwg.mxu0
        %v5670 = vand.u32 %v4733, 4294901760
        %5671 = vmatprep.subr.mxu0 %v5670
        %v5672 = vand.u32 %v4732, 4294901760
        %5673 = vmatpush1.msra.mxu0 %v5672
        %v5674 = vand.u32 %v4737, 4294901760
        %5675 = vmatprep.subr.mxu0 %v5674
        %v5676 = vand.u32 %v4736, 4294901760
        %5677 = vmatpush1.msra.mxu0 %v5676
        %v5678 = vand.u32 %v4741, 4294901760
        %5679 = vmatprep.subr.mxu0 %v5678
        %v5680 = vand.u32 %v4740, 4294901760
        %5681 = vmatpush1.msra.mxu0 %v5680
        %v5682 = vand.u32 %v4745, 4294901760
        %5683 = vmatprep.subr.mxu0 %v5682
        %v5684 = vand.u32 %v4744, 4294901760
        %5685 = vmatpush1.msra.mxu0 %v5684
        %5686 = vmatprep.subr.mxu0 0.0
        %5687 = vmatpush1.msra.mxu0 0.0
        %5688 = vmatprep.subr.mxu0 0.0
        %5689 = vmatpush1.msra.mxu0 0.0
        %5690 = vmatprep.subr.mxu0 0.0
        %5691 = vmatpush1.msra.mxu0 0.0
        %5692 = vmatprep.subr.mxu0 0.0
        %5693 = vmatpush1.msra.mxu0 0.0
        %5694 = vmatprep.subr.mxu0 0.0
        %5695 = vmatpush1.msra.mxu0 0.0
        %5696 = vmatprep.subr.mxu0 0.0
        %5697 = vmatpush1.msra.mxu0 0.0
        %5698 = vmatprep.subr.mxu0 0.0
        %5699 = vmatpush1.msra.mxu0 0.0
        %5700 = vmatprep.subr.mxu0 0.0
        %5701 = vmatpush1.msra.mxu0 0.0
        %5702 = vmatprep.subr.mxu0 0.0
        %5703 = vmatpush1.msra.mxu0 0.0
        %5704 = vmatprep.subr.mxu0 0.0
        %5705 = vmatpush1.msra.mxu0 0.0
        %5706 = vmatprep.subr.mxu0 0.0
        %5707 = vmatpush1.msra.mxu0 0.0
        %5708 = vmatprep.subr.mxu0 0.0
        %5709 = vmatpush1.msra.mxu0 0.0
        %5710 = vmatprep.subr.mxu0 0.0
        %5711 = vmatpush1.msra.mxu0 0.0
        %5712 = vmatprep.subr.mxu0 0.0
        %5713 = vmatpush1.msra.mxu0 0.0
        %5714 = vmatprep.subr.mxu0 0.0
        %5715 = vmatpush1.msra.mxu0 0.0
        %5716 = vmatprep.subr.mxu0 0.0
        %5717 = vmatpush1.msra.mxu0 0.0
        %5718 = vmatprep.subr.mxu0 0.0
        %5719 = vmatpush1.msra.mxu0 0.0
        %5720 = vmatprep.subr.mxu0 0.0
        %5721 = vmatpush1.msra.mxu0 0.0
        %5722 = vmatprep.subr.mxu0 0.0
        %5723 = vmatpush1.msra.mxu0 0.0
        %5724 = vmatprep.subr.mxu0 0.0
        %5725 = vmatpush1.msra.mxu0 0.0
        %5726 = vmatprep.subr.mxu0 0.0
        %5727 = vmatpush1.msra.mxu0 0.0
        %5728 = vmatprep.subr.mxu0 0.0
        %5729 = vmatpush1.msra.mxu0 0.0
        %5730 = vmatprep.subr.mxu0 0.0
        %5731 = vmatpush1.msra.mxu0 0.0
        %5732 = vmatprep.subr.mxu0 0.0
        %5733 = vmatpush1.msra.mxu0 0.0
        %5734 = vmatprep.subr.mxu0 0.0
        %5735 = vmatpush1.msra.mxu0 0.0
        %5736 = vmatprep.subr.mxu0 0.0
        %5737 = vmatpush1.msra.mxu0 0.0
        %5738 = vmatprep.subr.mxu0 0.0
        %5739 = vmatpush1.msra.mxu0 0.0
        %5740 = vmatprep.subr.mxu0 0.0
        %5741 = vmatpush1.msra.mxu0 0.0
        %5742 = vmatprep.mubr.f32.mxu0 0.0
        %v5743 = vand.u32 %v4762, 4294901760
        %v5744 = vsub.f32 %v4762, %v5743
        %v5745 = vand.u32 %v5744, 4294901760
        %5746 = vmatmul.mubr.f32.gmra.mrb[0].mxu0 %v5745
        %v5747 = vpop.f32.mrb[0].mxu0
        %v5748 = vadd.f32 %v5658, %v5747
        %v5749 = vpop.f32.mrb[0].mxu0
        %v5750 = vadd.f32 %v5660, %v5749
        %5751 = vmatprep.mubr.f32.mxu0 0.0
        %v5752 = vand.u32 %v4765, 4294901760
        %v5753 = vsub.f32 %v4765, %v5752
        %v5754 = vand.u32 %v5753, 4294901760
        %5755 = vmatmul.mubr.f32.gmra.mrb[0].mxu0 %v5754
        %v5756 = vpop.f32.mrb[0].mxu0
        %v5757 = vadd.f32 %v5666, %v5756
        %v5758 = vpop.f32.mrb[0].mxu0
        %v5759 = vadd.f32 %v5668, %v5758
        %5760 = vdwg.mxu0
        %v5761 = vand.u32 %v4733, 4294901760
        %v5762 = vsub.f32 %v4733, %v5761
        %v5763 = vand.u32 %v5762, 4294901760
        %5764 = vmatprep.subr.mxu0 %v5763
        %v5765 = vand.u32 %v4732, 4294901760
        %v5766 = vsub.f32 %v4732, %v5765
        %v5767 = vand.u32 %v5766, 4294901760
        %5768 = vmatpush1.msra.mxu0 %v5767
        %v5769 = vand.u32 %v4737, 4294901760
        %v5770 = vsub.f32 %v4737, %v5769
        %v5771 = vand.u32 %v5770, 4294901760
        %5772 = vmatprep.subr.mxu0 %v5771
        %v5773 = vand.u32 %v4736, 4294901760
        %v5774 = vsub.f32 %v4736, %v5773
        %v5775 = vand.u32 %v5774, 4294901760
        %5776 = vmatpush1.msra.mxu0 %v5775
        %v5777 = vand.u32 %v4741, 4294901760
        %v5778 = vsub.f32 %v4741, %v5777
        %v5779 = vand.u32 %v5778, 4294901760
        %5780 = vmatprep.subr.mxu0 %v5779
        %v5781 = vand.u32 %v4740, 4294901760
        %v5782 = vsub.f32 %v4740, %v5781
        %v5783 = vand.u32 %v5782, 4294901760
        %5784 = vmatpush1.msra.mxu0 %v5783
        %v5785 = vand.u32 %v4745, 4294901760
        %v5786 = vsub.f32 %v4745, %v5785
        %v5787 = vand.u32 %v5786, 4294901760
        %5788 = vmatprep.subr.mxu0 %v5787
        %v5789 = vand.u32 %v4744, 4294901760
        %v5790 = vsub.f32 %v4744, %v5789
        %v5791 = vand.u32 %v5790, 4294901760
        %5792 = vmatpush1.msra.mxu0 %v5791
        %5793 = vmatprep.subr.mxu0 0.0
        %5794 = vmatpush1.msra.mxu0 0.0
        %5795 = vmatprep.subr.mxu0 0.0
        %5796 = vmatpush1.msra.mxu0 0.0
        %5797 = vmatprep.subr.mxu0 0.0
        %5798 = vmatpush1.msra.mxu0 0.0
        %5799 = vmatprep.subr.mxu0 0.0
        %5800 = vmatpush1.msra.mxu0 0.0
        %5801 = vmatprep.subr.mxu0 0.0
        %5802 = vmatpush1.msra.mxu0 0.0
        %5803 = vmatprep.subr.mxu0 0.0
        %5804 = vmatpush1.msra.mxu0 0.0
        %5805 = vmatprep.subr.mxu0 0.0
        %5806 = vmatpush1.msra.mxu0 0.0
        %5807 = vmatprep.subr.mxu0 0.0
        %5808 = vmatpush1.msra.mxu0 0.0
        %5809 = vmatprep.subr.mxu0 0.0
        %5810 = vmatpush1.msra.mxu0 0.0
        %5811 = vmatprep.subr.mxu0 0.0
        %5812 = vmatpush1.msra.mxu0 0.0
        %5813 = vmatprep.subr.mxu0 0.0
        %5814 = vmatpush1.msra.mxu0 0.0
        %5815 = vmatprep.subr.mxu0 0.0
        %5816 = vmatpush1.msra.mxu0 0.0
        %5817 = vmatprep.subr.mxu0 0.0
        %5818 = vmatpush1.msra.mxu0 0.0
        %5819 = vmatprep.subr.mxu0 0.0
        %5820 = vmatpush1.msra.mxu0 0.0
        %5821 = vmatprep.subr.mxu0 0.0
        %5822 = vmatpush1.msra.mxu0 0.0
        %5823 = vmatprep.subr.mxu0 0.0
        %5824 = vmatpush1.msra.mxu0 0.0
        %5825 = vmatprep.subr.mxu0 0.0
        %5826 = vmatpush1.msra.mxu0 0.0
        %5827 = vmatprep.subr.mxu0 0.0
        %5828 = vmatpush1.msra.mxu0 0.0
        %5829 = vmatprep.subr.mxu0 0.0
        %5830 = vmatpush1.msra.mxu0 0.0
        %5831 = vmatprep.subr.mxu0 0.0
        %5832 = vmatpush1.msra.mxu0 0.0
        %5833 = vmatprep.subr.mxu0 0.0
        %5834 = vmatpush1.msra.mxu0 0.0
        %5835 = vmatprep.subr.mxu0 0.0
        %5836 = vmatpush1.msra.mxu0 0.0
        %5837 = vmatprep.subr.mxu0 0.0
        %5838 = vmatpush1.msra.mxu0 0.0
        %5839 = vmatprep.subr.mxu0 0.0
        %5840 = vmatpush1.msra.mxu0 0.0
        %5841 = vmatprep.subr.mxu0 0.0
        %5842 = vmatpush1.msra.mxu0 0.0
        %5843 = vmatprep.subr.mxu0 0.0
        %5844 = vmatpush1.msra.mxu0 0.0
        %5845 = vmatprep.subr.mxu0 0.0
        %5846 = vmatpush1.msra.mxu0 0.0
        %5847 = vmatprep.subr.mxu0 0.0
        %5848 = vmatpush1.msra.mxu0 0.0
        %5849 = vmatprep.mubr.f32.mxu0 0.0
        %v5850 = vand.u32 %v4762, 4294901760
        %5851 = vmatmul.mubr.f32.gmra.mrb[0].mxu0 %v5850
        %v5852 = vpop.f32.mrb[0].mxu0
        %v5853 = vadd.f32 %v5748, %v5852
        %v5854 = vpop.f32.mrb[0].mxu0
        %v5855 = vadd.f32 %v5750, %v5854
        %5856 = vmatprep.mubr.f32.mxu0 0.0
        %v5857 = vand.u32 %v4765, 4294901760
        %5858 = vmatmul.mubr.f32.gmra.mrb[0].mxu0 %v5857
        %v5859 = vpop.f32.mrb[0].mxu0
        %v5860 = vadd.f32 %v5757, %v5859
        %v5861 = vpop.f32.mrb[0].mxu0
        %v5862 = vadd.f32 %v5759, %v5861
        %5863 = vdwg.mxu0
        %v5864 = vand.u32 %v4733, 4294901760
        %5865 = vmatprep.subr.mxu0 %v5864
        %v5866 = vand.u32 %v4732, 4294901760
        %5867 = vmatpush1.msra.mxu0 %v5866
        %v5868 = vand.u32 %v4737, 4294901760
        %5869 = vmatprep.subr.mxu0 %v5868
        %v5870 = vand.u32 %v4736, 4294901760
        %5871 = vmatpush1.msra.mxu0 %v5870
        %v5872 = vand.u32 %v4741, 4294901760
        %5873 = vmatprep.subr.mxu0 %v5872
        %v5874 = vand.u32 %v4740, 4294901760
        %5875 = vmatpush1.msra.mxu0 %v5874
        %v5876 = vand.u32 %v4745, 4294901760
        %5877 = vmatprep.subr.mxu0 %v5876
        %v5878 = vand.u32 %v4744, 4294901760
        %5879 = vmatpush1.msra.mxu0 %v5878
        %5880 = vmatprep.subr.mxu0 0.0
        %5881 = vmatpush1.msra.mxu0 0.0
        %5882 = vmatprep.subr.mxu0 0.0
        %5883 = vmatpush1.msra.mxu0 0.0
        %5884 = vmatprep.subr.mxu0 0.0
        %5885 = vmatpush1.msra.mxu0 0.0
        %5886 = vmatprep.subr.mxu0 0.0
        %5887 = vmatpush1.msra.mxu0 0.0
        %5888 = vmatprep.subr.mxu0 0.0
        %5889 = vmatpush1.msra.mxu0 0.0
        %5890 = vmatprep.subr.mxu0 0.0
        %5891 = vmatpush1.msra.mxu0 0.0
        %5892 = vmatprep.subr.mxu0 0.0
        %5893 = vmatpush1.msra.mxu0 0.0
        %5894 = vmatprep.subr.mxu0 0.0
        %5895 = vmatpush1.msra.mxu0 0.0
        %5896 = vmatprep.subr.mxu0 0.0
        %5897 = vmatpush1.msra.mxu0 0.0
        %5898 = vmatprep.subr.mxu0 0.0
        %5899 = vmatpush1.msra.mxu0 0.0
        %5900 = vmatprep.subr.mxu0 0.0
        %5901 = vmatpush1.msra.mxu0 0.0
        %5902 = vmatprep.subr.mxu0 0.0
        %5903 = vmatpush1.msra.mxu0 0.0
        %5904 = vmatprep.subr.mxu0 0.0
        %5905 = vmatpush1.msra.mxu0 0.0
        %5906 = vmatprep.subr.mxu0 0.0
        %5907 = vmatpush1.msra.mxu0 0.0
        %5908 = vmatprep.subr.mxu0 0.0
        %5909 = vmatpush1.msra.mxu0 0.0
        %5910 = vmatprep.subr.mxu0 0.0
        %5911 = vmatpush1.msra.mxu0 0.0
        %5912 = vmatprep.subr.mxu0 0.0
        %5913 = vmatpush1.msra.mxu0 0.0
        %5914 = vmatprep.subr.mxu0 0.0
        %5915 = vmatpush1.msra.mxu0 0.0
        %5916 = vmatprep.subr.mxu0 0.0
        %5917 = vmatpush1.msra.mxu0 0.0
        %5918 = vmatprep.subr.mxu0 0.0
        %5919 = vmatpush1.msra.mxu0 0.0
        %5920 = vmatprep.subr.mxu0 0.0
        %5921 = vmatpush1.msra.mxu0 0.0
        %5922 = vmatprep.subr.mxu0 0.0
        %5923 = vmatpush1.msra.mxu0 0.0
        %5924 = vmatprep.subr.mxu0 0.0
        %5925 = vmatpush1.msra.mxu0 0.0
        %5926 = vmatprep.subr.mxu0 0.0
        %5927 = vmatpush1.msra.mxu0 0.0
        %5928 = vmatprep.subr.mxu0 0.0
        %5929 = vmatpush1.msra.mxu0 0.0
        %5930 = vmatprep.subr.mxu0 0.0
        %5931 = vmatpush1.msra.mxu0 0.0
        %5932 = vmatprep.subr.mxu0 0.0
        %5933 = vmatpush1.msra.mxu0 0.0
        %5934 = vmatprep.subr.mxu0 0.0
        %5935 = vmatpush1.msra.mxu0 0.0
        %5936 = vmatprep.mubr.f32.mxu0 0.0
        %v5937 = vand.u32 %v4762, 4294901760
        %5938 = vmatmul.mubr.f32.gmra.mrb[0].mxu0 %v5937
        %v5939 = vpop.f32.mrb[0].mxu0
        %v5940 = vadd.f32 %v5853, %v5939
        %v5941 = vpop.f32.mrb[0].mxu0
        %v5942 = vadd.f32 %v5855, %v5941
        %5943 = vmatprep.mubr.f32.mxu0 0.0
        %v5944 = vand.u32 %v4765, 4294901760
        %5945 = vmatmul.mubr.f32.gmra.mrb[0].mxu0 %v5944
        %v5946 = vpop.f32.mrb[0].mxu0
        %v5947 = vadd.f32 %v5860, %v5946
        %v5948 = vpop.f32.mrb[0].mxu0
        %v5949 = vadd.f32 %v5862, %v5948
        %5950 = vdwg.mxu0
        %v5951 = vmax.f32 %v5348, 0.0
        %v5952 = vmax.f32 %v5350, 0.0
        %v5953 = vmax.f32 %v5940, 0.0
        %v5954 = vmax.f32 %v5942, 0.0
        %v5955 = vmax.f32 %v5355, 0.0
        %v5956 = vmax.f32 %v5357, 0.0
        %v5957 = vmax.f32 %v5947, 0.0
        %v5958 = vmax.f32 %v5949, 0.0
        %v5959 = vld [vmem:[%s7] sm:$0xff]
        %v5960 = vld [vmem:[%s7 + $0x8] sm:$0xff]
        %5962 = vset.pattern.permute.xlu0 0
        %5963 = vperm.xlu0 %5962, %v5959
        %v5964 = vpop.permute.xlu0 %5963
        %5967 = vset.pattern.permute.xlu0 0
        %5968 = vperm.xlu0 %5967, %v5960
        %v5969 = vpop.permute.xlu0 %5968
        %v5971 = vmul.f32 %v5964, %v5951
        %v5972 = vmul.f32 %v5964, %v5952
        %v5973 = vmul.f32 %v5964, %v5953
        %v5974 = vmul.f32 %v5964, %v5954
        %v5975 = vmul.f32 %v5969, %v5955
        %v5976 = vmul.f32 %v5969, %v5956
        %v5977 = vmul.f32 %v5969, %v5957
        %v5978 = vmul.f32 %v5969, %v5958
        %v5979 = vadd.f32 %v5971, %v5975
        %v5980 = vrot.slane %v5979, 4
        %v5981 = vadd.f32 %v5979, %v5980
        %v5982 = vrot.slane %v5981, 2
        %v5983 = vadd.f32 %v5981, %v5982
        %v5984 = vrot.slane %v5983, 1
        %v5985 = vadd.f32 %v5983, %v5984
        %v5986 = vadd.f32 %v5972, %v5976
        %v5987 = vrot.slane %v5986, 4
        %v5988 = vadd.f32 %v5986, %v5987
        %v5989 = vrot.slane %v5988, 2
        %v5990 = vadd.f32 %v5988, %v5989
        %v5991 = vrot.slane %v5990, 1
        %v5992 = vadd.f32 %v5990, %v5991
        %v5993 = vadd.f32 %v5973, %v5977
        %v5994 = vrot.slane %v5993, 4
        %v5995 = vadd.f32 %v5993, %v5994
        %v5996 = vrot.slane %v5995, 2
        %v5997 = vadd.f32 %v5995, %v5996
        %v5998 = vrot.slane %v5997, 1
        %v5999 = vadd.f32 %v5997, %v5998
        %v6000 = vadd.f32 %v5974, %v5978
        %v6001 = vrot.slane %v6000, 4
        %v6002 = vadd.f32 %v6000, %v6001
        %v6003 = vrot.slane %v6002, 2
        %v6004 = vadd.f32 %v6002, %v6003
        %v6005 = vrot.slane %v6004, 1
        %v6006 = vadd.f32 %v6004, %v6005
        %v6007 = vld [vmem:[#allocation2] sm:$0x1]
        %6009 = vset.pattern.permute.xlu0 0
        %6010 = vperm.xlu0 %6009, %v6007
        %v6011 = vpop.permute.xlu0 %6010
        %v6013 = vlaneseq
        %v6014 = vshrl.u32 %v6013, 7
        %v6015 = vsub.s32 0, %v6014
        %v6016 = vrot.slane %v6011, %v6015
        %v6017 = vadd.f32 %v5985, %v6016
        %v6018 = vadd.f32 %v5992, %v6016
        %v6019 = vadd.f32 %v5999, %v6016
        %v6020 = vadd.f32 %v6006, %v6016
        %v6025 = vcombine.low %v6017, %v6018
        %v6026 = vcombine.low %v6019, %v6020
        %v6028 = vunpack.c.l.s4 1966171168
        %v6029 = vunpack.c.0.s8 %v6028
        %v6030 = vlaneseq
        %v6031 = vshrl.u32 %v6030, 7
        %v6032 = vsub.s32 %v6029, %v6031
        %v6033 = vrot.slane %v6025, %v6032
        %v6035 = vunpack.c.l.s4 1966171168
        %v6036 = vunpack.c.0.s8 %v6035
        %v6037 = vlaneseq
        %v6038 = vshrl.u32 %v6037, 7
        %v6039 = vsub.s32 %v6036, %v6038
        %v6040 = vrot.slane %v6026, %v6039
        %v6041 = vcombine.low %v6033, %v6040
        %v6043 = vunpack.c.l.s4 1966171168
        %v6044 = vunpack.c.0.s8 %v6043
        %v6045 = vlaneseq
        %v6046 = vshrl.u32 %v6045, 7
        %v6047 = vsub.s32 %v6044, %v6046
        %v6048 = vrot.slane %v6041, %v6047
        %v6050 = vlaneseq
        %vm6051 = vcmp.ge.s32.totalorder %v6050, 0
        %vm6052 = vcmp.lt.s32.totalorder %v6050, 512
        %vm6053 = vmand %vm6051, %vm6052
        %6054 = vst.msk [vmem:[%s328] sm:$0xf] %vm6053, %v6048
        %s6055 = sand.u32 %s227, 1
        %s6056 = scalar_lea.sflag [#allocation4], %s6055
        %s6057 = sand.u32 %s227, 1
        %s6058 = smul.addr %s6057, 4
        %s6059 = scalar_lea.vmem [#allocation3], %s6058
        // Predicated region
        $region57: #{bird_count_mlp.1} parent=55 // pred_check
          %p6060 = pneg %p237
        $region58: #{bird_count_mlp.1} parent=55 // pred_check_branch
          %6062 = sbr.rel (%p6060) target = $region60
        $region59: #{bird_count_mlp.1} parent=55 // pred_region
          %s6063 = smul.u32 4, %s25
          %s6065 = ssub.s32 64, 64
          %6066 = vsyncadd %s6056, %s6065
          %s6067 = smul.addr %s6063, 16
          %s6068 = scalar_lea.hbm %s9, %s6067
          %s6070 = sshll.u32 %s6059, 4
          %s6071 = int_to_ptr.vmem [resolvable:$true] %s6070
          %6073 = dma.vmem_to_hbm [thread:$0]  %s6071, 64, %s6068, %s6056
        $region60: #{bird_count_mlp.1} parent=55 // pred_fallthru
          _
      $region56: #{bird_count_mlp.1} parent=5 // pred_fallthru
        _
      %p6074 = scmp.le.s32.totalorder 2, %s20
      // Predicated region
      $region61: #{bird_count_mlp.1} parent=5 // pred_check
        %p6075 = pneg %p6074
      $region62: #{bird_count_mlp.1} parent=5 // pred_check_branch
        %6077 = sbr.rel (%p6075) target = $region64
      $region63: #{bird_count_mlp.1} parent=5 // pred_region
        %s6078 = ssub.s32 %s20, 2
        // Predicated region
        $region65: #{bird_count_mlp.1} parent=63 // pred_check
          %p6079 = pneg %p243
        $region66: #{bird_count_mlp.1} parent=63 // pred_check_branch
          %6081 = sbr.rel (%p6079) target = $region68
        $region67: #{bird_count_mlp.1} parent=63 // pred_region
          %s6082 = sand.u32 %s228, 1
          %s6083 = scalar_lea.sflag [#allocation4], %s6082
          %s6084 = sand.u32 %s228, 1
          %s6085 = smul.addr %s6084, 4
          %s6086 = scalar_lea.vmem [#allocation3], %s6085
          %6087 = dma.done %s6083, 64
        $region68: #{bird_count_mlp.1} parent=63 // pred_fallthru
          _
      $region64: #{bird_count_mlp.1} parent=5 // pred_fallthru
        _
    $region6: #{bird_count_mlp.1} parent=1 // loop_footer
      %s24 = sadd.s32 1, %s20
    $region7: #{bird_count_mlp.1} parent=1 // loop_footer_branch
      %19 = sbr.rel target = $region3
    $region8: #{bird_count_mlp.1} parent=1 // loop_exit
      _
    %6088 = vsyncpa [#allocation4], 1
    %s6089 = scalar_lea.sflag [#allocation4], 1
    %6090 = vsyncpa %s6089, 1

</llo_original>
